<compile_context>
chip_gen: v7x
topology: tpu7x:2x2x1
jax: 0.10.0
libtpu: 0.0.40
codegen_flags: <defaults>
</compile_context>

<pallas_src>
import functools

import jax
import jax.numpy as jnp
from jax.experimental import pallas as pl
from jax.experimental.pallas import tpu as pltpu

_LANE = 128


def _round_up(x, m):
    return (x + m - 1) // m * m


def _lane_pad(c):
    return _round_up(c, _LANE)


def _tpu_config():
    """VMEM limit, row-tile cap and TensorCore count for the current TPU generation."""
    try:
        vmem_cap = int(pltpu.get_tpu_info().vmem_capacity_bytes)
    except Exception:  # conservative fallback (v7x-sized)
        vmem_cap = 64 * 1024 * 1024
    try:
        kind = jax.devices()[0].device_kind.lower()
    except Exception:
        kind = ""
    # Dual-TensorCore parts (v4 / v5p megacore, v7x) benefit from splitting the batch block so the
    # "parallel" grid axes shard across cores; single-core v5e / v6e would only pay grid overhead.
    n_tc = 2 if any(tag in kind for tag in ("v4", "v5p", "v7")) else 1
    vmem_limit = min(vmem_cap * 3 // 4, 96 * 1024 * 1024)
    row_cap = 512 if vmem_cap <= 64 * 1024 * 1024 else 1024
    return vmem_limit, row_cap, n_tc


def _bytes_per_row(n, d):
    """Lane-padding-aware VMEM bytes per (batch-row, entity-row) of one grid step (f32)."""
    stream = 2 * (2 * _lane_pad(n * d) + 2 * _lane_pad(d))  # nbr+rel and self+out, double-buffered
    temps = 4 * _lane_pad(d)                                # acc / weighted nbr / y / activation
    return 4 * (stream + temps)


def _pick_tiles(batch, m, n, d, n_tc, budget, row_cap):
    """Choose (t_b, t_m, m_pad) so the double-buffered working set stays under `budget`."""
    t_b = batch // 2 if (n_tc >= 2 and batch >= 2 and batch % 2 == 0) else batch
    fit = budget // (_bytes_per_row(n, d) * t_b)
    cap = max(8, min(row_cap, (fit // 8) * 8))
    if m <= cap:
        return t_b, m, m                      # full-extent row block: no (8,128) constraint, no pad
    for cand in range(cap, 7, -8):            # largest multiple of 8 that divides m
        if m % cand == 0:
            return t_b, cand, m
    return t_b, cap, _round_up(m, cap)        # rare fallback: caller zero-pads the rows


# ----------------------------- Pallas kernel --------------------------------

def _aggregator_kernel(self_ref, nbr_ref, rel_ref, user_ref, w_ref, b_ref, out_ref,
                       *, n_neighbor, dim, act):
    """One (batch_block, row_block) tile of the KGCN 'sum' aggregator.

    self_ref : [tb, tm, D]     self entity vectors
    nbr_ref  : [tb, tm, n*D]   neighbor entity vectors, lane-dense slab
    rel_ref  : [tb, tm, n*D]   neighbor relation vectors, lane-dense slab
    user_ref : [tb, 1, D]      user embedding (broadcast over rows in-kernel)
    w_ref    : [D, D]          torch Linear weight (out, in)
    b_ref    : [1, D]          torch Linear bias
    out_ref  : [tb, tm, D]
    """
    d = dim
    u = user_ref[...]                                            # [tb, 1, D]

    # Attention logits, one neighbor at a time (static lane slices of the 256-lane slab);
    # avoids materializing any [tb, tm, n, D] temporary.
    logits = []
    for k in range(n_neighbor):
        rel_k = rel_ref[:, :, pl.ds(k * d, d)]                   # [tb, tm, D]
        logits.append(jnp.sum(u * rel_k, axis=-1))               # [tb, tm]
    m_max = logits[0]
    for k in range(1, n_neighbor):
        m_max = jnp.maximum(m_max, logits[k])
    exps = [jnp.exp(s - m_max) for s in logits]
    denom = exps[0]
    for k in range(1, n_neighbor):
        denom = denom + exps[k]
    # EUP reciprocal (approx): ~1e-3 relative error vs an exact softmax denominator.
    inv = pl.reciprocal(denom, approx=True)                      # [tb, tm]

    # 'sum' aggregator: self + softmax(<user, rel>)-weighted neighbor sum, neighbor-at-a-time.
    acc = self_ref[...]                                          # [tb, tm, D]
    for k in range(n_neighbor):
        nbr_k = nbr_ref[:, :, pl.ds(k * d, d)]                   # [tb, tm, D]
        acc = acc + (exps[k] * inv)[:, :, None] * nbr_k

    # Linear(dim, dim): y = acc @ W.T + b as one batched MXU contraction on the 3-D tile
    # (no reshape-to-2D / reshape-back relayouts inside the kernel).
    tb = self_ref.shape[0]
    w_b = jnp.broadcast_to(w_ref[...], (tb, d, d))               # [tb, D, D], hoisted once
    y = jnp.einsum('bmi,boi->bmo', acc, w_b,
                   preferred_element_type=jnp.float32) + b_ref[...]
    y = jnp.tanh(y) if act == "tanh" else jax.nn.sigmoid(y)
    out_ref[...] = y.astype(out_ref.dtype)


# ----------------------------- per-hop wrapper -------------------------------

def _aggregate_hop(self_v, nbr_v, rel_v, user_emb, w, b2, act, *, n_neighbor, dim):
    """softmax(<user, rel>)-weighted neighbor aggregation + Linear + activation for one hop.

    self_v : [B, m, D]     nbr_v / rel_v : [B, m, n*D]     user_emb : [B, D]   ->   [B, m, D]
    """
    B, m, _ = self_v.shape
    vmem_limit, row_cap, n_tc = _tpu_config()
    t_b, t_m, m_pad = _pick_tiles(B, m, n_neighbor, dim, n_tc,
                                  int(vmem_limit * 0.6), row_cap)

    if m_pad != m:
        # Rare fallback (huge m with no tile-sized divisor): zero-pad the rows.
        pad = ((0, 0), (0, m_pad - m), (0, 0))
        self_v, nbr_v, rel_v = (jnp.pad(a, pad) for a in (self_v, nbr_v, rel_v))

    user3 = user_emb.reshape(B, 1, dim)                          # no repeat-to-[m, D]
    nd = n_neighbor * dim

    out = pl.pallas_call(
        functools.partial(_aggregator_kernel, n_neighbor=n_neighbor, dim=dim, act=act),
        out_shape=jax.ShapeDtypeStruct((B, m_pad, dim), jnp.float32),
        grid=(B // t_b, m_pad // t_m),
        in_specs=[
            pl.BlockSpec((t_b, t_m, dim), lambda bi, mi: (bi, mi, 0)),
            pl.BlockSpec((t_b, t_m, nd), lambda bi, mi: (bi, mi, 0)),
            pl.BlockSpec((t_b, t_m, nd), lambda bi, mi: (bi, mi, 0)),
            pl.BlockSpec((t_b, 1, dim), lambda bi, mi: (bi, 0, 0)),
            pl.BlockSpec((dim, dim), lambda bi, mi: (0, 0)),
            pl.BlockSpec((1, dim), lambda bi, mi: (0, 0)),
        ],
        out_specs=pl.BlockSpec((t_b, t_m, dim), lambda bi, mi: (bi, mi, 0)),
        compiler_params=pltpu.CompilerParams(
            dimension_semantics=("parallel", "parallel"),
            vmem_limit_bytes=int(vmem_limit)),
    )(self_v, nbr_v, rel_v, user3, w, b2)

    return out[:, :m] if m_pad != m else out


# ----------------------------- full forward ----------------------------------

def kgcn_forward(u_idx, v_idx, params, adj_ent, adj_rel, *, n_iter, n_neighbor, dim):
    usr_tab, ent_tab, rel_tab = params["usr"], params["ent"], params["rel"]
    W, bias = params["agg_w"], params["agg_b"]
    B = u_idx.shape[0]
    n = n_neighbor

    # user embedding lookup: usr(u).squeeze(1)
    user_embeddings = usr_tab[u_idx]                              # [B, D]

    # _get_neighbors: multi-hop adjacency expansion (tiny int index arrays)
    entities = [v_idx.reshape(B, 1)]
    relations = []
    for h in range(n_iter):
        entities.append(adj_ent[entities[h]].reshape(B, -1))      # [B, n^(h+1)]
        relations.append(adj_rel[entities[h]].reshape(B, -1))

    # Entity feature / relation embedding lookups (dense gathers; same math as the reference's
    # dict-built tensors).  All per-hop views below are free row-major reshapes.
    # TODO(synk): at production KG scale, fold these gathers into the kernel via
    # PrefetchScalarGridSpec scalar-prefetched indices + per-row DMA instead of HBM hop tensors.
    entity_vectors = [ent_tab[e] for e in entities]               # hop h: [B, n^h, D]
    relation_vectors = [rel_tab[r] for r in relations]            # hop h: [B, n^(h+1), D]

    b2 = bias.reshape(1, dim)

    # _aggregate: n_iter rounds, one pallas_call per (round, hop); each round's outputs feed the
    # next round directly (no concat / pad copies of the hop tensors).
    for i in range(n_iter):
        act = "tanh" if i == n_iter - 1 else "sigmoid"
        nxt = []
        for hop in range(n_iter - i):
            m = entity_vectors[hop].shape[1]
            nbr = entity_vectors[hop + 1].reshape(B, m, n * dim)  # free row-major view
            rel = relation_vectors[hop].reshape(B, m, n * dim)    # free row-major view
            nxt.append(_aggregate_hop(entity_vectors[hop], nbr, rel, user_embeddings,
                                      W, b2, act, n_neighbor=n, dim=dim))
        entity_vectors = nxt

    item_embeddings = entity_vectors[0].reshape(B, dim)

    # Final score sigmoid(<user, item>): tiny, fused by XLA (a dedicated (B, 1)-lane-sparse
    # kernel would cost more than it saves).
    return jax.nn.sigmoid(jnp.sum(user_embeddings * item_embeddings, axis=-1))


# ----------------------------- main -------------------------------------------

if __name__ == "__main__":
    # small synthetic config consistent with the module
    NUM_USR, NUM_ENT, NUM_REL = 16, 64, 16
    DIM, N_NEIGHBOR, N_ITER, BATCH = 32, 8, 2, 8

    key = jax.random.PRNGKey(0)
    k_usr, k_ent, k_rel, k_w, k_b, k_ae, k_ar, k_u, k_v = jax.random.split(key, 9)

    params = {
        "usr": jax.random.normal(k_usr, (NUM_USR, DIM), jnp.float32) * 0.1,
        "ent": jax.random.normal(k_ent, (NUM_ENT, DIM), jnp.float32) * 0.1,
        "rel": jax.random.normal(k_rel, (NUM_REL, DIM), jnp.float32) * 0.1,
        "agg_w": jax.random.normal(k_w, (DIM, DIM), jnp.float32) * 0.1,   # Linear(dim, dim)
        "agg_b": jax.random.normal(k_b, (DIM,), jnp.float32) * 0.01,
    }

    # adjacency tables (stand-in for _gen_adj's random sampling from the KG)
    adj_ent = jax.random.randint(k_ae, (NUM_ENT, N_NEIGHBOR), 0, NUM_ENT, jnp.int32)
    adj_rel = jax.random.randint(k_ar, (NUM_ENT, N_NEIGHBOR), 0, NUM_REL, jnp.int32)

    u_idx = jax.random.randint(k_u, (BATCH,), 0, NUM_USR, jnp.int32)
    v_idx = jax.random.randint(k_v, (BATCH,), 0, NUM_ENT, jnp.int32)

    # TODO(synk): host-side file logging (nei.txt / nei2.txt) and NodeFlow bookkeeping in the
    # reference forward have no device-compute equivalent and are intentionally omitted.

    fwd = jax.jit(functools.partial(kgcn_forward,
                                    n_iter=N_ITER, n_neighbor=N_NEIGHBOR, dim=DIM))
    out = fwd(u_idx, v_idx, params, adj_ent, adj_rel)
    jax.block_until_ready(out)
    assert out.shape == (BATCH,)
    assert bool(jnp.all(jnp.isfinite(out)))
    print("KERNEL_OK")
</pallas_src>

<mosaic_0001>
module attributes {stable_mosaic.version = 11 : i64} {
  func.func @_aggregator_kernel(%arg0: i32, %arg1: i32, %arg2: memref<8x1x32xf32, #tpu.memory_space<vmem>>, %arg3: memref<8x1x256xf32, #tpu.memory_space<vmem>>, %arg4: memref<8x1x256xf32, #tpu.memory_space<vmem>>, %arg5: memref<8x1x32xf32, #tpu.memory_space<vmem>>, %arg6: memref<32x32xf32, #tpu.memory_space<vmem>>, %arg7: memref<1x32xf32, #tpu.memory_space<vmem>>, %arg8: memref<8x1x32xf32, #tpu.memory_space<vmem>>) attributes {dimension_semantics = [#tpu.dimension_semantics<parallel>, #tpu.dimension_semantics<parallel>], iteration_bounds = array<i64: 1, 1>, scalar_prefetch = 0 : i64, scratch_operands = 0 : i64, tpu.core_type = #tpu.core_type<tc>, window_params = [{transform_indices = @transform_0, window_bounds = array<i64: 8, 1, 32>}, {transform_indices = @transform_1, window_bounds = array<i64: 8, 1, 256>}, {transform_indices = @transform_2, window_bounds = array<i64: 8, 1, 256>}, {transform_indices = @transform_3, window_bounds = array<i64: 8, 1, 32>}, {pipeline_mode = #tpu.pipeline_mode<synchronous>, transform_indices = @transform_4, window_bounds = array<i64: 32, 32>}, {pipeline_mode = #tpu.pipeline_mode<synchronous>, transform_indices = @transform_5, window_bounds = array<i64: 1, 32>}, {transform_indices = @transform_6, window_bounds = array<i64: 8, 1, 32>}]} {
    %c0 = arith.constant 0 : index
    %c0_0 = arith.constant 0 : index
    %c0_1 = arith.constant 0 : index
    %0 = vector.load %arg5[%c0, %c0_0, %c0_1] : memref<8x1x32xf32, #tpu.memory_space<vmem>>, vector<8x1x32xf32>
    %c0_2 = arith.constant 0 : index
    %c0_3 = arith.constant 0 : index
    %c0_4 = arith.constant 0 : index
    %1 = vector.load %arg4[%c0_2, %c0_3, %c0_4] : memref<8x1x256xf32, #tpu.memory_space<vmem>>, vector<8x1x32xf32>
    %2 = arith.mulf %0, %1 : vector<8x1x32xf32>
    %cst = arith.constant dense<0.000000e+00> : vector<8x1xf32>
    %3 = vector.multi_reduction <add>, %2, %cst [2] : vector<8x1x32xf32> to vector<8x1xf32>
    %c0_5 = arith.constant 0 : index
    %c0_6 = arith.constant 0 : index
    %c32 = arith.constant 32 : index
    %4 = vector.load %arg4[%c0_5, %c0_6, %c32] : memref<8x1x256xf32, #tpu.memory_space<vmem>>, vector<8x1x32xf32>
    %5 = arith.mulf %0, %4 : vector<8x1x32xf32>
    %cst_7 = arith.constant dense<0.000000e+00> : vector<8x1xf32>
    %6 = vector.multi_reduction <add>, %5, %cst_7 [2] : vector<8x1x32xf32> to vector<8x1xf32>
    %c0_8 = arith.constant 0 : index
    %c0_9 = arith.constant 0 : index
    %c64 = arith.constant 64 : index
    %7 = vector.load %arg4[%c0_8, %c0_9, %c64] : memref<8x1x256xf32, #tpu.memory_space<vmem>>, vector<8x1x32xf32>
    %8 = arith.mulf %0, %7 : vector<8x1x32xf32>
    %cst_10 = arith.constant dense<0.000000e+00> : vector<8x1xf32>
    %9 = vector.multi_reduction <add>, %8, %cst_10 [2] : vector<8x1x32xf32> to vector<8x1xf32>
    %c0_11 = arith.constant 0 : index
    %c0_12 = arith.constant 0 : index
    %c96 = arith.constant 96 : index
    %10 = vector.load %arg4[%c0_11, %c0_12, %c96] : memref<8x1x256xf32, #tpu.memory_space<vmem>>, vector<8x1x32xf32>
    %11 = arith.mulf %0, %10 : vector<8x1x32xf32>
    %cst_13 = arith.constant dense<0.000000e+00> : vector<8x1xf32>
    %12 = vector.multi_reduction <add>, %11, %cst_13 [2] : vector<8x1x32xf32> to vector<8x1xf32>
    %c0_14 = arith.constant 0 : index
    %c0_15 = arith.constant 0 : index
    %c128 = arith.constant 128 : index
    %13 = vector.load %arg4[%c0_14, %c0_15, %c128] : memref<8x1x256xf32, #tpu.memory_space<vmem>>, vector<8x1x32xf32>
    %14 = arith.mulf %0, %13 : vector<8x1x32xf32>
    %cst_16 = arith.constant dense<0.000000e+00> : vector<8x1xf32>
    %15 = vector.multi_reduction <add>, %14, %cst_16 [2] : vector<8x1x32xf32> to vector<8x1xf32>
    %c0_17 = arith.constant 0 : index
    %c0_18 = arith.constant 0 : index
    %c160 = arith.constant 160 : index
    %16 = vector.load %arg4[%c0_17, %c0_18, %c160] : memref<8x1x256xf32, #tpu.memory_space<vmem>>, vector<8x1x32xf32>
    %17 = arith.mulf %0, %16 : vector<8x1x32xf32>
    %cst_19 = arith.constant dense<0.000000e+00> : vector<8x1xf32>
    %18 = vector.multi_reduction <add>, %17, %cst_19 [2] : vector<8x1x32xf32> to vector<8x1xf32>
    %c0_20 = arith.constant 0 : index
    %c0_21 = arith.constant 0 : index
    %c192 = arith.constant 192 : index
    %19 = vector.load %arg4[%c0_20, %c0_21, %c192] : memref<8x1x256xf32, #tpu.memory_space<vmem>>, vector<8x1x32xf32>
    %20 = arith.mulf %0, %19 : vector<8x1x32xf32>
    %cst_22 = arith.constant dense<0.000000e+00> : vector<8x1xf32>
    %21 = vector.multi_reduction <add>, %20, %cst_22 [2] : vector<8x1x32xf32> to vector<8x1xf32>
    %c0_23 = arith.constant 0 : index
    %c0_24 = arith.constant 0 : index
    %c224 = arith.constant 224 : index
    %22 = vector.load %arg4[%c0_23, %c0_24, %c224] : memref<8x1x256xf32, #tpu.memory_space<vmem>>, vector<8x1x32xf32>
    %23 = arith.mulf %0, %22 : vector<8x1x32xf32>
    %cst_25 = arith.constant dense<0.000000e+00> : vector<8x1xf32>
    %24 = vector.multi_reduction <add>, %23, %cst_25 [2] : vector<8x1x32xf32> to vector<8x1xf32>
    %25 = arith.maximumf %3, %6 : vector<8x1xf32>
    %26 = arith.maximumf %25, %9 : vector<8x1xf32>
    %27 = arith.maximumf %26, %12 : vector<8x1xf32>
    %28 = arith.maximumf %27, %15 : vector<8x1xf32>
    %29 = arith.maximumf %28, %18 : vector<8x1xf32>
    %30 = arith.maximumf %29, %21 : vector<8x1xf32>
    %31 = arith.maximumf %30, %24 : vector<8x1xf32>
    %32 = arith.subf %3, %31 : vector<8x1xf32>
    %33 = math.exp %32 : vector<8x1xf32>
    %34 = arith.subf %6, %31 : vector<8x1xf32>
    %35 = math.exp %34 : vector<8x1xf32>
    %36 = arith.subf %9, %31 : vector<8x1xf32>
    %37 = math.exp %36 : vector<8x1xf32>
    %38 = arith.subf %12, %31 : vector<8x1xf32>
    %39 = math.exp %38 : vector<8x1xf32>
    %40 = arith.subf %15, %31 : vector<8x1xf32>
    %41 = math.exp %40 : vector<8x1xf32>
    %42 = arith.subf %18, %31 : vector<8x1xf32>
    %43 = math.exp %42 : vector<8x1xf32>
    %44 = arith.subf %21, %31 : vector<8x1xf32>
    %45 = math.exp %44 : vector<8x1xf32>
    %46 = arith.subf %24, %31 : vector<8x1xf32>
    %47 = math.exp %46 : vector<8x1xf32>
    %48 = arith.addf %33, %35 : vector<8x1xf32>
    %49 = arith.addf %48, %37 : vector<8x1xf32>
    %50 = arith.addf %49, %39 : vector<8x1xf32>
    %51 = arith.addf %50, %41 : vector<8x1xf32>
    %52 = arith.addf %51, %43 : vector<8x1xf32>
    %53 = arith.addf %52, %45 : vector<8x1xf32>
    %54 = arith.addf %53, %47 : vector<8x1xf32>
    %55 = tpu.reciprocal %54 {approx = true} : vector<8x1xf32> -> vector<8x1xf32>
    %c0_26 = arith.constant 0 : index
    %c0_27 = arith.constant 0 : index
    %c0_28 = arith.constant 0 : index
    %56 = vector.load %arg2[%c0_26, %c0_27, %c0_28] : memref<8x1x32xf32, #tpu.memory_space<vmem>>, vector<8x1x32xf32>
    %c0_29 = arith.constant 0 : index
    %c0_30 = arith.constant 0 : index
    %c0_31 = arith.constant 0 : index
    %57 = vector.load %arg3[%c0_29, %c0_30, %c0_31] : memref<8x1x256xf32, #tpu.memory_space<vmem>>, vector<8x1x32xf32>
    %58 = arith.mulf %33, %55 : vector<8x1xf32>
    %59 = vector.shape_cast %58 : vector<8x1xf32> to vector<8x1x1xf32>
    %60 = vector.broadcast %59 : vector<8x1x1xf32> to vector<8x1x32xf32>
    %61 = arith.mulf %60, %57 : vector<8x1x32xf32>
    %62 = arith.addf %56, %61 : vector<8x1x32xf32>
    %c0_32 = arith.constant 0 : index
    %c0_33 = arith.constant 0 : index
    %c32_34 = arith.constant 32 : index
    %63 = vector.load %arg3[%c0_32, %c0_33, %c32_34] : memref<8x1x256xf32, #tpu.memory_space<vmem>>, vector<8x1x32xf32>
    %64 = arith.mulf %35, %55 : vector<8x1xf32>
    %65 = vector.shape_cast %64 : vector<8x1xf32> to vector<8x1x1xf32>
    %66 = vector.broadcast %65 : vector<8x1x1xf32> to vector<8x1x32xf32>
    %67 = arith.mulf %66, %63 : vector<8x1x32xf32>
    %68 = arith.addf %62, %67 : vector<8x1x32xf32>
    %c0_35 = arith.constant 0 : index
    %c0_36 = arith.constant 0 : index
    %c64_37 = arith.constant 64 : index
    %69 = vector.load %arg3[%c0_35, %c0_36, %c64_37] : memref<8x1x256xf32, #tpu.memory_space<vmem>>, vector<8x1x32xf32>
    %70 = arith.mulf %37, %55 : vector<8x1xf32>
    %71 = vector.shape_cast %70 : vector<8x1xf32> to vector<8x1x1xf32>
    %72 = vector.broadcast %71 : vector<8x1x1xf32> to vector<8x1x32xf32>
    %73 = arith.mulf %72, %69 : vector<8x1x32xf32>
    %74 = arith.addf %68, %73 : vector<8x1x32xf32>
    %c0_38 = arith.constant 0 : index
    %c0_39 = arith.constant 0 : index
    %c96_40 = arith.constant 96 : index
    %75 = vector.load %arg3[%c0_38, %c0_39, %c96_40] : memref<8x1x256xf32, #tpu.memory_space<vmem>>, vector<8x1x32xf32>
    %76 = arith.mulf %39, %55 : vector<8x1xf32>
    %77 = vector.shape_cast %76 : vector<8x1xf32> to vector<8x1x1xf32>
    %78 = vector.broadcast %77 : vector<8x1x1xf32> to vector<8x1x32xf32>
    %79 = arith.mulf %78, %75 : vector<8x1x32xf32>
    %80 = arith.addf %74, %79 : vector<8x1x32xf32>
    %c0_41 = arith.constant 0 : index
    %c0_42 = arith.constant 0 : index
    %c128_43 = arith.constant 128 : index
    %81 = vector.load %arg3[%c0_41, %c0_42, %c128_43] : memref<8x1x256xf32, #tpu.memory_space<vmem>>, vector<8x1x32xf32>
    %82 = arith.mulf %41, %55 : vector<8x1xf32>
    %83 = vector.shape_cast %82 : vector<8x1xf32> to vector<8x1x1xf32>
    %84 = vector.broadcast %83 : vector<8x1x1xf32> to vector<8x1x32xf32>
    %85 = arith.mulf %84, %81 : vector<8x1x32xf32>
    %86 = arith.addf %80, %85 : vector<8x1x32xf32>
    %c0_44 = arith.constant 0 : index
    %c0_45 = arith.constant 0 : index
    %c160_46 = arith.constant 160 : index
    %87 = vector.load %arg3[%c0_44, %c0_45, %c160_46] : memref<8x1x256xf32, #tpu.memory_space<vmem>>, vector<8x1x32xf32>
    %88 = arith.mulf %43, %55 : vector<8x1xf32>
    %89 = vector.shape_cast %88 : vector<8x1xf32> to vector<8x1x1xf32>
    %90 = vector.broadcast %89 : vector<8x1x1xf32> to vector<8x1x32xf32>
    %91 = arith.mulf %90, %87 : vector<8x1x32xf32>
    %92 = arith.addf %86, %91 : vector<8x1x32xf32>
    %c0_47 = arith.constant 0 : index
    %c0_48 = arith.constant 0 : index
    %c192_49 = arith.constant 192 : index
    %93 = vector.load %arg3[%c0_47, %c0_48, %c192_49] : memref<8x1x256xf32, #tpu.memory_space<vmem>>, vector<8x1x32xf32>
    %94 = arith.mulf %45, %55 : vector<8x1xf32>
    %95 = vector.shape_cast %94 : vector<8x1xf32> to vector<8x1x1xf32>
    %96 = vector.broadcast %95 : vector<8x1x1xf32> to vector<8x1x32xf32>
    %97 = arith.mulf %96, %93 : vector<8x1x32xf32>
    %98 = arith.addf %92, %97 : vector<8x1x32xf32>
    %c0_50 = arith.constant 0 : index
    %c0_51 = arith.constant 0 : index
    %c224_52 = arith.constant 224 : index
    %99 = vector.load %arg3[%c0_50, %c0_51, %c224_52] : memref<8x1x256xf32, #tpu.memory_space<vmem>>, vector<8x1x32xf32>
    %100 = arith.mulf %47, %55 : vector<8x1xf32>
    %101 = vector.shape_cast %100 : vector<8x1xf32> to vector<8x1x1xf32>
    %102 = vector.broadcast %101 : vector<8x1x1xf32> to vector<8x1x32xf32>
    %103 = arith.mulf %102, %99 : vector<8x1x32xf32>
    %104 = arith.addf %98, %103 : vector<8x1x32xf32>
    %c0_53 = arith.constant 0 : index
    %c0_54 = arith.constant 0 : index
    %105 = vector.load %arg6[%c0_53, %c0_54] : memref<32x32xf32, #tpu.memory_space<vmem>>, vector<32x32xf32>
    %106 = vector.shape_cast %105 : vector<32x32xf32> to vector<1x32x32xf32>
    %107 = vector.broadcast %106 : vector<1x32x32xf32> to vector<8x32x32xf32>
    "tpu.trace_start"() <{level = 10 : i32, message = "bmi,boi->bmo"}> : () -> ()
    %cst_55 = arith.constant dense<0.000000e+00> : vector<8x1x32xf32>
    %108 = tpu.matmul %104, %107, %cst_55 {dimension_numbers = #tpu.dot_dimension_numbers<[2], [2], [1], [1], [0, 0, 0, 1, 1, 1], [0], [0]>} : vector<8x1x32xf32>, vector<8x32x32xf32>, vector<8x1x32xf32> -> vector<8x1x32xf32>
    "tpu.trace_stop"() : () -> ()
    %c0_56 = arith.constant 0 : index
    %c0_57 = arith.constant 0 : index
    %109 = vector.load %arg7[%c0_56, %c0_57] : memref<1x32xf32, #tpu.memory_space<vmem>>, vector<1x32xf32>
    %110 = vector.shape_cast %109 : vector<1x32xf32> to vector<1x1x32xf32>
    %111 = vector.broadcast %110 : vector<1x1x32xf32> to vector<8x1x32xf32>
    %112 = arith.addf %108, %111 : vector<8x1x32xf32>
    %113 = arith.negf %112 : vector<8x1x32xf32>
    %114 = math.exp %113 : vector<8x1x32xf32>
    %cst_58 = arith.constant 1.000000e+00 : f32
    %115 = vector.broadcast %cst_58 : f32 to vector<8x1x32xf32>
    %116 = arith.addf %115, %114 : vector<8x1x32xf32>
    %117 = arith.divf %115, %116 : vector<8x1x32xf32>
    %c0_59 = arith.constant 0 : index
    %c0_60 = arith.constant 0 : index
    %c0_61 = arith.constant 0 : index
    %118 = vector.load %arg8[%c0_59, %c0_60, %c0_61] : memref<8x1x32xf32, #tpu.memory_space<vmem>>, vector<8x1x32xf32>
    tpu.vector_store %arg8[%c0_59, %c0_60, %c0_61], %117 {strides = array<i32>} : memref<8x1x32xf32, #tpu.memory_space<vmem>>, vector<8x1x32xf32>,
    return
  }
  func.func @transform_0(%arg0: i32, %arg1: i32) -> (i32, i32, i32) {
    %c0_i32 = arith.constant 0 : i32
    %c0_i32_0 = arith.constant 0 : i32
    return %arg0, %arg1, %c0_i32 : i32, i32, i32
  }
  func.func @transform_1(%arg0: i32, %arg1: i32) -> (i32, i32, i32) {
    %c0_i32 = arith.constant 0 : i32
    %c0_i32_0 = arith.constant 0 : i32
    return %arg0, %arg1, %c0_i32 : i32, i32, i32
  }
  func.func @transform_2(%arg0: i32, %arg1: i32) -> (i32, i32, i32) {
    %c0_i32 = arith.constant 0 : i32
    %c0_i32_0 = arith.constant 0 : i32
    return %arg0, %arg1, %c0_i32 : i32, i32, i32
  }
  func.func @transform_3(%arg0: i32, %arg1: i32) -> (i32, i32, i32) {
    %c0_i32 = arith.constant 0 : i32
    %c0_i32_0 = arith.constant 0 : i32
    %c0_i32_1 = arith.constant 0 : i32
    return %arg0, %c0_i32, %c0_i32_0 : i32, i32, i32
  }
  func.func @transform_4(%arg0: i32, %arg1: i32) -> (i32, i32) {
    %c0_i32 = arith.constant 0 : i32
    %c0_i32_0 = arith.constant 0 : i32
    %c0_i32_1 = arith.constant 0 : i32
    return %c0_i32, %c0_i32_0 : i32, i32
  }
  func.func @transform_5(%arg0: i32, %arg1: i32) -> (i32, i32) {
    %c0_i32 = arith.constant 0 : i32
    %c0_i32_0 = arith.constant 0 : i32
    %c0_i32_1 = arith.constant 0 : i32
    return %c0_i32, %c0_i32_0 : i32, i32
  }
  func.func @transform_6(%arg0: i32, %arg1: i32) -> (i32, i32, i32) {
    %c0_i32 = arith.constant 0 : i32
    %c0_i32_0 = arith.constant 0 : i32
    return %arg0, %arg1, %c0_i32 : i32, i32, i32
  }
}

module attributes {stable_mosaic.version = 11 : i64} {
  func.func @_aggregator_kernel(%arg0: i32, %arg1: i32, %arg2: memref<8x8x32xf32, #tpu.memory_space<vmem>>, %arg3: memref<8x8x256xf32, #tpu.memory_space<vmem>>, %arg4: memref<8x8x256xf32, #tpu.memory_space<vmem>>, %arg5: memref<8x1x32xf32, #tpu.memory_space<vmem>>, %arg6: memref<32x32xf32, #tpu.memory_space<vmem>>, %arg7: memref<1x32xf32, #tpu.memory_space<vmem>>, %arg8: memref<8x8x32xf32, #tpu.memory_space<vmem>>) attributes {dimension_semantics = [#tpu.dimension_semantics<parallel>, #tpu.dimension_semantics<parallel>], iteration_bounds = array<i64: 1, 1>, scalar_prefetch = 0 : i64, scratch_operands = 0 : i64, tpu.core_type = #tpu.core_type<tc>, window_params = [{transform_indices = @transform_0, window_bounds = array<i64: 8, 8, 32>}, {transform_indices = @transform_1, window_bounds = array<i64: 8, 8, 256>}, {transform_indices = @transform_2, window_bounds = array<i64: 8, 8, 256>}, {transform_indices = @transform_3, window_bounds = array<i64: 8, 1, 32>}, {pipeline_mode = #tpu.pipeline_mode<synchronous>, transform_indices = @transform_4, window_bounds = array<i64: 32, 32>}, {pipeline_mode = #tpu.pipeline_mode<synchronous>, transform_indices = @transform_5, window_bounds = array<i64: 1, 32>}, {transform_indices = @transform_6, window_bounds = array<i64: 8, 8, 32>}]} {
    %c0 = arith.constant 0 : index
    %c0_0 = arith.constant 0 : index
    %c0_1 = arith.constant 0 : index
    %0 = vector.load %arg5[%c0, %c0_0, %c0_1] : memref<8x1x32xf32, #tpu.memory_space<vmem>>, vector<8x1x32xf32>
    %c0_2 = arith.constant 0 : index
    %c0_3 = arith.constant 0 : index
    %c0_4 = arith.constant 0 : index
    %1 = vector.load %arg4[%c0_2, %c0_3, %c0_4] : memref<8x8x256xf32, #tpu.memory_space<vmem>>, vector<8x8x32xf32>
    %2 = vector.broadcast %0 : vector<8x1x32xf32> to vector<8x8x32xf32>
    %3 = arith.mulf %2, %1 : vector<8x8x32xf32>
    %cst = arith.constant dense<0.000000e+00> : vector<8x8xf32>
    %4 = vector.multi_reduction <add>, %3, %cst [2] : vector<8x8x32xf32> to vector<8x8xf32>
    %c0_5 = arith.constant 0 : index
    %c0_6 = arith.constant 0 : index
    %c32 = arith.constant 32 : index
    %5 = vector.load %arg4[%c0_5, %c0_6, %c32] : memref<8x8x256xf32, #tpu.memory_space<vmem>>, vector<8x8x32xf32>
    %6 = vector.broadcast %0 : vector<8x1x32xf32> to vector<8x8x32xf32>
    %7 = arith.mulf %6, %5 : vector<8x8x32xf32>
    %cst_7 = arith.constant dense<0.000000e+00> : vector<8x8xf32>
    %8 = vector.multi_reduction <add>, %7, %cst_7 [2] : vector<8x8x32xf32> to vector<8x8xf32>
    %c0_8 = arith.constant 0 : index
    %c0_9 = arith.constant 0 : index
    %c64 = arith.constant 64 : index
    %9 = vector.load %arg4[%c0_8, %c0_9, %c64] : memref<8x8x256xf32, #tpu.memory_space<vmem>>, vector<8x8x32xf32>
    %10 = vector.broadcast %0 : vector<8x1x32xf32> to vector<8x8x32xf32>
    %11 = arith.mulf %10, %9 : vector<8x8x32xf32>
    %cst_10 = arith.constant dense<0.000000e+00> : vector<8x8xf32>
    %12 = vector.multi_reduction <add>, %11, %cst_10 [2] : vector<8x8x32xf32> to vector<8x8xf32>
    %c0_11 = arith.constant 0 : index
    %c0_12 = arith.constant 0 : index
    %c96 = arith.constant 96 : index
    %13 = vector.load %arg4[%c0_11, %c0_12, %c96] : memref<8x8x256xf32, #tpu.memory_space<vmem>>, vector<8x8x32xf32>
    %14 = vector.broadcast %0 : vector<8x1x32xf32> to vector<8x8x32xf32>
    %15 = arith.mulf %14, %13 : vector<8x8x32xf32>
    %cst_13 = arith.constant dense<0.000000e+00> : vector<8x8xf32>
    %16 = vector.multi_reduction <add>, %15, %cst_13 [2] : vector<8x8x32xf32> to vector<8x8xf32>
    %c0_14 = arith.constant 0 : index
    %c0_15 = arith.constant 0 : index
    %c128 = arith.constant 128 : index
    %17 = vector.load %arg4[%c0_14, %c0_15, %c128] : memref<8x8x256xf32, #tpu.memory_space<vmem>>, vector<8x8x32xf32>
    %18 = vector.broadcast %0 : vector<8x1x32xf32> to vector<8x8x32xf32>
    %19 = arith.mulf %18, %17 : vector<8x8x32xf32>
    %cst_16 = arith.constant dense<0.000000e+00> : vector<8x8xf32>
    %20 = vector.multi_reduction <add>, %19, %cst_16 [2] : vector<8x8x32xf32> to vector<8x8xf32>
    %c0_17 = arith.constant 0 : index
    %c0_18 = arith.constant 0 : index
    %c160 = arith.constant 160 : index
    %21 = vector.load %arg4[%c0_17, %c0_18, %c160] : memref<8x8x256xf32, #tpu.memory_space<vmem>>, vector<8x8x32xf32>
    %22 = vector.broadcast %0 : vector<8x1x32xf32> to vector<8x8x32xf32>
    %23 = arith.mulf %22, %21 : vector<8x8x32xf32>
    %cst_19 = arith.constant dense<0.000000e+00> : vector<8x8xf32>
    %24 = vector.multi_reduction <add>, %23, %cst_19 [2] : vector<8x8x32xf32> to vector<8x8xf32>
    %c0_20 = arith.constant 0 : index
    %c0_21 = arith.constant 0 : index
    %c192 = arith.constant 192 : index
    %25 = vector.load %arg4[%c0_20, %c0_21, %c192] : memref<8x8x256xf32, #tpu.memory_space<vmem>>, vector<8x8x32xf32>
    %26 = vector.broadcast %0 : vector<8x1x32xf32> to vector<8x8x32xf32>
    %27 = arith.mulf %26, %25 : vector<8x8x32xf32>
    %cst_22 = arith.constant dense<0.000000e+00> : vector<8x8xf32>
    %28 = vector.multi_reduction <add>, %27, %cst_22 [2] : vector<8x8x32xf32> to vector<8x8xf32>
    %c0_23 = arith.constant 0 : index
    %c0_24 = arith.constant 0 : index
    %c224 = arith.constant 224 : index
    %29 = vector.load %arg4[%c0_23, %c0_24, %c224] : memref<8x8x256xf32, #tpu.memory_space<vmem>>, vector<8x8x32xf32>
    %30 = vector.broadcast %0 : vector<8x1x32xf32> to vector<8x8x32xf32>
    %31 = arith.mulf %30, %29 : vector<8x8x32xf32>
    %cst_25 = arith.constant dense<0.000000e+00> : vector<8x8xf32>
    %32 = vector.multi_reduction <add>, %31, %cst_25 [2] : vector<8x8x32xf32> to vector<8x8xf32>
    %33 = arith.maximumf %4, %8 : vector<8x8xf32>
    %34 = arith.maximumf %33, %12 : vector<8x8xf32>
    %35 = arith.maximumf %34, %16 : vector<8x8xf32>
    %36 = arith.maximumf %35, %20 : vector<8x8xf32>
    %37 = arith.maximumf %36, %24 : vector<8x8xf32>
    %38 = arith.maximumf %37, %28 : vector<8x8xf32>
    %39 = arith.maximumf %38, %32 : vector<8x8xf32>
    %40 = arith.subf %4, %39 : vector<8x8xf32>
    %41 = math.exp %40 : vector<8x8xf32>
    %42 = arith.subf %8, %39 : vector<8x8xf32>
    %43 = math.exp %42 : vector<8x8xf32>
    %44 = arith.subf %12, %39 : vector<8x8xf32>
    %45 = math.exp %44 : vector<8x8xf32>
    %46 = arith.subf %16, %39 : vector<8x8xf32>
    %47 = math.exp %46 : vector<8x8xf32>
    %48 = arith.subf %20, %39 : vector<8x8xf32>
    %49 = math.exp %48 : vector<8x8xf32>
    %50 = arith.subf %24, %39 : vector<8x8xf32>
    %51 = math.exp %50 : vector<8x8xf32>
    %52 = arith.subf %28, %39 : vector<8x8xf32>
    %53 = math.exp %52 : vector<8x8xf32>
    %54 = arith.subf %32, %39 : vector<8x8xf32>
    %55 = math.exp %54 : vector<8x8xf32>
    %56 = arith.addf %41, %43 : vector<8x8xf32>
    %57 = arith.addf %56, %45 : vector<8x8xf32>
    %58 = arith.addf %57, %47 : vector<8x8xf32>
    %59 = arith.addf %58, %49 : vector<8x8xf32>
    %60 = arith.addf %59, %51 : vector<8x8xf32>
    %61 = arith.addf %60, %53 : vector<8x8xf32>
    %62 = arith.addf %61, %55 : vector<8x8xf32>
    %63 = tpu.reciprocal %62 {approx = true} : vector<8x8xf32> -> vector<8x8xf32>
    %c0_26 = arith.constant 0 : index
    %c0_27 = arith.constant 0 : index
    %c0_28 = arith.constant 0 : index
    %64 = vector.load %arg2[%c0_26, %c0_27, %c0_28] : memref<8x8x32xf32, #tpu.memory_space<vmem>>, vector<8x8x32xf32>
    %c0_29 = arith.constant 0 : index
    %c0_30 = arith.constant 0 : index
    %c0_31 = arith.constant 0 : index
    %65 = vector.load %arg3[%c0_29, %c0_30, %c0_31] : memref<8x8x256xf32, #tpu.memory_space<vmem>>, vector<8x8x32xf32>
    %66 = arith.mulf %41, %63 : vector<8x8xf32>
    %67 = vector.shape_cast %66 : vector<8x8xf32> to vector<8x8x1xf32>
    %68 = vector.broadcast %67 : vector<8x8x1xf32> to vector<8x8x32xf32>
    %69 = arith.mulf %68, %65 : vector<8x8x32xf32>
    %70 = arith.addf %64, %69 : vector<8x8x32xf32>
    %c0_32 = arith.constant 0 : index
    %c0_33 = arith.constant 0 : index
    %c32_34 = arith.constant 32 : index
    %71 = vector.load %arg3[%c0_32, %c0_33, %c32_34] : memref<8x8x256xf32, #tpu.memory_space<vmem>>, vector<8x8x32xf32>
    %72 = arith.mulf %43, %63 : vector<8x8xf32>
    %73 = vector.shape_cast %72 : vector<8x8xf32> to vector<8x8x1xf32>
    %74 = vector.broadcast %73 : vector<8x8x1xf32> to vector<8x8x32xf32>
    %75 = arith.mulf %74, %71 : vector<8x8x32xf32>
    %76 = arith.addf %70, %75 : vector<8x8x32xf32>
    %c0_35 = arith.constant 0 : index
    %c0_36 = arith.constant 0 : index
    %c64_37 = arith.constant 64 : index
    %77 = vector.load %arg3[%c0_35, %c0_36, %c64_37] : memref<8x8x256xf32, #tpu.memory_space<vmem>>, vector<8x8x32xf32>
    %78 = arith.mulf %45, %63 : vector<8x8xf32>
    %79 = vector.shape_cast %78 : vector<8x8xf32> to vector<8x8x1xf32>
    %80 = vector.broadcast %79 : vector<8x8x1xf32> to vector<8x8x32xf32>
    %81 = arith.mulf %80, %77 : vector<8x8x32xf32>
    %82 = arith.addf %76, %81 : vector<8x8x32xf32>
    %c0_38 = arith.constant 0 : index
    %c0_39 = arith.constant 0 : index
    %c96_40 = arith.constant 96 : index
    %83 = vector.load %arg3[%c0_38, %c0_39, %c96_40] : memref<8x8x256xf32, #tpu.memory_space<vmem>>, vector<8x8x32xf32>
    %84 = arith.mulf %47, %63 : vector<8x8xf32>
    %85 = vector.shape_cast %84 : vector<8x8xf32> to vector<8x8x1xf32>
    %86 = vector.broadcast %85 : vector<8x8x1xf32> to vector<8x8x32xf32>
    %87 = arith.mulf %86, %83 : vector<8x8x32xf32>
    %88 = arith.addf %82, %87 : vector<8x8x32xf32>
    %c0_41 = arith.constant 0 : index
    %c0_42 = arith.constant 0 : index
    %c128_43 = arith.constant 128 : index
    %89 = vector.load %arg3[%c0_41, %c0_42, %c128_43] : memref<8x8x256xf32, #tpu.memory_space<vmem>>, vector<8x8x32xf32>
    %90 = arith.mulf %49, %63 : vector<8x8xf32>
    %91 = vector.shape_cast %90 : vector<8x8xf32> to vector<8x8x1xf32>
    %92 = vector.broadcast %91 : vector<8x8x1xf32> to vector<8x8x32xf32>
    %93 = arith.mulf %92, %89 : vector<8x8x32xf32>
    %94 = arith.addf %88, %93 : vector<8x8x32xf32>
    %c0_44 = arith.constant 0 : index
    %c0_45 = arith.constant 0 : index
    %c160_46 = arith.constant 160 : index
    %95 = vector.load %arg3[%c0_44, %c0_45, %c160_46] : memref<8x8x256xf32, #tpu.memory_space<vmem>>, vector<8x8x32xf32>
    %96 = arith.mulf %51, %63 : vector<8x8xf32>
    %97 = vector.shape_cast %96 : vector<8x8xf32> to vector<8x8x1xf32>
    %98 = vector.broadcast %97 : vector<8x8x1xf32> to vector<8x8x32xf32>
    %99 = arith.mulf %98, %95 : vector<8x8x32xf32>
    %100 = arith.addf %94, %99 : vector<8x8x32xf32>
    %c0_47 = arith.constant 0 : index
    %c0_48 = arith.constant 0 : index
    %c192_49 = arith.constant 192 : index
    %101 = vector.load %arg3[%c0_47, %c0_48, %c192_49] : memref<8x8x256xf32, #tpu.memory_space<vmem>>, vector<8x8x32xf32>
    %102 = arith.mulf %53, %63 : vector<8x8xf32>
    %103 = vector.shape_cast %102 : vector<8x8xf32> to vector<8x8x1xf32>
    %104 = vector.broadcast %103 : vector<8x8x1xf32> to vector<8x8x32xf32>
    %105 = arith.mulf %104, %101 : vector<8x8x32xf32>
    %106 = arith.addf %100, %105 : vector<8x8x32xf32>
    %c0_50 = arith.constant 0 : index
    %c0_51 = arith.constant 0 : index
    %c224_52 = arith.constant 224 : index
    %107 = vector.load %arg3[%c0_50, %c0_51, %c224_52] : memref<8x8x256xf32, #tpu.memory_space<vmem>>, vector<8x8x32xf32>
    %108 = arith.mulf %55, %63 : vector<8x8xf32>
    %109 = vector.shape_cast %108 : vector<8x8xf32> to vector<8x8x1xf32>
    %110 = vector.broadcast %109 : vector<8x8x1xf32> to vector<8x8x32xf32>
    %111 = arith.mulf %110, %107 : vector<8x8x32xf32>
    %112 = arith.addf %106, %111 : vector<8x8x32xf32>
    %c0_53 = arith.constant 0 : index
    %c0_54 = arith.constant 0 : index
    %113 = vector.load %arg6[%c0_53, %c0_54] : memref<32x32xf32, #tpu.memory_space<vmem>>, vector<32x32xf32>
    %114 = vector.shape_cast %113 : vector<32x32xf32> to vector<1x32x32xf32>
    %115 = vector.broadcast %114 : vector<1x32x32xf32> to vector<8x32x32xf32>
    "tpu.trace_start"() <{level = 10 : i32, message = "bmi,boi->bmo"}> : () -> ()
    %cst_55 = arith.constant dense<0.000000e+00> : vector<8x8x32xf32>
    %116 = tpu.matmul %112, %115, %cst_55 {dimension_numbers = #tpu.dot_dimension_numbers<[2], [2], [1], [1], [0, 0, 0, 1, 1, 1], [0], [0]>} : vector<8x8x32xf32>, vector<8x32x32xf32>, vector<8x8x32xf32> -> vector<8x8x32xf32>
    "tpu.trace_stop"() : () -> ()
    %c0_56 = arith.constant 0 : index
    %c0_57 = arith.constant 0 : index
    %117 = vector.load %arg7[%c0_56, %c0_57] : memref<1x32xf32, #tpu.memory_space<vmem>>, vector<1x32xf32>
    %118 = vector.shape_cast %117 : vector<1x32xf32> to vector<1x1x32xf32>
    %119 = vector.broadcast %118 : vector<1x1x32xf32> to vector<8x8x32xf32>
    %120 = arith.addf %116, %119 : vector<8x8x32xf32>
    %121 = arith.negf %120 : vector<8x8x32xf32>
    %122 = math.exp %121 : vector<8x8x32xf32>
    %cst_58 = arith.constant 1.000000e+00 : f32
    %123 = vector.broadcast %cst_58 : f32 to vector<8x8x32xf32>
    %124 = arith.addf %123, %122 : vector<8x8x32xf32>
    %125 = arith.divf %123, %124 : vector<8x8x32xf32>
    %c0_59 = arith.constant 0 : index
    %c0_60 = arith.constant 0 : index
    %c0_61 = arith.constant 0 : index
    %126 = vector.load %arg8[%c0_59, %c0_60, %c0_61] : memref<8x8x32xf32, #tpu.memory_space<vmem>>, vector<8x8x32xf32>
    tpu.vector_store %arg8[%c0_59, %c0_60, %c0_61], %125 {strides = array<i32>} : memref<8x8x32xf32, #tpu.memory_space<vmem>>, vector<8x8x32xf32>,
    return
  }
  func.func @transform_0(%arg0: i32, %arg1: i32) -> (i32, i32, i32) {
    %c0_i32 = arith.constant 0 : i32
    %c0_i32_0 = arith.constant 0 : i32
    return %arg0, %arg1, %c0_i32 : i32, i32, i32
  }
  func.func @transform_1(%arg0: i32, %arg1: i32) -> (i32, i32, i32) {
    %c0_i32 = arith.constant 0 : i32
    %c0_i32_0 = arith.constant 0 : i32
    return %arg0, %arg1, %c0_i32 : i32, i32, i32
  }
  func.func @transform_2(%arg0: i32, %arg1: i32) -> (i32, i32, i32) {
    %c0_i32 = arith.constant 0 : i32
    %c0_i32_0 = arith.constant 0 : i32
    return %arg0, %arg1, %c0_i32 : i32, i32, i32
  }
  func.func @transform_3(%arg0: i32, %arg1: i32) -> (i32, i32, i32) {
    %c0_i32 = arith.constant 0 : i32
    %c0_i32_0 = arith.constant 0 : i32
    %c0_i32_1 = arith.constant 0 : i32
    return %arg0, %c0_i32, %c0_i32_0 : i32, i32, i32
  }
  func.func @transform_4(%arg0: i32, %arg1: i32) -> (i32, i32) {
    %c0_i32 = arith.constant 0 : i32
    %c0_i32_0 = arith.constant 0 : i32
    %c0_i32_1 = arith.constant 0 : i32
    return %c0_i32, %c0_i32_0 : i32, i32
  }
  func.func @transform_5(%arg0: i32, %arg1: i32) -> (i32, i32) {
    %c0_i32 = arith.constant 0 : i32
    %c0_i32_0 = arith.constant 0 : i32
    %c0_i32_1 = arith.constant 0 : i32
    return %c0_i32, %c0_i32_0 : i32, i32
  }
  func.func @transform_6(%arg0: i32, %arg1: i32) -> (i32, i32, i32) {
    %c0_i32 = arith.constant 0 : i32
    %c0_i32_0 = arith.constant 0 : i32
    return %arg0, %arg1, %c0_i32 : i32, i32, i32
  }
}

module attributes {stable_mosaic.version = 11 : i64} {
  func.func @_aggregator_kernel(%arg0: i32, %arg1: i32, %arg2: memref<8x1x32xf32, #tpu.memory_space<vmem>>, %arg3: memref<8x1x256xf32, #tpu.memory_space<vmem>>, %arg4: memref<8x1x256xf32, #tpu.memory_space<vmem>>, %arg5: memref<8x1x32xf32, #tpu.memory_space<vmem>>, %arg6: memref<32x32xf32, #tpu.memory_space<vmem>>, %arg7: memref<1x32xf32, #tpu.memory_space<vmem>>, %arg8: memref<8x1x32xf32, #tpu.memory_space<vmem>>) attributes {dimension_semantics = [#tpu.dimension_semantics<parallel>, #tpu.dimension_semantics<parallel>], iteration_bounds = array<i64: 1, 1>, scalar_prefetch = 0 : i64, scratch_operands = 0 : i64, tpu.core_type = #tpu.core_type<tc>, window_params = [{transform_indices = @transform_0, window_bounds = array<i64: 8, 1, 32>}, {transform_indices = @transform_1, window_bounds = array<i64: 8, 1, 256>}, {transform_indices = @transform_2, window_bounds = array<i64: 8, 1, 256>}, {transform_indices = @transform_3, window_bounds = array<i64: 8, 1, 32>}, {pipeline_mode = #tpu.pipeline_mode<synchronous>, transform_indices = @transform_4, window_bounds = array<i64: 32, 32>}, {pipeline_mode = #tpu.pipeline_mode<synchronous>, transform_indices = @transform_5, window_bounds = array<i64: 1, 32>}, {transform_indices = @transform_6, window_bounds = array<i64: 8, 1, 32>}]} {
    %c0 = arith.constant 0 : index
    %c0_0 = arith.constant 0 : index
    %c0_1 = arith.constant 0 : index
    %0 = vector.load %arg5[%c0, %c0_0, %c0_1] : memref<8x1x32xf32, #tpu.memory_space<vmem>>, vector<8x1x32xf32>
    %c0_2 = arith.constant 0 : index
    %c0_3 = arith.constant 0 : index
    %c0_4 = arith.constant 0 : index
    %1 = vector.load %arg4[%c0_2, %c0_3, %c0_4] : memref<8x1x256xf32, #tpu.memory_space<vmem>>, vector<8x1x32xf32>
    %2 = arith.mulf %0, %1 : vector<8x1x32xf32>
    %cst = arith.constant dense<0.000000e+00> : vector<8x1xf32>
    %3 = vector.multi_reduction <add>, %2, %cst [2] : vector<8x1x32xf32> to vector<8x1xf32>
    %c0_5 = arith.constant 0 : index
    %c0_6 = arith.constant 0 : index
    %c32 = arith.constant 32 : index
    %4 = vector.load %arg4[%c0_5, %c0_6, %c32] : memref<8x1x256xf32, #tpu.memory_space<vmem>>, vector<8x1x32xf32>
    %5 = arith.mulf %0, %4 : vector<8x1x32xf32>
    %cst_7 = arith.constant dense<0.000000e+00> : vector<8x1xf32>
    %6 = vector.multi_reduction <add>, %5, %cst_7 [2] : vector<8x1x32xf32> to vector<8x1xf32>
    %c0_8 = arith.constant 0 : index
    %c0_9 = arith.constant 0 : index
    %c64 = arith.constant 64 : index
    %7 = vector.load %arg4[%c0_8, %c0_9, %c64] : memref<8x1x256xf32, #tpu.memory_space<vmem>>, vector<8x1x32xf32>
    %8 = arith.mulf %0, %7 : vector<8x1x32xf32>
    %cst_10 = arith.constant dense<0.000000e+00> : vector<8x1xf32>
    %9 = vector.multi_reduction <add>, %8, %cst_10 [2] : vector<8x1x32xf32> to vector<8x1xf32>
    %c0_11 = arith.constant 0 : index
    %c0_12 = arith.constant 0 : index
    %c96 = arith.constant 96 : index
    %10 = vector.load %arg4[%c0_11, %c0_12, %c96] : memref<8x1x256xf32, #tpu.memory_space<vmem>>, vector<8x1x32xf32>
    %11 = arith.mulf %0, %10 : vector<8x1x32xf32>
    %cst_13 = arith.constant dense<0.000000e+00> : vector<8x1xf32>
    %12 = vector.multi_reduction <add>, %11, %cst_13 [2] : vector<8x1x32xf32> to vector<8x1xf32>
    %c0_14 = arith.constant 0 : index
    %c0_15 = arith.constant 0 : index
    %c128 = arith.constant 128 : index
    %13 = vector.load %arg4[%c0_14, %c0_15, %c128] : memref<8x1x256xf32, #tpu.memory_space<vmem>>, vector<8x1x32xf32>
    %14 = arith.mulf %0, %13 : vector<8x1x32xf32>
    %cst_16 = arith.constant dense<0.000000e+00> : vector<8x1xf32>
    %15 = vector.multi_reduction <add>, %14, %cst_16 [2] : vector<8x1x32xf32> to vector<8x1xf32>
    %c0_17 = arith.constant 0 : index
    %c0_18 = arith.constant 0 : index
    %c160 = arith.constant 160 : index
    %16 = vector.load %arg4[%c0_17, %c0_18, %c160] : memref<8x1x256xf32, #tpu.memory_space<vmem>>, vector<8x1x32xf32>
    %17 = arith.mulf %0, %16 : vector<8x1x32xf32>
    %cst_19 = arith.constant dense<0.000000e+00> : vector<8x1xf32>
    %18 = vector.multi_reduction <add>, %17, %cst_19 [2] : vector<8x1x32xf32> to vector<8x1xf32>
    %c0_20 = arith.constant 0 : index
    %c0_21 = arith.constant 0 : index
    %c192 = arith.constant 192 : index
    %19 = vector.load %arg4[%c0_20, %c0_21, %c192] : memref<8x1x256xf32, #tpu.memory_space<vmem>>, vector<8x1x32xf32>
    %20 = arith.mulf %0, %19 : vector<8x1x32xf32>
    %cst_22 = arith.constant dense<0.000000e+00> : vector<8x1xf32>
    %21 = vector.multi_reduction <add>, %20, %cst_22 [2] : vector<8x1x32xf32> to vector<8x1xf32>
    %c0_23 = arith.constant 0 : index
    %c0_24 = arith.constant 0 : index
    %c224 = arith.constant 224 : index
    %22 = vector.load %arg4[%c0_23, %c0_24, %c224] : memref<8x1x256xf32, #tpu.memory_space<vmem>>, vector<8x1x32xf32>
    %23 = arith.mulf %0, %22 : vector<8x1x32xf32>
    %cst_25 = arith.constant dense<0.000000e+00> : vector<8x1xf32>
    %24 = vector.multi_reduction <add>, %23, %cst_25 [2] : vector<8x1x32xf32> to vector<8x1xf32>
    %25 = arith.maximumf %3, %6 : vector<8x1xf32>
    %26 = arith.maximumf %25, %9 : vector<8x1xf32>
    %27 = arith.maximumf %26, %12 : vector<8x1xf32>
    %28 = arith.maximumf %27, %15 : vector<8x1xf32>
    %29 = arith.maximumf %28, %18 : vector<8x1xf32>
    %30 = arith.maximumf %29, %21 : vector<8x1xf32>
    %31 = arith.maximumf %30, %24 : vector<8x1xf32>
    %32 = arith.subf %3, %31 : vector<8x1xf32>
    %33 = math.exp %32 : vector<8x1xf32>
    %34 = arith.subf %6, %31 : vector<8x1xf32>
    %35 = math.exp %34 : vector<8x1xf32>
    %36 = arith.subf %9, %31 : vector<8x1xf32>
    %37 = math.exp %36 : vector<8x1xf32>
    %38 = arith.subf %12, %31 : vector<8x1xf32>
    %39 = math.exp %38 : vector<8x1xf32>
    %40 = arith.subf %15, %31 : vector<8x1xf32>
    %41 = math.exp %40 : vector<8x1xf32>
    %42 = arith.subf %18, %31 : vector<8x1xf32>
    %43 = math.exp %42 : vector<8x1xf32>
    %44 = arith.subf %21, %31 : vector<8x1xf32>
    %45 = math.exp %44 : vector<8x1xf32>
    %46 = arith.subf %24, %31 : vector<8x1xf32>
    %47 = math.exp %46 : vector<8x1xf32>
    %48 = arith.addf %33, %35 : vector<8x1xf32>
    %49 = arith.addf %48, %37 : vector<8x1xf32>
    %50 = arith.addf %49, %39 : vector<8x1xf32>
    %51 = arith.addf %50, %41 : vector<8x1xf32>
    %52 = arith.addf %51, %43 : vector<8x1xf32>
    %53 = arith.addf %52, %45 : vector<8x1xf32>
    %54 = arith.addf %53, %47 : vector<8x1xf32>
    %55 = tpu.reciprocal %54 {approx = true} : vector<8x1xf32> -> vector<8x1xf32>
    %c0_26 = arith.constant 0 : index
    %c0_27 = arith.constant 0 : index
    %c0_28 = arith.constant 0 : index
    %56 = vector.load %arg2[%c0_26, %c0_27, %c0_28] : memref<8x1x32xf32, #tpu.memory_space<vmem>>, vector<8x1x32xf32>
    %c0_29 = arith.constant 0 : index
    %c0_30 = arith.constant 0 : index
    %c0_31 = arith.constant 0 : index
    %57 = vector.load %arg3[%c0_29, %c0_30, %c0_31] : memref<8x1x256xf32, #tpu.memory_space<vmem>>, vector<8x1x32xf32>
    %58 = arith.mulf %33, %55 : vector<8x1xf32>
    %59 = vector.shape_cast %58 : vector<8x1xf32> to vector<8x1x1xf32>
    %60 = vector.broadcast %59 : vector<8x1x1xf32> to vector<8x1x32xf32>
    %61 = arith.mulf %60, %57 : vector<8x1x32xf32>
    %62 = arith.addf %56, %61 : vector<8x1x32xf32>
    %c0_32 = arith.constant 0 : index
    %c0_33 = arith.constant 0 : index
    %c32_34 = arith.constant 32 : index
    %63 = vector.load %arg3[%c0_32, %c0_33, %c32_34] : memref<8x1x256xf32, #tpu.memory_space<vmem>>, vector<8x1x32xf32>
    %64 = arith.mulf %35, %55 : vector<8x1xf32>
    %65 = vector.shape_cast %64 : vector<8x1xf32> to vector<8x1x1xf32>
    %66 = vector.broadcast %65 : vector<8x1x1xf32> to vector<8x1x32xf32>
    %67 = arith.mulf %66, %63 : vector<8x1x32xf32>
    %68 = arith.addf %62, %67 : vector<8x1x32xf32>
    %c0_35 = arith.constant 0 : index
    %c0_36 = arith.constant 0 : index
    %c64_37 = arith.constant 64 : index
    %69 = vector.load %arg3[%c0_35, %c0_36, %c64_37] : memref<8x1x256xf32, #tpu.memory_space<vmem>>, vector<8x1x32xf32>
    %70 = arith.mulf %37, %55 : vector<8x1xf32>
    %71 = vector.shape_cast %70 : vector<8x1xf32> to vector<8x1x1xf32>
    %72 = vector.broadcast %71 : vector<8x1x1xf32> to vector<8x1x32xf32>
    %73 = arith.mulf %72, %69 : vector<8x1x32xf32>
    %74 = arith.addf %68, %73 : vector<8x1x32xf32>
    %c0_38 = arith.constant 0 : index
    %c0_39 = arith.constant 0 : index
    %c96_40 = arith.constant 96 : index
    %75 = vector.load %arg3[%c0_38, %c0_39, %c96_40] : memref<8x1x256xf32, #tpu.memory_space<vmem>>, vector<8x1x32xf32>
    %76 = arith.mulf %39, %55 : vector<8x1xf32>
    %77 = vector.shape_cast %76 : vector<8x1xf32> to vector<8x1x1xf32>
    %78 = vector.broadcast %77 : vector<8x1x1xf32> to vector<8x1x32xf32>
    %79 = arith.mulf %78, %75 : vector<8x1x32xf32>
    %80 = arith.addf %74, %79 : vector<8x1x32xf32>
    %c0_41 = arith.constant 0 : index
    %c0_42 = arith.constant 0 : index
    %c128_43 = arith.constant 128 : index
    %81 = vector.load %arg3[%c0_41, %c0_42, %c128_43] : memref<8x1x256xf32, #tpu.memory_space<vmem>>, vector<8x1x32xf32>
    %82 = arith.mulf %41, %55 : vector<8x1xf32>
    %83 = vector.shape_cast %82 : vector<8x1xf32> to vector<8x1x1xf32>
    %84 = vector.broadcast %83 : vector<8x1x1xf32> to vector<8x1x32xf32>
    %85 = arith.mulf %84, %81 : vector<8x1x32xf32>
    %86 = arith.addf %80, %85 : vector<8x1x32xf32>
    %c0_44 = arith.constant 0 : index
    %c0_45 = arith.constant 0 : index
    %c160_46 = arith.constant 160 : index
    %87 = vector.load %arg3[%c0_44, %c0_45, %c160_46] : memref<8x1x256xf32, #tpu.memory_space<vmem>>, vector<8x1x32xf32>
    %88 = arith.mulf %43, %55 : vector<8x1xf32>
    %89 = vector.shape_cast %88 : vector<8x1xf32> to vector<8x1x1xf32>
    %90 = vector.broadcast %89 : vector<8x1x1xf32> to vector<8x1x32xf32>
    %91 = arith.mulf %90, %87 : vector<8x1x32xf32>
    %92 = arith.addf %86, %91 : vector<8x1x32xf32>
    %c0_47 = arith.constant 0 : index
    %c0_48 = arith.constant 0 : index
    %c192_49 = arith.constant 192 : index
    %93 = vector.load %arg3[%c0_47, %c0_48, %c192_49] : memref<8x1x256xf32, #tpu.memory_space<vmem>>, vector<8x1x32xf32>
    %94 = arith.mulf %45, %55 : vector<8x1xf32>
    %95 = vector.shape_cast %94 : vector<8x1xf32> to vector<8x1x1xf32>
    %96 = vector.broadcast %95 : vector<8x1x1xf32> to vector<8x1x32xf32>
    %97 = arith.mulf %96, %93 : vector<8x1x32xf32>
    %98 = arith.addf %92, %97 : vector<8x1x32xf32>
    %c0_50 = arith.constant 0 : index
    %c0_51 = arith.constant 0 : index
    %c224_52 = arith.constant 224 : index
    %99 = vector.load %arg3[%c0_50, %c0_51, %c224_52] : memref<8x1x256xf32, #tpu.memory_space<vmem>>, vector<8x1x32xf32>
    %100 = arith.mulf %47, %55 : vector<8x1xf32>
    %101 = vector.shape_cast %100 : vector<8x1xf32> to vector<8x1x1xf32>
    %102 = vector.broadcast %101 : vector<8x1x1xf32> to vector<8x1x32xf32>
    %103 = arith.mulf %102, %99 : vector<8x1x32xf32>
    %104 = arith.addf %98, %103 : vector<8x1x32xf32>
    %c0_53 = arith.constant 0 : index
    %c0_54 = arith.constant 0 : index
    %105 = vector.load %arg6[%c0_53, %c0_54] : memref<32x32xf32, #tpu.memory_space<vmem>>, vector<32x32xf32>
    %106 = vector.shape_cast %105 : vector<32x32xf32> to vector<1x32x32xf32>
    %107 = vector.broadcast %106 : vector<1x32x32xf32> to vector<8x32x32xf32>
    "tpu.trace_start"() <{level = 10 : i32, message = "bmi,boi->bmo"}> : () -> ()
    %cst_55 = arith.constant dense<0.000000e+00> : vector<8x1x32xf32>
    %108 = tpu.matmul %104, %107, %cst_55 {dimension_numbers = #tpu.dot_dimension_numbers<[2], [2], [1], [1], [0, 0, 0, 1, 1, 1], [0], [0]>} : vector<8x1x32xf32>, vector<8x32x32xf32>, vector<8x1x32xf32> -> vector<8x1x32xf32>
    "tpu.trace_stop"() : () -> ()
    %c0_56 = arith.constant 0 : index
    %c0_57 = arith.constant 0 : index
    %109 = vector.load %arg7[%c0_56, %c0_57] : memref<1x32xf32, #tpu.memory_space<vmem>>, vector<1x32xf32>
    %110 = vector.shape_cast %109 : vector<1x32xf32> to vector<1x1x32xf32>
    %111 = vector.broadcast %110 : vector<1x1x32xf32> to vector<8x1x32xf32>
    %112 = arith.addf %108, %111 : vector<8x1x32xf32>
    %113 = math.tanh %112 : vector<8x1x32xf32>
    %c0_58 = arith.constant 0 : index
    %c0_59 = arith.constant 0 : index
    %c0_60 = arith.constant 0 : index
    %114 = vector.load %arg8[%c0_58, %c0_59, %c0_60] : memref<8x1x32xf32, #tpu.memory_space<vmem>>, vector<8x1x32xf32>
    tpu.vector_store %arg8[%c0_58, %c0_59, %c0_60], %113 {strides = array<i32>} : memref<8x1x32xf32, #tpu.memory_space<vmem>>, vector<8x1x32xf32>,
    return
  }
  func.func @transform_0(%arg0: i32, %arg1: i32) -> (i32, i32, i32) {
    %c0_i32 = arith.constant 0 : i32
    %c0_i32_0 = arith.constant 0 : i32
    return %arg0, %arg1, %c0_i32 : i32, i32, i32
  }
  func.func @transform_1(%arg0: i32, %arg1: i32) -> (i32, i32, i32) {
    %c0_i32 = arith.constant 0 : i32
    %c0_i32_0 = arith.constant 0 : i32
    return %arg0, %arg1, %c0_i32 : i32, i32, i32
  }
  func.func @transform_2(%arg0: i32, %arg1: i32) -> (i32, i32, i32) {
    %c0_i32 = arith.constant 0 : i32
    %c0_i32_0 = arith.constant 0 : i32
    return %arg0, %arg1, %c0_i32 : i32, i32, i32
  }
  func.func @transform_3(%arg0: i32, %arg1: i32) -> (i32, i32, i32) {
    %c0_i32 = arith.constant 0 : i32
    %c0_i32_0 = arith.constant 0 : i32
    %c0_i32_1 = arith.constant 0 : i32
    return %arg0, %c0_i32, %c0_i32_0 : i32, i32, i32
  }
  func.func @transform_4(%arg0: i32, %arg1: i32) -> (i32, i32) {
    %c0_i32 = arith.constant 0 : i32
    %c0_i32_0 = arith.constant 0 : i32
    %c0_i32_1 = arith.constant 0 : i32
    return %c0_i32, %c0_i32_0 : i32, i32
  }
  func.func @transform_5(%arg0: i32, %arg1: i32) -> (i32, i32) {
    %c0_i32 = arith.constant 0 : i32
    %c0_i32_0 = arith.constant 0 : i32
    %c0_i32_1 = arith.constant 0 : i32
    return %c0_i32, %c0_i32_0 : i32, i32
  }
  func.func @transform_6(%arg0: i32, %arg1: i32) -> (i32, i32, i32) {
    %c0_i32 = arith.constant 0 : i32
    %c0_i32_0 = arith.constant 0 : i32
    return %arg0, %arg1, %c0_i32 : i32, i32, i32
  }
}

</mosaic_0001>

<llo_original>
// kernel: kgcn_forward.3
$region0: #{kgcn_forward.3}
  #allocation0 [shape = 'u32[]', space=smem, size = 0x4, offset = 0x4, fixed_abs, tag = 'smem constant byte address 0x4 - core index']
  #allocation1 [shape = 'u32[144,128]{1,0:T(1,128)}', space=vmem, size = 0x12000, scoped, tag = 'internal scratch']
  %s0 = inlined_call_operand.vmem [shape: f32[8,1,32], index: 0, kind: input, shape index: {}]
  %s1 = inlined_call_operand.vmem [shape: f32[8,1,256], index: 1, kind: input, shape index: {}]
  %s2 = inlined_call_operand.vmem [shape: f32[8,1,256], index: 2, kind: input, shape index: {}]
  %s3 = inlined_call_operand.vmem [shape: f32[8,1,32], index: 3, kind: input, shape index: {}]
  %s4 = inlined_call_operand.vmem [shape: f32[32,32], index: 4, kind: input, shape index: {}]
  %s5 = inlined_call_operand.vmem [shape: f32[1,32], index: 5, kind: input, shape index: {}]
  %s6 = inlined_call_operand.vmem [shape: f32[8,1,32], index: 6, kind: output, shape index: {}]
  %s7 = sld [smem:[#allocation0]]
  $region34: #{kgcn_forward.3} parent=0
    _
  %s9 = ssub.s32 1, %s7
  %s10 = scalar_select 0, %s9, %s7
  // Predicated region
  $region2: #{kgcn_forward.3} parent=0 // pred_check
    _
  $region3: #{kgcn_forward.3} parent=0 // pred_check_branch
    %12 = sbr.rel (0) target = $region5
  $region4: #{kgcn_forward.3} parent=0 // pred_region
    _
  $region5: #{kgcn_forward.3} parent=0 // pred_fallthru
    _
  // Predicated region
  $region6: #{kgcn_forward.3} parent=0 // pred_check
    _
  $region7: #{kgcn_forward.3} parent=0 // pred_check_branch
    %14 = sbr.rel (0) target = $region9
  $region8: #{kgcn_forward.3} parent=0 // pred_region
    _
  $region9: #{kgcn_forward.3} parent=0 // pred_fallthru
    _
  // Predicated region
  $region10: #{kgcn_forward.3} parent=0 // pred_check
    _
  $region11: #{kgcn_forward.3} parent=0 // pred_check_branch
    %16 = sbr.rel (0) target = $region13
  $region12: #{kgcn_forward.3} parent=0 // pred_region
    _
  $region13: #{kgcn_forward.3} parent=0 // pred_fallthru
    _
  // Predicated region
  $region14: #{kgcn_forward.3} parent=0 // pred_check
    _
  $region15: #{kgcn_forward.3} parent=0 // pred_check_branch
    %18 = sbr.rel (0) target = $region17
  $region16: #{kgcn_forward.3} parent=0 // pred_region
    _
  $region17: #{kgcn_forward.3} parent=0 // pred_fallthru
    _
  // Predicated region
  $region18: #{kgcn_forward.3} parent=0 // pred_check
    _
  $region19: #{kgcn_forward.3} parent=0 // pred_check_branch
    %20 = sbr.rel (0) target = $region21
  $region20: #{kgcn_forward.3} parent=0 // pred_region
    _
  $region21: #{kgcn_forward.3} parent=0 // pred_fallthru
    _
  // Predicated region
  $region22: #{kgcn_forward.3} parent=0 // pred_check
    _
  $region23: #{kgcn_forward.3} parent=0 // pred_check_branch
    %22 = sbr.rel (0) target = $region25
  $region24: #{kgcn_forward.3} parent=0 // pred_region
    _
  $region25: #{kgcn_forward.3} parent=0 // pred_fallthru
    _
  %v23 = vld [vmem:[%s3] sm:$0x1]
  %v24 = vld [vmem:[%s3 + $0x1] sm:$0x1]
  %v25 = vld [vmem:[%s3 + $0x2] sm:$0x1]
  %v26 = vld [vmem:[%s3 + $0x3] sm:$0x1]
  %v27 = vld [vmem:[%s3 + $0x4] sm:$0x1]
  %v28 = vld [vmem:[%s3 + $0x5] sm:$0x1]
  %v29 = vld [vmem:[%s3 + $0x6] sm:$0x1]
  %v30 = vld [vmem:[%s3 + $0x7] sm:$0x1]
  %v31 = vld [vmem:[%s2] sm:$0x1]
  %v32 = vld [vmem:[%s2 + $0x2] sm:$0x1]
  %v33 = vld [vmem:[%s2 + $0x4] sm:$0x1]
  %v34 = vld [vmem:[%s2 + $0x6] sm:$0x1]
  %v35 = vld [vmem:[%s2 + $0x8] sm:$0x1]
  %v36 = vld [vmem:[%s2 + $0xa] sm:$0x1]
  %v37 = vld [vmem:[%s2 + $0xc] sm:$0x1]
  %v38 = vld [vmem:[%s2 + $0xe] sm:$0x1]
  %v39 = vmul.f32 %v23, %v31
  %v40 = vmul.f32 %v24, %v32
  %v41 = vmul.f32 %v25, %v33
  %v42 = vmul.f32 %v26, %v34
  %v43 = vmul.f32 %v27, %v35
  %v44 = vmul.f32 %v28, %v36
  %v45 = vmul.f32 %v29, %v37
  %v46 = vmul.f32 %v30, %v38
  %vm47 = vcmask 253952
  %v48 = vsel %vm47, %v39, 0.0
  %49 = vadd.xlane.f32.xlu0 %v48
  %v50 = vpop.xlane.xlu0 %49
  %v51 = vsel %vm47, %v40, 0.0
  %52 = vadd.xlane.f32.xlu0 %v51
  %v53 = vpop.xlane.xlu0 %52
  %v54 = vsel %vm47, %v41, 0.0
  %55 = vadd.xlane.f32.xlu0 %v54
  %v56 = vpop.xlane.xlu0 %55
  %v57 = vsel %vm47, %v42, 0.0
  %58 = vadd.xlane.f32.xlu0 %v57
  %v59 = vpop.xlane.xlu0 %58
  %v60 = vsel %vm47, %v43, 0.0
  %61 = vadd.xlane.f32.xlu0 %v60
  %v62 = vpop.xlane.xlu0 %61
  %v63 = vsel %vm47, %v44, 0.0
  %64 = vadd.xlane.f32.xlu0 %v63
  %v65 = vpop.xlane.xlu0 %64
  %v66 = vsel %vm47, %v45, 0.0
  %67 = vadd.xlane.f32.xlu0 %v66
  %v68 = vpop.xlane.xlu0 %67
  %v69 = vsel %vm47, %v46, 0.0
  %70 = vadd.xlane.f32.xlu0 %v69
  %v71 = vpop.xlane.xlu0 %70
  %80 = vrot.lane.b32.xlu0 %v31, 96
  %v81 = vpop.permute.xlu0 %80
  %82 = vrot.lane.b32.xlu0 %v32, 96
  %v83 = vpop.permute.xlu0 %82
  %84 = vrot.lane.b32.xlu0 %v33, 96
  %v85 = vpop.permute.xlu0 %84
  %86 = vrot.lane.b32.xlu0 %v34, 96
  %v87 = vpop.permute.xlu0 %86
  %88 = vrot.lane.b32.xlu0 %v35, 96
  %v89 = vpop.permute.xlu0 %88
  %90 = vrot.lane.b32.xlu0 %v36, 96
  %v91 = vpop.permute.xlu0 %90
  %92 = vrot.lane.b32.xlu0 %v37, 96
  %v93 = vpop.permute.xlu0 %92
  %94 = vrot.lane.b32.xlu0 %v38, 96
  %v95 = vpop.permute.xlu0 %94
  %v104 = vmul.f32 %v23, %v81
  %v105 = vmul.f32 %v24, %v83
  %v106 = vmul.f32 %v25, %v85
  %v107 = vmul.f32 %v26, %v87
  %v108 = vmul.f32 %v27, %v89
  %v109 = vmul.f32 %v28, %v91
  %v110 = vmul.f32 %v29, %v93
  %v111 = vmul.f32 %v30, %v95
  %v112 = vsel %vm47, %v104, 0.0
  %113 = vadd.xlane.f32.xlu0 %v112
  %v114 = vpop.xlane.xlu0 %113
  %v115 = vsel %vm47, %v105, 0.0
  %116 = vadd.xlane.f32.xlu0 %v115
  %v117 = vpop.xlane.xlu0 %116
  %v118 = vsel %vm47, %v106, 0.0
  %119 = vadd.xlane.f32.xlu0 %v118
  %v120 = vpop.xlane.xlu0 %119
  %v121 = vsel %vm47, %v107, 0.0
  %122 = vadd.xlane.f32.xlu0 %v121
  %v123 = vpop.xlane.xlu0 %122
  %v124 = vsel %vm47, %v108, 0.0
  %125 = vadd.xlane.f32.xlu0 %v124
  %v126 = vpop.xlane.xlu0 %125
  %v127 = vsel %vm47, %v109, 0.0
  %128 = vadd.xlane.f32.xlu0 %v127
  %v129 = vpop.xlane.xlu0 %128
  %v130 = vsel %vm47, %v110, 0.0
  %131 = vadd.xlane.f32.xlu0 %v130
  %v132 = vpop.xlane.xlu0 %131
  %v133 = vsel %vm47, %v111, 0.0
  %134 = vadd.xlane.f32.xlu0 %v133
  %v135 = vpop.xlane.xlu0 %134
  %136 = vrot.lane.b32.xlu0 %v31, 64
  %v137 = vpop.permute.xlu0 %136
  %138 = vrot.lane.b32.xlu0 %v32, 64
  %v139 = vpop.permute.xlu0 %138
  %140 = vrot.lane.b32.xlu0 %v33, 64
  %v141 = vpop.permute.xlu0 %140
  %142 = vrot.lane.b32.xlu0 %v34, 64
  %v143 = vpop.permute.xlu0 %142
  %144 = vrot.lane.b32.xlu0 %v35, 64
  %v145 = vpop.permute.xlu0 %144
  %146 = vrot.lane.b32.xlu0 %v36, 64
  %v147 = vpop.permute.xlu0 %146
  %148 = vrot.lane.b32.xlu0 %v37, 64
  %v149 = vpop.permute.xlu0 %148
  %150 = vrot.lane.b32.xlu0 %v38, 64
  %v151 = vpop.permute.xlu0 %150
  %v160 = vmul.f32 %v23, %v137
  %v161 = vmul.f32 %v24, %v139
  %v162 = vmul.f32 %v25, %v141
  %v163 = vmul.f32 %v26, %v143
  %v164 = vmul.f32 %v27, %v145
  %v165 = vmul.f32 %v28, %v147
  %v166 = vmul.f32 %v29, %v149
  %v167 = vmul.f32 %v30, %v151
  %v168 = vsel %vm47, %v160, 0.0
  %169 = vadd.xlane.f32.xlu0 %v168
  %v170 = vpop.xlane.xlu0 %169
  %v171 = vsel %vm47, %v161, 0.0
  %172 = vadd.xlane.f32.xlu0 %v171
  %v173 = vpop.xlane.xlu0 %172
  %v174 = vsel %vm47, %v162, 0.0
  %175 = vadd.xlane.f32.xlu0 %v174
  %v176 = vpop.xlane.xlu0 %175
  %v177 = vsel %vm47, %v163, 0.0
  %178 = vadd.xlane.f32.xlu0 %v177
  %v179 = vpop.xlane.xlu0 %178
  %v180 = vsel %vm47, %v164, 0.0
  %181 = vadd.xlane.f32.xlu0 %v180
  %v182 = vpop.xlane.xlu0 %181
  %v183 = vsel %vm47, %v165, 0.0
  %184 = vadd.xlane.f32.xlu0 %v183
  %v185 = vpop.xlane.xlu0 %184
  %v186 = vsel %vm47, %v166, 0.0
  %187 = vadd.xlane.f32.xlu0 %v186
  %v188 = vpop.xlane.xlu0 %187
  %v189 = vsel %vm47, %v167, 0.0
  %190 = vadd.xlane.f32.xlu0 %v189
  %v191 = vpop.xlane.xlu0 %190
  %192 = vrot.lane.b32.xlu0 %v31, 32
  %v193 = vpop.permute.xlu0 %192
  %194 = vrot.lane.b32.xlu0 %v32, 32
  %v195 = vpop.permute.xlu0 %194
  %196 = vrot.lane.b32.xlu0 %v33, 32
  %v197 = vpop.permute.xlu0 %196
  %198 = vrot.lane.b32.xlu0 %v34, 32
  %v199 = vpop.permute.xlu0 %198
  %200 = vrot.lane.b32.xlu0 %v35, 32
  %v201 = vpop.permute.xlu0 %200
  %202 = vrot.lane.b32.xlu0 %v36, 32
  %v203 = vpop.permute.xlu0 %202
  %204 = vrot.lane.b32.xlu0 %v37, 32
  %v205 = vpop.permute.xlu0 %204
  %206 = vrot.lane.b32.xlu0 %v38, 32
  %v207 = vpop.permute.xlu0 %206
  %v216 = vmul.f32 %v23, %v193
  %v217 = vmul.f32 %v24, %v195
  %v218 = vmul.f32 %v25, %v197
  %v219 = vmul.f32 %v26, %v199
  %v220 = vmul.f32 %v27, %v201
  %v221 = vmul.f32 %v28, %v203
  %v222 = vmul.f32 %v29, %v205
  %v223 = vmul.f32 %v30, %v207
  %v224 = vsel %vm47, %v216, 0.0
  %225 = vadd.xlane.f32.xlu0 %v224
  %v226 = vpop.xlane.xlu0 %225
  %v227 = vsel %vm47, %v217, 0.0
  %228 = vadd.xlane.f32.xlu0 %v227
  %v229 = vpop.xlane.xlu0 %228
  %v230 = vsel %vm47, %v218, 0.0
  %231 = vadd.xlane.f32.xlu0 %v230
  %v232 = vpop.xlane.xlu0 %231
  %v233 = vsel %vm47, %v219, 0.0
  %234 = vadd.xlane.f32.xlu0 %v233
  %v235 = vpop.xlane.xlu0 %234
  %v236 = vsel %vm47, %v220, 0.0
  %237 = vadd.xlane.f32.xlu0 %v236
  %v238 = vpop.xlane.xlu0 %237
  %v239 = vsel %vm47, %v221, 0.0
  %240 = vadd.xlane.f32.xlu0 %v239
  %v241 = vpop.xlane.xlu0 %240
  %v242 = vsel %vm47, %v222, 0.0
  %243 = vadd.xlane.f32.xlu0 %v242
  %v244 = vpop.xlane.xlu0 %243
  %v245 = vsel %vm47, %v223, 0.0
  %246 = vadd.xlane.f32.xlu0 %v245
  %v247 = vpop.xlane.xlu0 %246
  %v248 = vld [vmem:[%s2 + $0x1] sm:$0x1]
  %v249 = vld [vmem:[%s2 + $0x3] sm:$0x1]
  %v250 = vld [vmem:[%s2 + $0x5] sm:$0x1]
  %v251 = vld [vmem:[%s2 + $0x7] sm:$0x1]
  %v252 = vld [vmem:[%s2 + $0x9] sm:$0x1]
  %v253 = vld [vmem:[%s2 + $0xb] sm:$0x1]
  %v254 = vld [vmem:[%s2 + $0xd] sm:$0x1]
  %v255 = vld [vmem:[%s2 + $0xf] sm:$0x1]
  %v256 = vmul.f32 %v23, %v248
  %v257 = vmul.f32 %v24, %v249
  %v258 = vmul.f32 %v25, %v250
  %v259 = vmul.f32 %v26, %v251
  %v260 = vmul.f32 %v27, %v252
  %v261 = vmul.f32 %v28, %v253
  %v262 = vmul.f32 %v29, %v254
  %v263 = vmul.f32 %v30, %v255
  %v264 = vsel %vm47, %v256, 0.0
  %265 = vadd.xlane.f32.xlu0 %v264
  %v266 = vpop.xlane.xlu0 %265
  %v267 = vsel %vm47, %v257, 0.0
  %268 = vadd.xlane.f32.xlu0 %v267
  %v269 = vpop.xlane.xlu0 %268
  %v270 = vsel %vm47, %v258, 0.0
  %271 = vadd.xlane.f32.xlu0 %v270
  %v272 = vpop.xlane.xlu0 %271
  %v273 = vsel %vm47, %v259, 0.0
  %274 = vadd.xlane.f32.xlu0 %v273
  %v275 = vpop.xlane.xlu0 %274
  %v276 = vsel %vm47, %v260, 0.0
  %277 = vadd.xlane.f32.xlu0 %v276
  %v278 = vpop.xlane.xlu0 %277
  %v279 = vsel %vm47, %v261, 0.0
  %280 = vadd.xlane.f32.xlu0 %v279
  %v281 = vpop.xlane.xlu0 %280
  %v282 = vsel %vm47, %v262, 0.0
  %283 = vadd.xlane.f32.xlu0 %v282
  %v284 = vpop.xlane.xlu0 %283
  %v285 = vsel %vm47, %v263, 0.0
  %286 = vadd.xlane.f32.xlu0 %v285
  %v287 = vpop.xlane.xlu0 %286
  %296 = vrot.lane.b32.xlu0 %v248, 96
  %v297 = vpop.permute.xlu0 %296
  %298 = vrot.lane.b32.xlu0 %v249, 96
  %v299 = vpop.permute.xlu0 %298
  %300 = vrot.lane.b32.xlu0 %v250, 96
  %v301 = vpop.permute.xlu0 %300
  %302 = vrot.lane.b32.xlu0 %v251, 96
  %v303 = vpop.permute.xlu0 %302
  %304 = vrot.lane.b32.xlu0 %v252, 96
  %v305 = vpop.permute.xlu0 %304
  %306 = vrot.lane.b32.xlu0 %v253, 96
  %v307 = vpop.permute.xlu0 %306
  %308 = vrot.lane.b32.xlu0 %v254, 96
  %v309 = vpop.permute.xlu0 %308
  %310 = vrot.lane.b32.xlu0 %v255, 96
  %v311 = vpop.permute.xlu0 %310
  %v320 = vmul.f32 %v23, %v297
  %v321 = vmul.f32 %v24, %v299
  %v322 = vmul.f32 %v25, %v301
  %v323 = vmul.f32 %v26, %v303
  %v324 = vmul.f32 %v27, %v305
  %v325 = vmul.f32 %v28, %v307
  %v326 = vmul.f32 %v29, %v309
  %v327 = vmul.f32 %v30, %v311
  %v328 = vsel %vm47, %v320, 0.0
  %329 = vadd.xlane.f32.xlu0 %v328
  %v330 = vpop.xlane.xlu0 %329
  %v331 = vsel %vm47, %v321, 0.0
  %332 = vadd.xlane.f32.xlu0 %v331
  %v333 = vpop.xlane.xlu0 %332
  %v334 = vsel %vm47, %v322, 0.0
  %335 = vadd.xlane.f32.xlu0 %v334
  %v336 = vpop.xlane.xlu0 %335
  %v337 = vsel %vm47, %v323, 0.0
  %338 = vadd.xlane.f32.xlu0 %v337
  %v339 = vpop.xlane.xlu0 %338
  %v340 = vsel %vm47, %v324, 0.0
  %341 = vadd.xlane.f32.xlu0 %v340
  %v342 = vpop.xlane.xlu0 %341
  %v343 = vsel %vm47, %v325, 0.0
  %344 = vadd.xlane.f32.xlu0 %v343
  %v345 = vpop.xlane.xlu0 %344
  %v346 = vsel %vm47, %v326, 0.0
  %347 = vadd.xlane.f32.xlu0 %v346
  %v348 = vpop.xlane.xlu0 %347
  %v349 = vsel %vm47, %v327, 0.0
  %350 = vadd.xlane.f32.xlu0 %v349
  %v351 = vpop.xlane.xlu0 %350
  %352 = vrot.lane.b32.xlu0 %v248, 64
  %v353 = vpop.permute.xlu0 %352
  %354 = vrot.lane.b32.xlu0 %v249, 64
  %v355 = vpop.permute.xlu0 %354
  %356 = vrot.lane.b32.xlu0 %v250, 64
  %v357 = vpop.permute.xlu0 %356
  %358 = vrot.lane.b32.xlu0 %v251, 64
  %v359 = vpop.permute.xlu0 %358
  %360 = vrot.lane.b32.xlu0 %v252, 64
  %v361 = vpop.permute.xlu0 %360
  %362 = vrot.lane.b32.xlu0 %v253, 64
  %v363 = vpop.permute.xlu0 %362
  %364 = vrot.lane.b32.xlu0 %v254, 64
  %v365 = vpop.permute.xlu0 %364
  %366 = vrot.lane.b32.xlu0 %v255, 64
  %v367 = vpop.permute.xlu0 %366
  %v376 = vmul.f32 %v23, %v353
  %v377 = vmul.f32 %v24, %v355
  %v378 = vmul.f32 %v25, %v357
  %v379 = vmul.f32 %v26, %v359
  %v380 = vmul.f32 %v27, %v361
  %v381 = vmul.f32 %v28, %v363
  %v382 = vmul.f32 %v29, %v365
  %v383 = vmul.f32 %v30, %v367
  %v384 = vsel %vm47, %v376, 0.0
  %385 = vadd.xlane.f32.xlu0 %v384
  %v386 = vpop.xlane.xlu0 %385
  %v387 = vsel %vm47, %v377, 0.0
  %388 = vadd.xlane.f32.xlu0 %v387
  %v389 = vpop.xlane.xlu0 %388
  %v390 = vsel %vm47, %v378, 0.0
  %391 = vadd.xlane.f32.xlu0 %v390
  %v392 = vpop.xlane.xlu0 %391
  %v393 = vsel %vm47, %v379, 0.0
  %394 = vadd.xlane.f32.xlu0 %v393
  %v395 = vpop.xlane.xlu0 %394
  %v396 = vsel %vm47, %v380, 0.0
  %397 = vadd.xlane.f32.xlu0 %v396
  %v398 = vpop.xlane.xlu0 %397
  %v399 = vsel %vm47, %v381, 0.0
  %400 = vadd.xlane.f32.xlu0 %v399
  %v401 = vpop.xlane.xlu0 %400
  %v402 = vsel %vm47, %v382, 0.0
  %403 = vadd.xlane.f32.xlu0 %v402
  %v404 = vpop.xlane.xlu0 %403
  %v405 = vsel %vm47, %v383, 0.0
  %406 = vadd.xlane.f32.xlu0 %v405
  %v407 = vpop.xlane.xlu0 %406
  %408 = vrot.lane.b32.xlu0 %v248, 32
  %v409 = vpop.permute.xlu0 %408
  %410 = vrot.lane.b32.xlu0 %v249, 32
  %v411 = vpop.permute.xlu0 %410
  %412 = vrot.lane.b32.xlu0 %v250, 32
  %v413 = vpop.permute.xlu0 %412
  %414 = vrot.lane.b32.xlu0 %v251, 32
  %v415 = vpop.permute.xlu0 %414
  %416 = vrot.lane.b32.xlu0 %v252, 32
  %v417 = vpop.permute.xlu0 %416
  %418 = vrot.lane.b32.xlu0 %v253, 32
  %v419 = vpop.permute.xlu0 %418
  %420 = vrot.lane.b32.xlu0 %v254, 32
  %v421 = vpop.permute.xlu0 %420
  %422 = vrot.lane.b32.xlu0 %v255, 32
  %v423 = vpop.permute.xlu0 %422
  %v432 = vmul.f32 %v23, %v409
  %v433 = vmul.f32 %v24, %v411
  %v434 = vmul.f32 %v25, %v413
  %v435 = vmul.f32 %v26, %v415
  %v436 = vmul.f32 %v27, %v417
  %v437 = vmul.f32 %v28, %v419
  %v438 = vmul.f32 %v29, %v421
  %v439 = vmul.f32 %v30, %v423
  %v440 = vsel %vm47, %v432, 0.0
  %441 = vadd.xlane.f32.xlu0 %v440
  %v442 = vpop.xlane.xlu0 %441
  %v443 = vsel %vm47, %v433, 0.0
  %444 = vadd.xlane.f32.xlu0 %v443
  %v445 = vpop.xlane.xlu0 %444
  %v446 = vsel %vm47, %v434, 0.0
  %447 = vadd.xlane.f32.xlu0 %v446
  %v448 = vpop.xlane.xlu0 %447
  %v449 = vsel %vm47, %v435, 0.0
  %450 = vadd.xlane.f32.xlu0 %v449
  %v451 = vpop.xlane.xlu0 %450
  %v452 = vsel %vm47, %v436, 0.0
  %453 = vadd.xlane.f32.xlu0 %v452
  %v454 = vpop.xlane.xlu0 %453
  %v455 = vsel %vm47, %v437, 0.0
  %456 = vadd.xlane.f32.xlu0 %v455
  %v457 = vpop.xlane.xlu0 %456
  %v458 = vsel %vm47, %v438, 0.0
  %459 = vadd.xlane.f32.xlu0 %v458
  %v460 = vpop.xlane.xlu0 %459
  %v461 = vsel %vm47, %v439, 0.0
  %462 = vadd.xlane.f32.xlu0 %v461
  %v463 = vpop.xlane.xlu0 %462
  %v464 = vmax.f32 %v50, %v114
  %v465 = vmax.f32 %v53, %v117
  %v466 = vmax.f32 %v56, %v120
  %v467 = vmax.f32 %v59, %v123
  %v468 = vmax.f32 %v62, %v126
  %v469 = vmax.f32 %v65, %v129
  %v470 = vmax.f32 %v68, %v132
  %v471 = vmax.f32 %v71, %v135
  %v472 = vmax.f32 %v464, %v170
  %v473 = vmax.f32 %v465, %v173
  %v474 = vmax.f32 %v466, %v176
  %v475 = vmax.f32 %v467, %v179
  %v476 = vmax.f32 %v468, %v182
  %v477 = vmax.f32 %v469, %v185
  %v478 = vmax.f32 %v470, %v188
  %v479 = vmax.f32 %v471, %v191
  %v480 = vmax.f32 %v472, %v226
  %v481 = vmax.f32 %v473, %v229
  %v482 = vmax.f32 %v474, %v232
  %v483 = vmax.f32 %v475, %v235
  %v484 = vmax.f32 %v476, %v238
  %v485 = vmax.f32 %v477, %v241
  %v486 = vmax.f32 %v478, %v244
  %v487 = vmax.f32 %v479, %v247
  %v488 = vmax.f32 %v480, %v266
  %v489 = vmax.f32 %v481, %v269
  %v490 = vmax.f32 %v482, %v272
  %v491 = vmax.f32 %v483, %v275
  %v492 = vmax.f32 %v484, %v278
  %v493 = vmax.f32 %v485, %v281
  %v494 = vmax.f32 %v486, %v284
  %v495 = vmax.f32 %v487, %v287
  %v496 = vmax.f32 %v488, %v330
  %v497 = vmax.f32 %v489, %v333
  %v498 = vmax.f32 %v490, %v336
  %v499 = vmax.f32 %v491, %v339
  %v500 = vmax.f32 %v492, %v342
  %v501 = vmax.f32 %v493, %v345
  %v502 = vmax.f32 %v494, %v348
  %v503 = vmax.f32 %v495, %v351
  %v504 = vmax.f32 %v496, %v386
  %v505 = vmax.f32 %v497, %v389
  %v506 = vmax.f32 %v498, %v392
  %v507 = vmax.f32 %v499, %v395
  %v508 = vmax.f32 %v500, %v398
  %v509 = vmax.f32 %v501, %v401
  %v510 = vmax.f32 %v502, %v404
  %v511 = vmax.f32 %v503, %v407
  %v512 = vmax.f32 %v504, %v442
  %v513 = vmax.f32 %v505, %v445
  %v514 = vmax.f32 %v506, %v448
  %v515 = vmax.f32 %v507, %v451
  %v516 = vmax.f32 %v508, %v454
  %v517 = vmax.f32 %v509, %v457
  %v518 = vmax.f32 %v510, %v460
  %v519 = vmax.f32 %v511, %v463
  %v520 = vsub.f32 %v50, %v512
  %v521 = vsub.f32 %v53, %v513
  %v522 = vsub.f32 %v56, %v514
  %v523 = vsub.f32 %v59, %v515
  %v524 = vsub.f32 %v62, %v516
  %v525 = vsub.f32 %v65, %v517
  %v526 = vsub.f32 %v68, %v518
  %v527 = vsub.f32 %v71, %v519
  %v528 = vmul.f32 %v520, 1.442695
  %v529 = vpow.pop %v528
  %v530 = vmul.f32 %v521, 1.442695
  %v531 = vpow.pop %v530
  %v532 = vmul.f32 %v522, 1.442695
  %v533 = vpow.pop %v532
  %v534 = vmul.f32 %v523, 1.442695
  %v535 = vpow.pop %v534
  %v536 = vmul.f32 %v524, 1.442695
  %v537 = vpow.pop %v536
  %v538 = vmul.f32 %v525, 1.442695
  %v539 = vpow.pop %v538
  %v540 = vmul.f32 %v526, 1.442695
  %v541 = vpow.pop %v540
  %v542 = vmul.f32 %v527, 1.442695
  %v543 = vpow.pop %v542
  %v544 = vsub.f32 %v114, %v512
  %v545 = vsub.f32 %v117, %v513
  %v546 = vsub.f32 %v120, %v514
  %v547 = vsub.f32 %v123, %v515
  %v548 = vsub.f32 %v126, %v516
  %v549 = vsub.f32 %v129, %v517
  %v550 = vsub.f32 %v132, %v518
  %v551 = vsub.f32 %v135, %v519
  %v552 = vmul.f32 %v544, 1.442695
  %v553 = vpow.pop %v552
  %v554 = vmul.f32 %v545, 1.442695
  %v555 = vpow.pop %v554
  %v556 = vmul.f32 %v546, 1.442695
  %v557 = vpow.pop %v556
  %v558 = vmul.f32 %v547, 1.442695
  %v559 = vpow.pop %v558
  %v560 = vmul.f32 %v548, 1.442695
  %v561 = vpow.pop %v560
  %v562 = vmul.f32 %v549, 1.442695
  %v563 = vpow.pop %v562
  %v564 = vmul.f32 %v550, 1.442695
  %v565 = vpow.pop %v564
  %v566 = vmul.f32 %v551, 1.442695
  %v567 = vpow.pop %v566
  %v568 = vsub.f32 %v170, %v512
  %v569 = vsub.f32 %v173, %v513
  %v570 = vsub.f32 %v176, %v514
  %v571 = vsub.f32 %v179, %v515
  %v572 = vsub.f32 %v182, %v516
  %v573 = vsub.f32 %v185, %v517
  %v574 = vsub.f32 %v188, %v518
  %v575 = vsub.f32 %v191, %v519
  %v576 = vmul.f32 %v568, 1.442695
  %v577 = vpow.pop %v576
  %v578 = vmul.f32 %v569, 1.442695
  %v579 = vpow.pop %v578
  %v580 = vmul.f32 %v570, 1.442695
  %v581 = vpow.pop %v580
  %v582 = vmul.f32 %v571, 1.442695
  %v583 = vpow.pop %v582
  %v584 = vmul.f32 %v572, 1.442695
  %v585 = vpow.pop %v584
  %v586 = vmul.f32 %v573, 1.442695
  %v587 = vpow.pop %v586
  %v588 = vmul.f32 %v574, 1.442695
  %v589 = vpow.pop %v588
  %v590 = vmul.f32 %v575, 1.442695
  %v591 = vpow.pop %v590
  %v592 = vsub.f32 %v226, %v512
  %v593 = vsub.f32 %v229, %v513
  %v594 = vsub.f32 %v232, %v514
  %v595 = vsub.f32 %v235, %v515
  %v596 = vsub.f32 %v238, %v516
  %v597 = vsub.f32 %v241, %v517
  %v598 = vsub.f32 %v244, %v518
  %v599 = vsub.f32 %v247, %v519
  %v600 = vmul.f32 %v592, 1.442695
  %v601 = vpow.pop %v600
  %v602 = vmul.f32 %v593, 1.442695
  %v603 = vpow.pop %v602
  %v604 = vmul.f32 %v594, 1.442695
  %v605 = vpow.pop %v604
  %v606 = vmul.f32 %v595, 1.442695
  %v607 = vpow.pop %v606
  %v608 = vmul.f32 %v596, 1.442695
  %v609 = vpow.pop %v608
  %v610 = vmul.f32 %v597, 1.442695
  %v611 = vpow.pop %v610
  %v612 = vmul.f32 %v598, 1.442695
  %v613 = vpow.pop %v612
  %v614 = vmul.f32 %v599, 1.442695
  %v615 = vpow.pop %v614
  %v616 = vsub.f32 %v266, %v512
  %v617 = vsub.f32 %v269, %v513
  %v618 = vsub.f32 %v272, %v514
  %v619 = vsub.f32 %v275, %v515
  %v620 = vsub.f32 %v278, %v516
  %v621 = vsub.f32 %v281, %v517
  %v622 = vsub.f32 %v284, %v518
  %v623 = vsub.f32 %v287, %v519
  %v624 = vmul.f32 %v616, 1.442695
  %v625 = vpow.pop %v624
  %v626 = vmul.f32 %v617, 1.442695
  %v627 = vpow.pop %v626
  %v628 = vmul.f32 %v618, 1.442695
  %v629 = vpow.pop %v628
  %v630 = vmul.f32 %v619, 1.442695
  %v631 = vpow.pop %v630
  %v632 = vmul.f32 %v620, 1.442695
  %v633 = vpow.pop %v632
  %v634 = vmul.f32 %v621, 1.442695
  %v635 = vpow.pop %v634
  %v636 = vmul.f32 %v622, 1.442695
  %v637 = vpow.pop %v636
  %v638 = vmul.f32 %v623, 1.442695
  %v639 = vpow.pop %v638
  %v640 = vsub.f32 %v330, %v512
  %v641 = vsub.f32 %v333, %v513
  %v642 = vsub.f32 %v336, %v514
  %v643 = vsub.f32 %v339, %v515
  %v644 = vsub.f32 %v342, %v516
  %v645 = vsub.f32 %v345, %v517
  %v646 = vsub.f32 %v348, %v518
  %v647 = vsub.f32 %v351, %v519
  %v648 = vmul.f32 %v640, 1.442695
  %v649 = vpow.pop %v648
  %v650 = vmul.f32 %v641, 1.442695
  %v651 = vpow.pop %v650
  %v652 = vmul.f32 %v642, 1.442695
  %v653 = vpow.pop %v652
  %v654 = vmul.f32 %v643, 1.442695
  %v655 = vpow.pop %v654
  %v656 = vmul.f32 %v644, 1.442695
  %v657 = vpow.pop %v656
  %v658 = vmul.f32 %v645, 1.442695
  %v659 = vpow.pop %v658
  %v660 = vmul.f32 %v646, 1.442695
  %v661 = vpow.pop %v660
  %v662 = vmul.f32 %v647, 1.442695
  %v663 = vpow.pop %v662
  %v664 = vsub.f32 %v386, %v512
  %v665 = vsub.f32 %v389, %v513
  %v666 = vsub.f32 %v392, %v514
  %v667 = vsub.f32 %v395, %v515
  %v668 = vsub.f32 %v398, %v516
  %v669 = vsub.f32 %v401, %v517
  %v670 = vsub.f32 %v404, %v518
  %v671 = vsub.f32 %v407, %v519
  %v672 = vmul.f32 %v664, 1.442695
  %v673 = vpow.pop %v672
  %v674 = vmul.f32 %v665, 1.442695
  %v675 = vpow.pop %v674
  %v676 = vmul.f32 %v666, 1.442695
  %v677 = vpow.pop %v676
  %v678 = vmul.f32 %v667, 1.442695
  %v679 = vpow.pop %v678
  %v680 = vmul.f32 %v668, 1.442695
  %v681 = vpow.pop %v680
  %v682 = vmul.f32 %v669, 1.442695
  %v683 = vpow.pop %v682
  %v684 = vmul.f32 %v670, 1.442695
  %v685 = vpow.pop %v684
  %v686 = vmul.f32 %v671, 1.442695
  %v687 = vpow.pop %v686
  %v688 = vsub.f32 %v442, %v512
  %v689 = vsub.f32 %v445, %v513
  %v690 = vsub.f32 %v448, %v514
  %v691 = vsub.f32 %v451, %v515
  %v692 = vsub.f32 %v454, %v516
  %v693 = vsub.f32 %v457, %v517
  %v694 = vsub.f32 %v460, %v518
  %v695 = vsub.f32 %v463, %v519
  %v696 = vmul.f32 %v688, 1.442695
  %v697 = vpow.pop %v696
  %v698 = vmul.f32 %v689, 1.442695
  %v699 = vpow.pop %v698
  %v700 = vmul.f32 %v690, 1.442695
  %v701 = vpow.pop %v700
  %v702 = vmul.f32 %v691, 1.442695
  %v703 = vpow.pop %v702
  %v704 = vmul.f32 %v692, 1.442695
  %v705 = vpow.pop %v704
  %v706 = vmul.f32 %v693, 1.442695
  %v707 = vpow.pop %v706
  %v708 = vmul.f32 %v694, 1.442695
  %v709 = vpow.pop %v708
  %v710 = vmul.f32 %v695, 1.442695
  %v711 = vpow.pop %v710
  %v712 = vadd.f32 %v529, %v553
  %v713 = vadd.f32 %v531, %v555
  %v714 = vadd.f32 %v533, %v557
  %v715 = vadd.f32 %v535, %v559
  %v716 = vadd.f32 %v537, %v561
  %v717 = vadd.f32 %v539, %v563
  %v718 = vadd.f32 %v541, %v565
  %v719 = vadd.f32 %v543, %v567
  %v720 = vadd.f32 %v712, %v577
  %v721 = vadd.f32 %v713, %v579
  %v722 = vadd.f32 %v714, %v581
  %v723 = vadd.f32 %v715, %v583
  %v724 = vadd.f32 %v716, %v585
  %v725 = vadd.f32 %v717, %v587
  %v726 = vadd.f32 %v718, %v589
  %v727 = vadd.f32 %v719, %v591
  %v728 = vadd.f32 %v720, %v601
  %v729 = vadd.f32 %v721, %v603
  %v730 = vadd.f32 %v722, %v605
  %v731 = vadd.f32 %v723, %v607
  %v732 = vadd.f32 %v724, %v609
  %v733 = vadd.f32 %v725, %v611
  %v734 = vadd.f32 %v726, %v613
  %v735 = vadd.f32 %v727, %v615
  %v736 = vadd.f32 %v728, %v625
  %v737 = vadd.f32 %v729, %v627
  %v738 = vadd.f32 %v730, %v629
  %v739 = vadd.f32 %v731, %v631
  %v740 = vadd.f32 %v732, %v633
  %v741 = vadd.f32 %v733, %v635
  %v742 = vadd.f32 %v734, %v637
  %v743 = vadd.f32 %v735, %v639
  %v744 = vadd.f32 %v736, %v649
  %v745 = vadd.f32 %v737, %v651
  %v746 = vadd.f32 %v738, %v653
  %v747 = vadd.f32 %v739, %v655
  %v748 = vadd.f32 %v740, %v657
  %v749 = vadd.f32 %v741, %v659
  %v750 = vadd.f32 %v742, %v661
  %v751 = vadd.f32 %v743, %v663
  %v752 = vadd.f32 %v744, %v673
  %v753 = vadd.f32 %v745, %v675
  %v754 = vadd.f32 %v746, %v677
  %v755 = vadd.f32 %v747, %v679
  %v756 = vadd.f32 %v748, %v681
  %v757 = vadd.f32 %v749, %v683
  %v758 = vadd.f32 %v750, %v685
  %v759 = vadd.f32 %v751, %v687
  %v760 = vadd.f32 %v752, %v697
  %v761 = vadd.f32 %v753, %v699
  %v762 = vadd.f32 %v754, %v701
  %v763 = vadd.f32 %v755, %v703
  %v764 = vadd.f32 %v756, %v705
  %v765 = vadd.f32 %v757, %v707
  %v766 = vadd.f32 %v758, %v709
  %v767 = vadd.f32 %v759, %v711
  %v768 = vrcp.pop %v760
  %v769 = vrcp.pop %v761
  %v770 = vrcp.pop %v762
  %v771 = vrcp.pop %v763
  %v772 = vrcp.pop %v764
  %v773 = vrcp.pop %v765
  %v774 = vrcp.pop %v766
  %v775 = vrcp.pop %v767
  %v776 = vld [vmem:[%s0] sm:$0x1]
  %v777 = vld [vmem:[%s0 + $0x1] sm:$0x1]
  %v778 = vld [vmem:[%s0 + $0x2] sm:$0x1]
  %v779 = vld [vmem:[%s0 + $0x3] sm:$0x1]
  %v780 = vld [vmem:[%s0 + $0x4] sm:$0x1]
  %v781 = vld [vmem:[%s0 + $0x5] sm:$0x1]
  %v782 = vld [vmem:[%s0 + $0x6] sm:$0x1]
  %v783 = vld [vmem:[%s0 + $0x7] sm:$0x1]
  %v784 = vld [vmem:[%s1] sm:$0x1]
  %v785 = vld [vmem:[%s1 + $0x2] sm:$0x1]
  %v786 = vld [vmem:[%s1 + $0x4] sm:$0x1]
  %v787 = vld [vmem:[%s1 + $0x6] sm:$0x1]
  %v788 = vld [vmem:[%s1 + $0x8] sm:$0x1]
  %v789 = vld [vmem:[%s1 + $0xa] sm:$0x1]
  %v790 = vld [vmem:[%s1 + $0xc] sm:$0x1]
  %v791 = vld [vmem:[%s1 + $0xe] sm:$0x1]
  %v792 = vmul.f32 %v529, %v768
  %v793 = vmul.f32 %v531, %v769
  %v794 = vmul.f32 %v533, %v770
  %v795 = vmul.f32 %v535, %v771
  %v796 = vmul.f32 %v537, %v772
  %v797 = vmul.f32 %v539, %v773
  %v798 = vmul.f32 %v541, %v774
  %v799 = vmul.f32 %v543, %v775
  %v800 = vmul.f32 %v792, %v784
  %v801 = vmul.f32 %v793, %v785
  %v802 = vmul.f32 %v794, %v786
  %v803 = vmul.f32 %v795, %v787
  %v804 = vmul.f32 %v796, %v788
  %v805 = vmul.f32 %v797, %v789
  %v806 = vmul.f32 %v798, %v790
  %v807 = vmul.f32 %v799, %v791
  %v808 = vadd.f32 %v776, %v800
  %v809 = vadd.f32 %v777, %v801
  %v810 = vadd.f32 %v778, %v802
  %v811 = vadd.f32 %v779, %v803
  %v812 = vadd.f32 %v780, %v804
  %v813 = vadd.f32 %v781, %v805
  %v814 = vadd.f32 %v782, %v806
  %v815 = vadd.f32 %v783, %v807
  %v816 = vmul.f32 %v553, %v768
  %v817 = vmul.f32 %v555, %v769
  %v818 = vmul.f32 %v557, %v770
  %v819 = vmul.f32 %v559, %v771
  %v820 = vmul.f32 %v561, %v772
  %v821 = vmul.f32 %v563, %v773
  %v822 = vmul.f32 %v565, %v774
  %v823 = vmul.f32 %v567, %v775
  %v832 = vlaneseq
  %v833 = vshrl.u32 %v832, 7
  %v834 = vsub.s32 0, %v833
  %v835 = vrot.slane %v784, %v834
  %v836 = vlaneseq
  %v837 = vshrl.u32 %v836, 7
  %v838 = vsub.s32 0, %v837
  %v839 = vrot.slane %v785, %v838
  %v840 = vlaneseq
  %v841 = vshrl.u32 %v840, 7
  %v842 = vsub.s32 0, %v841
  %v843 = vrot.slane %v786, %v842
  %v844 = vlaneseq
  %v845 = vshrl.u32 %v844, 7
  %v846 = vsub.s32 0, %v845
  %v847 = vrot.slane %v787, %v846
  %v848 = vlaneseq
  %v849 = vshrl.u32 %v848, 7
  %v850 = vsub.s32 0, %v849
  %v851 = vrot.slane %v788, %v850
  %v852 = vlaneseq
  %v853 = vshrl.u32 %v852, 7
  %v854 = vsub.s32 0, %v853
  %v855 = vrot.slane %v789, %v854
  %v856 = vlaneseq
  %v857 = vshrl.u32 %v856, 7
  %v858 = vsub.s32 0, %v857
  %v859 = vrot.slane %v790, %v858
  %v860 = vlaneseq
  %v861 = vshrl.u32 %v860, 7
  %v862 = vsub.s32 0, %v861
  %v863 = vrot.slane %v791, %v862
  %864 = vrot.lane.b32.xlu0 %v835, 96
  %v865 = vpop.permute.xlu0 %864
  %866 = vrot.lane.b32.xlu0 %v839, 96
  %v867 = vpop.permute.xlu0 %866
  %868 = vrot.lane.b32.xlu0 %v843, 96
  %v869 = vpop.permute.xlu0 %868
  %870 = vrot.lane.b32.xlu0 %v847, 96
  %v871 = vpop.permute.xlu0 %870
  %872 = vrot.lane.b32.xlu0 %v851, 96
  %v873 = vpop.permute.xlu0 %872
  %874 = vrot.lane.b32.xlu0 %v855, 96
  %v875 = vpop.permute.xlu0 %874
  %876 = vrot.lane.b32.xlu0 %v859, 96
  %v877 = vpop.permute.xlu0 %876
  %878 = vrot.lane.b32.xlu0 %v863, 96
  %v879 = vpop.permute.xlu0 %878
  %v888 = vmul.f32 %v816, %v865
  %v889 = vmul.f32 %v817, %v867
  %v890 = vmul.f32 %v818, %v869
  %v891 = vmul.f32 %v819, %v871
  %v892 = vmul.f32 %v820, %v873
  %v893 = vmul.f32 %v821, %v875
  %v894 = vmul.f32 %v822, %v877
  %v895 = vmul.f32 %v823, %v879
  %v896 = vadd.f32 %v808, %v888
  %v897 = vadd.f32 %v809, %v889
  %v898 = vadd.f32 %v810, %v890
  %v899 = vadd.f32 %v811, %v891
  %v900 = vadd.f32 %v812, %v892
  %v901 = vadd.f32 %v813, %v893
  %v902 = vadd.f32 %v814, %v894
  %v903 = vadd.f32 %v815, %v895
  %v904 = vmul.f32 %v577, %v768
  %v905 = vmul.f32 %v579, %v769
  %v906 = vmul.f32 %v581, %v770
  %v907 = vmul.f32 %v583, %v771
  %v908 = vmul.f32 %v585, %v772
  %v909 = vmul.f32 %v587, %v773
  %v910 = vmul.f32 %v589, %v774
  %v911 = vmul.f32 %v591, %v775
  %912 = vrot.lane.b32.xlu0 %v835, 64
  %v913 = vpop.permute.xlu0 %912
  %914 = vrot.lane.b32.xlu0 %v839, 64
  %v915 = vpop.permute.xlu0 %914
  %916 = vrot.lane.b32.xlu0 %v843, 64
  %v917 = vpop.permute.xlu0 %916
  %918 = vrot.lane.b32.xlu0 %v847, 64
  %v919 = vpop.permute.xlu0 %918
  %920 = vrot.lane.b32.xlu0 %v851, 64
  %v921 = vpop.permute.xlu0 %920
  %922 = vrot.lane.b32.xlu0 %v855, 64
  %v923 = vpop.permute.xlu0 %922
  %924 = vrot.lane.b32.xlu0 %v859, 64
  %v925 = vpop.permute.xlu0 %924
  %926 = vrot.lane.b32.xlu0 %v863, 64
  %v927 = vpop.permute.xlu0 %926
  %v936 = vmul.f32 %v904, %v913
  %v937 = vmul.f32 %v905, %v915
  %v938 = vmul.f32 %v906, %v917
  %v939 = vmul.f32 %v907, %v919
  %v940 = vmul.f32 %v908, %v921
  %v941 = vmul.f32 %v909, %v923
  %v942 = vmul.f32 %v910, %v925
  %v943 = vmul.f32 %v911, %v927
  %v944 = vadd.f32 %v896, %v936
  %v945 = vadd.f32 %v897, %v937
  %v946 = vadd.f32 %v898, %v938
  %v947 = vadd.f32 %v899, %v939
  %v948 = vadd.f32 %v900, %v940
  %v949 = vadd.f32 %v901, %v941
  %v950 = vadd.f32 %v902, %v942
  %v951 = vadd.f32 %v903, %v943
  %v952 = vmul.f32 %v601, %v768
  %v953 = vmul.f32 %v603, %v769
  %v954 = vmul.f32 %v605, %v770
  %v955 = vmul.f32 %v607, %v771
  %v956 = vmul.f32 %v609, %v772
  %v957 = vmul.f32 %v611, %v773
  %v958 = vmul.f32 %v613, %v774
  %v959 = vmul.f32 %v615, %v775
  %960 = vrot.lane.b32.xlu0 %v835, 32
  %v961 = vpop.permute.xlu0 %960
  %962 = vrot.lane.b32.xlu0 %v839, 32
  %v963 = vpop.permute.xlu0 %962
  %964 = vrot.lane.b32.xlu0 %v843, 32
  %v965 = vpop.permute.xlu0 %964
  %966 = vrot.lane.b32.xlu0 %v847, 32
  %v967 = vpop.permute.xlu0 %966
  %968 = vrot.lane.b32.xlu0 %v851, 32
  %v969 = vpop.permute.xlu0 %968
  %970 = vrot.lane.b32.xlu0 %v855, 32
  %v971 = vpop.permute.xlu0 %970
  %972 = vrot.lane.b32.xlu0 %v859, 32
  %v973 = vpop.permute.xlu0 %972
  %974 = vrot.lane.b32.xlu0 %v863, 32
  %v975 = vpop.permute.xlu0 %974
  %v984 = vmul.f32 %v952, %v961
  %v985 = vmul.f32 %v953, %v963
  %v986 = vmul.f32 %v954, %v965
  %v987 = vmul.f32 %v955, %v967
  %v988 = vmul.f32 %v956, %v969
  %v989 = vmul.f32 %v957, %v971
  %v990 = vmul.f32 %v958, %v973
  %v991 = vmul.f32 %v959, %v975
  %v992 = vadd.f32 %v944, %v984
  %v993 = vadd.f32 %v945, %v985
  %v994 = vadd.f32 %v946, %v986
  %v995 = vadd.f32 %v947, %v987
  %v996 = vadd.f32 %v948, %v988
  %v997 = vadd.f32 %v949, %v989
  %v998 = vadd.f32 %v950, %v990
  %v999 = vadd.f32 %v951, %v991
  %v1000 = vld [vmem:[%s1 + $0x1] sm:$0x1]
  %v1001 = vld [vmem:[%s1 + $0x3] sm:$0x1]
  %v1002 = vld [vmem:[%s1 + $0x5] sm:$0x1]
  %v1003 = vld [vmem:[%s1 + $0x7] sm:$0x1]
  %v1004 = vld [vmem:[%s1 + $0x9] sm:$0x1]
  %v1005 = vld [vmem:[%s1 + $0xb] sm:$0x1]
  %v1006 = vld [vmem:[%s1 + $0xd] sm:$0x1]
  %v1007 = vld [vmem:[%s1 + $0xf] sm:$0x1]
  %v1008 = vmul.f32 %v625, %v768
  %v1009 = vmul.f32 %v627, %v769
  %v1010 = vmul.f32 %v629, %v770
  %v1011 = vmul.f32 %v631, %v771
  %v1012 = vmul.f32 %v633, %v772
  %v1013 = vmul.f32 %v635, %v773
  %v1014 = vmul.f32 %v637, %v774
  %v1015 = vmul.f32 %v639, %v775
  %v1016 = vmul.f32 %v1008, %v1000
  %v1017 = vmul.f32 %v1009, %v1001
  %v1018 = vmul.f32 %v1010, %v1002
  %v1019 = vmul.f32 %v1011, %v1003
  %v1020 = vmul.f32 %v1012, %v1004
  %v1021 = vmul.f32 %v1013, %v1005
  %v1022 = vmul.f32 %v1014, %v1006
  %v1023 = vmul.f32 %v1015, %v1007
  %v1024 = vadd.f32 %v992, %v1016
  %v1025 = vadd.f32 %v993, %v1017
  %v1026 = vadd.f32 %v994, %v1018
  %v1027 = vadd.f32 %v995, %v1019
  %v1028 = vadd.f32 %v996, %v1020
  %v1029 = vadd.f32 %v997, %v1021
  %v1030 = vadd.f32 %v998, %v1022
  %v1031 = vadd.f32 %v999, %v1023
  %v1032 = vmul.f32 %v649, %v768
  %v1033 = vmul.f32 %v651, %v769
  %v1034 = vmul.f32 %v653, %v770
  %v1035 = vmul.f32 %v655, %v771
  %v1036 = vmul.f32 %v657, %v772
  %v1037 = vmul.f32 %v659, %v773
  %v1038 = vmul.f32 %v661, %v774
  %v1039 = vmul.f32 %v663, %v775
  %v1048 = vlaneseq
  %v1049 = vshrl.u32 %v1048, 7
  %v1050 = vsub.s32 0, %v1049
  %v1051 = vrot.slane %v1000, %v1050
  %v1052 = vlaneseq
  %v1053 = vshrl.u32 %v1052, 7
  %v1054 = vsub.s32 0, %v1053
  %v1055 = vrot.slane %v1001, %v1054
  %v1056 = vlaneseq
  %v1057 = vshrl.u32 %v1056, 7
  %v1058 = vsub.s32 0, %v1057
  %v1059 = vrot.slane %v1002, %v1058
  %v1060 = vlaneseq
  %v1061 = vshrl.u32 %v1060, 7
  %v1062 = vsub.s32 0, %v1061
  %v1063 = vrot.slane %v1003, %v1062
  %v1064 = vlaneseq
  %v1065 = vshrl.u32 %v1064, 7
  %v1066 = vsub.s32 0, %v1065
  %v1067 = vrot.slane %v1004, %v1066
  %v1068 = vlaneseq
  %v1069 = vshrl.u32 %v1068, 7
  %v1070 = vsub.s32 0, %v1069
  %v1071 = vrot.slane %v1005, %v1070
  %v1072 = vlaneseq
  %v1073 = vshrl.u32 %v1072, 7
  %v1074 = vsub.s32 0, %v1073
  %v1075 = vrot.slane %v1006, %v1074
  %v1076 = vlaneseq
  %v1077 = vshrl.u32 %v1076, 7
  %v1078 = vsub.s32 0, %v1077
  %v1079 = vrot.slane %v1007, %v1078
  %1080 = vrot.lane.b32.xlu0 %v1051, 96
  %v1081 = vpop.permute.xlu0 %1080
  %1082 = vrot.lane.b32.xlu0 %v1055, 96
  %v1083 = vpop.permute.xlu0 %1082
  %1084 = vrot.lane.b32.xlu0 %v1059, 96
  %v1085 = vpop.permute.xlu0 %1084
  %1086 = vrot.lane.b32.xlu0 %v1063, 96
  %v1087 = vpop.permute.xlu0 %1086
  %1088 = vrot.lane.b32.xlu0 %v1067, 96
  %v1089 = vpop.permute.xlu0 %1088
  %1090 = vrot.lane.b32.xlu0 %v1071, 96
  %v1091 = vpop.permute.xlu0 %1090
  %1092 = vrot.lane.b32.xlu0 %v1075, 96
  %v1093 = vpop.permute.xlu0 %1092
  %1094 = vrot.lane.b32.xlu0 %v1079, 96
  %v1095 = vpop.permute.xlu0 %1094
  %v1104 = vmul.f32 %v1032, %v1081
  %v1105 = vmul.f32 %v1033, %v1083
  %v1106 = vmul.f32 %v1034, %v1085
  %v1107 = vmul.f32 %v1035, %v1087
  %v1108 = vmul.f32 %v1036, %v1089
  %v1109 = vmul.f32 %v1037, %v1091
  %v1110 = vmul.f32 %v1038, %v1093
  %v1111 = vmul.f32 %v1039, %v1095
  %v1112 = vadd.f32 %v1024, %v1104
  %v1113 = vadd.f32 %v1025, %v1105
  %v1114 = vadd.f32 %v1026, %v1106
  %v1115 = vadd.f32 %v1027, %v1107
  %v1116 = vadd.f32 %v1028, %v1108
  %v1117 = vadd.f32 %v1029, %v1109
  %v1118 = vadd.f32 %v1030, %v1110
  %v1119 = vadd.f32 %v1031, %v1111
  %v1120 = vmul.f32 %v673, %v768
  %v1121 = vmul.f32 %v675, %v769
  %v1122 = vmul.f32 %v677, %v770
  %v1123 = vmul.f32 %v679, %v771
  %v1124 = vmul.f32 %v681, %v772
  %v1125 = vmul.f32 %v683, %v773
  %v1126 = vmul.f32 %v685, %v774
  %v1127 = vmul.f32 %v687, %v775
  %1128 = vrot.lane.b32.xlu0 %v1051, 64
  %v1129 = vpop.permute.xlu0 %1128
  %1130 = vrot.lane.b32.xlu0 %v1055, 64
  %v1131 = vpop.permute.xlu0 %1130
  %1132 = vrot.lane.b32.xlu0 %v1059, 64
  %v1133 = vpop.permute.xlu0 %1132
  %1134 = vrot.lane.b32.xlu0 %v1063, 64
  %v1135 = vpop.permute.xlu0 %1134
  %1136 = vrot.lane.b32.xlu0 %v1067, 64
  %v1137 = vpop.permute.xlu0 %1136
  %1138 = vrot.lane.b32.xlu0 %v1071, 64
  %v1139 = vpop.permute.xlu0 %1138
  %1140 = vrot.lane.b32.xlu0 %v1075, 64
  %v1141 = vpop.permute.xlu0 %1140
  %1142 = vrot.lane.b32.xlu0 %v1079, 64
  %v1143 = vpop.permute.xlu0 %1142
  %v1152 = vmul.f32 %v1120, %v1129
  %v1153 = vmul.f32 %v1121, %v1131
  %v1154 = vmul.f32 %v1122, %v1133
  %v1155 = vmul.f32 %v1123, %v1135
  %v1156 = vmul.f32 %v1124, %v1137
  %v1157 = vmul.f32 %v1125, %v1139
  %v1158 = vmul.f32 %v1126, %v1141
  %v1159 = vmul.f32 %v1127, %v1143
  %v1160 = vadd.f32 %v1112, %v1152
  %v1161 = vadd.f32 %v1113, %v1153
  %v1162 = vadd.f32 %v1114, %v1154
  %v1163 = vadd.f32 %v1115, %v1155
  %v1164 = vadd.f32 %v1116, %v1156
  %v1165 = vadd.f32 %v1117, %v1157
  %v1166 = vadd.f32 %v1118, %v1158
  %v1167 = vadd.f32 %v1119, %v1159
  %v1168 = vmul.f32 %v697, %v768
  %v1169 = vmul.f32 %v699, %v769
  %v1170 = vmul.f32 %v701, %v770
  %v1171 = vmul.f32 %v703, %v771
  %v1172 = vmul.f32 %v705, %v772
  %v1173 = vmul.f32 %v707, %v773
  %v1174 = vmul.f32 %v709, %v774
  %v1175 = vmul.f32 %v711, %v775
  %1176 = vrot.lane.b32.xlu0 %v1051, 32
  %v1177 = vpop.permute.xlu0 %1176
  %1178 = vrot.lane.b32.xlu0 %v1055, 32
  %v1179 = vpop.permute.xlu0 %1178
  %1180 = vrot.lane.b32.xlu0 %v1059, 32
  %v1181 = vpop.permute.xlu0 %1180
  %1182 = vrot.lane.b32.xlu0 %v1063, 32
  %v1183 = vpop.permute.xlu0 %1182
  %1184 = vrot.lane.b32.xlu0 %v1067, 32
  %v1185 = vpop.permute.xlu0 %1184
  %1186 = vrot.lane.b32.xlu0 %v1071, 32
  %v1187 = vpop.permute.xlu0 %1186
  %1188 = vrot.lane.b32.xlu0 %v1075, 32
  %v1189 = vpop.permute.xlu0 %1188
  %1190 = vrot.lane.b32.xlu0 %v1079, 32
  %v1191 = vpop.permute.xlu0 %1190
  %v1200 = vmul.f32 %v1168, %v1177
  %v1201 = vmul.f32 %v1169, %v1179
  %v1202 = vmul.f32 %v1170, %v1181
  %v1203 = vmul.f32 %v1171, %v1183
  %v1204 = vmul.f32 %v1172, %v1185
  %v1205 = vmul.f32 %v1173, %v1187
  %v1206 = vmul.f32 %v1174, %v1189
  %v1207 = vmul.f32 %v1175, %v1191
  %v1208 = vadd.f32 %v1160, %v1200
  %v1209 = vadd.f32 %v1161, %v1201
  %v1210 = vadd.f32 %v1162, %v1202
  %v1211 = vadd.f32 %v1163, %v1203
  %v1212 = vadd.f32 %v1164, %v1204
  %v1213 = vadd.f32 %v1165, %v1205
  %v1214 = vadd.f32 %v1166, %v1206
  %v1215 = vadd.f32 %v1167, %v1207
  %v1216 = vld [vmem:[%s4] sm:$0xff]
  %v1217 = vld [vmem:[%s4 + $0x8] sm:$0xff]
  %v1218 = vld [vmem:[%s4 + $0x10] sm:$0xff]
  %v1219 = vld [vmem:[%s4 + $0x18] sm:$0xff]
  %v1220 = vld [vmem:[%s5] sm:$0x1]
  %vm1221 = vcmask 261120
  %v1223 = vsel %vm1221, %v1208, 0
  %v1226 = vsel %vm1221, %v1216, 0
  %v1229 = vsel %vm1221, %v1217, 0
  %v1232 = vsel %vm1221, %v1218, 0
  %v1235 = vsel %vm1221, %v1219, 0
  %1237 = vmatprep.subr.mxu0 0.0
  %1238 = vmatpush1.xpose.msra.mxu0 %v1226
  %1239 = vmatprep.subr.mxu0 0.0
  %1240 = vmatpush1.xpose.msra.mxu0 %v1229
  %1241 = vmatprep.subr.mxu0 0.0
  %1242 = vmatpush1.xpose.msra.mxu0 %v1232
  %1243 = vmatprep.subr.mxu0 0.0
  %1244 = vmatpush1.xpose.msra.mxu0 %v1235
  %1245 = vmatprep.subr.mxu0 0.0
  %1246 = vmatpush1.xpose.msra.mxu0 0.0
  %1247 = vmatprep.subr.mxu0 0.0
  %1248 = vmatpush1.xpose.msra.mxu0 0.0
  %1249 = vmatprep.subr.mxu0 0.0
  %1250 = vmatpush1.xpose.msra.mxu0 0.0
  %1251 = vmatprep.subr.mxu0 0.0
  %1252 = vmatpush1.xpose.msra.mxu0 0.0
  %1253 = vmatprep.subr.mxu0 0.0
  %1254 = vmatpush1.xpose.msra.mxu0 0.0
  %1255 = vmatprep.subr.mxu0 0.0
  %1256 = vmatpush1.xpose.msra.mxu0 0.0
  %1257 = vmatprep.subr.mxu0 0.0
  %1258 = vmatpush1.xpose.msra.mxu0 0.0
  %1259 = vmatprep.subr.mxu0 0.0
  %1260 = vmatpush1.xpose.msra.mxu0 0.0
  %1261 = vmatprep.subr.mxu0 0.0
  %1262 = vmatpush1.xpose.msra.mxu0 0.0
  %1263 = vmatprep.subr.mxu0 0.0
  %1264 = vmatpush1.xpose.msra.mxu0 0.0
  %1265 = vmatprep.subr.mxu0 0.0
  %1266 = vmatpush1.xpose.msra.mxu0 0.0
  %1267 = vmatprep.subr.mxu0 0.0
  %1268 = vmatpush1.xpose.msra.mxu0 0.0
  %1269 = vmatprep.subr.mxu0 0.0
  %1270 = vmatpush1.xpose.msra.mxu0 0.0
  %1271 = vmatprep.subr.mxu0 0.0
  %1272 = vmatpush1.xpose.msra.mxu0 0.0
  %1273 = vmatprep.subr.mxu0 0.0
  %1274 = vmatpush1.xpose.msra.mxu0 0.0
  %1275 = vmatprep.subr.mxu0 0.0
  %1276 = vmatpush1.xpose.msra.mxu0 0.0
  %1277 = vmatprep.subr.mxu0 0.0
  %1278 = vmatpush1.xpose.msra.mxu0 0.0
  %1279 = vmatprep.subr.mxu0 0.0
  %1280 = vmatpush1.xpose.msra.mxu0 0.0
  %1281 = vmatprep.subr.mxu0 0.0
  %1282 = vmatpush1.xpose.msra.mxu0 0.0
  %1283 = vmatprep.subr.mxu0 0.0
  %1284 = vmatpush1.xpose.msra.mxu0 0.0
  %1285 = vmatprep.subr.mxu0 0.0
  %1286 = vmatpush1.xpose.msra.mxu0 0.0
  %1287 = vmatprep.subr.mxu0 0.0
  %1288 = vmatpush1.xpose.msra.mxu0 0.0
  %1289 = vmatprep.subr.mxu0 0.0
  %1290 = vmatpush1.xpose.msra.mxu0 0.0
  %1291 = vmatprep.subr.mxu0 0.0
  %1292 = vmatpush1.xpose.msra.mxu0 0.0
  %1293 = vmatprep.subr.mxu0 0.0
  %1294 = vmatpush1.xpose.msra.mxu0 0.0
  %1295 = vmatprep.subr.mxu0 0.0
  %1296 = vmatpush1.xpose.msra.mxu0 0.0
  %1297 = vmatprep.subr.mxu0 0.0
  %1298 = vmatpush1.xpose.msra.mxu0 0.0
  %1299 = vmatprep.subr.mxu0 0.0
  %1300 = vmatpush1.xpose.msra.mxu0 0.0
  %1301 = vmatprep.mubr.f32.mxu0 0.0
  %1302 = vmatmul.mubr.f32.gmra.mrb[0].mxu0 %v1223
  %v1303 = vpop.f32.mrb[0].mxu0
  %v1304 = vadd.f32 %v1220, %v1303
  %v1305 = vpop.f32.mrb[0].mxu0
  %1306 = vdwg.mxu0
  %v1308 = vsel %vm1221, %v1209, 0
  %1310 = vmatprep.subr.mxu0 0.0
  %1311 = vmatpush1.xpose.msra.mxu0 %v1226
  %1312 = vmatprep.subr.mxu0 0.0
  %1313 = vmatpush1.xpose.msra.mxu0 %v1229
  %1314 = vmatprep.subr.mxu0 0.0
  %1315 = vmatpush1.xpose.msra.mxu0 %v1232
  %1316 = vmatprep.subr.mxu0 0.0
  %1317 = vmatpush1.xpose.msra.mxu0 %v1235
  %1318 = vmatprep.subr.mxu0 0.0
  %1319 = vmatpush1.xpose.msra.mxu0 0.0
  %1320 = vmatprep.subr.mxu0 0.0
  %1321 = vmatpush1.xpose.msra.mxu0 0.0
  %1322 = vmatprep.subr.mxu0 0.0
  %1323 = vmatpush1.xpose.msra.mxu0 0.0
  %1324 = vmatprep.subr.mxu0 0.0
  %1325 = vmatpush1.xpose.msra.mxu0 0.0
  %1326 = vmatprep.subr.mxu0 0.0
  %1327 = vmatpush1.xpose.msra.mxu0 0.0
  %1328 = vmatprep.subr.mxu0 0.0
  %1329 = vmatpush1.xpose.msra.mxu0 0.0
  %1330 = vmatprep.subr.mxu0 0.0
  %1331 = vmatpush1.xpose.msra.mxu0 0.0
  %1332 = vmatprep.subr.mxu0 0.0
  %1333 = vmatpush1.xpose.msra.mxu0 0.0
  %1334 = vmatprep.subr.mxu0 0.0
  %1335 = vmatpush1.xpose.msra.mxu0 0.0
  %1336 = vmatprep.subr.mxu0 0.0
  %1337 = vmatpush1.xpose.msra.mxu0 0.0
  %1338 = vmatprep.subr.mxu0 0.0
  %1339 = vmatpush1.xpose.msra.mxu0 0.0
  %1340 = vmatprep.subr.mxu0 0.0
  %1341 = vmatpush1.xpose.msra.mxu0 0.0
  %1342 = vmatprep.subr.mxu0 0.0
  %1343 = vmatpush1.xpose.msra.mxu0 0.0
  %1344 = vmatprep.subr.mxu0 0.0
  %1345 = vmatpush1.xpose.msra.mxu0 0.0
  %1346 = vmatprep.subr.mxu0 0.0
  %1347 = vmatpush1.xpose.msra.mxu0 0.0
  %1348 = vmatprep.subr.mxu0 0.0
  %1349 = vmatpush1.xpose.msra.mxu0 0.0
  %1350 = vmatprep.subr.mxu0 0.0
  %1351 = vmatpush1.xpose.msra.mxu0 0.0
  %1352 = vmatprep.subr.mxu0 0.0
  %1353 = vmatpush1.xpose.msra.mxu0 0.0
  %1354 = vmatprep.subr.mxu0 0.0
  %1355 = vmatpush1.xpose.msra.mxu0 0.0
  %1356 = vmatprep.subr.mxu0 0.0
  %1357 = vmatpush1.xpose.msra.mxu0 0.0
  %1358 = vmatprep.subr.mxu0 0.0
  %1359 = vmatpush1.xpose.msra.mxu0 0.0
  %1360 = vmatprep.subr.mxu0 0.0
  %1361 = vmatpush1.xpose.msra.mxu0 0.0
  %1362 = vmatprep.subr.mxu0 0.0
  %1363 = vmatpush1.xpose.msra.mxu0 0.0
  %1364 = vmatprep.subr.mxu0 0.0
  %1365 = vmatpush1.xpose.msra.mxu0 0.0
  %1366 = vmatprep.subr.mxu0 0.0
  %1367 = vmatpush1.xpose.msra.mxu0 0.0
  %1368 = vmatprep.subr.mxu0 0.0
  %1369 = vmatpush1.xpose.msra.mxu0 0.0
  %1370 = vmatprep.subr.mxu0 0.0
  %1371 = vmatpush1.xpose.msra.mxu0 0.0
  %1372 = vmatprep.subr.mxu0 0.0
  %1373 = vmatpush1.xpose.msra.mxu0 0.0
  %1374 = vmatprep.mubr.f32.mxu0 0.0
  %1375 = vmatmul.mubr.f32.gmra.mrb[0].mxu0 %v1308
  %v1376 = vpop.f32.mrb[0].mxu0
  %v1377 = vadd.f32 %v1220, %v1376
  %v1378 = vpop.f32.mrb[0].mxu0
  %1379 = vdwg.mxu0
  %v1381 = vsel %vm1221, %v1210, 0
  %1383 = vmatprep.subr.mxu0 0.0
  %1384 = vmatpush1.xpose.msra.mxu0 %v1226
  %1385 = vmatprep.subr.mxu0 0.0
  %1386 = vmatpush1.xpose.msra.mxu0 %v1229
  %1387 = vmatprep.subr.mxu0 0.0
  %1388 = vmatpush1.xpose.msra.mxu0 %v1232
  %1389 = vmatprep.subr.mxu0 0.0
  %1390 = vmatpush1.xpose.msra.mxu0 %v1235
  %1391 = vmatprep.subr.mxu0 0.0
  %1392 = vmatpush1.xpose.msra.mxu0 0.0
  %1393 = vmatprep.subr.mxu0 0.0
  %1394 = vmatpush1.xpose.msra.mxu0 0.0
  %1395 = vmatprep.subr.mxu0 0.0
  %1396 = vmatpush1.xpose.msra.mxu0 0.0
  %1397 = vmatprep.subr.mxu0 0.0
  %1398 = vmatpush1.xpose.msra.mxu0 0.0
  %1399 = vmatprep.subr.mxu0 0.0
  %1400 = vmatpush1.xpose.msra.mxu0 0.0
  %1401 = vmatprep.subr.mxu0 0.0
  %1402 = vmatpush1.xpose.msra.mxu0 0.0
  %1403 = vmatprep.subr.mxu0 0.0
  %1404 = vmatpush1.xpose.msra.mxu0 0.0
  %1405 = vmatprep.subr.mxu0 0.0
  %1406 = vmatpush1.xpose.msra.mxu0 0.0
  %1407 = vmatprep.subr.mxu0 0.0
  %1408 = vmatpush1.xpose.msra.mxu0 0.0
  %1409 = vmatprep.subr.mxu0 0.0
  %1410 = vmatpush1.xpose.msra.mxu0 0.0
  %1411 = vmatprep.subr.mxu0 0.0
  %1412 = vmatpush1.xpose.msra.mxu0 0.0
  %1413 = vmatprep.subr.mxu0 0.0
  %1414 = vmatpush1.xpose.msra.mxu0 0.0
  %1415 = vmatprep.subr.mxu0 0.0
  %1416 = vmatpush1.xpose.msra.mxu0 0.0
  %1417 = vmatprep.subr.mxu0 0.0
  %1418 = vmatpush1.xpose.msra.mxu0 0.0
  %1419 = vmatprep.subr.mxu0 0.0
  %1420 = vmatpush1.xpose.msra.mxu0 0.0
  %1421 = vmatprep.subr.mxu0 0.0
  %1422 = vmatpush1.xpose.msra.mxu0 0.0
  %1423 = vmatprep.subr.mxu0 0.0
  %1424 = vmatpush1.xpose.msra.mxu0 0.0
  %1425 = vmatprep.subr.mxu0 0.0
  %1426 = vmatpush1.xpose.msra.mxu0 0.0
  %1427 = vmatprep.subr.mxu0 0.0
  %1428 = vmatpush1.xpose.msra.mxu0 0.0
  %1429 = vmatprep.subr.mxu0 0.0
  %1430 = vmatpush1.xpose.msra.mxu0 0.0
  %1431 = vmatprep.subr.mxu0 0.0
  %1432 = vmatpush1.xpose.msra.mxu0 0.0
  %1433 = vmatprep.subr.mxu0 0.0
  %1434 = vmatpush1.xpose.msra.mxu0 0.0
  %1435 = vmatprep.subr.mxu0 0.0
  %1436 = vmatpush1.xpose.msra.mxu0 0.0
  %1437 = vmatprep.subr.mxu0 0.0
  %1438 = vmatpush1.xpose.msra.mxu0 0.0
  %1439 = vmatprep.subr.mxu0 0.0
  %1440 = vmatpush1.xpose.msra.mxu0 0.0
  %1441 = vmatprep.subr.mxu0 0.0
  %1442 = vmatpush1.xpose.msra.mxu0 0.0
  %1443 = vmatprep.subr.mxu0 0.0
  %1444 = vmatpush1.xpose.msra.mxu0 0.0
  %1445 = vmatprep.subr.mxu0 0.0
  %1446 = vmatpush1.xpose.msra.mxu0 0.0
  %1447 = vmatprep.mubr.f32.mxu0 0.0
  %1448 = vmatmul.mubr.f32.gmra.mrb[0].mxu0 %v1381
  %v1449 = vpop.f32.mrb[0].mxu0
  %v1450 = vadd.f32 %v1220, %v1449
  %v1451 = vpop.f32.mrb[0].mxu0
  %1452 = vdwg.mxu0
  %v1454 = vsel %vm1221, %v1211, 0
  %1456 = vmatprep.subr.mxu0 0.0
  %1457 = vmatpush1.xpose.msra.mxu0 %v1226
  %1458 = vmatprep.subr.mxu0 0.0
  %1459 = vmatpush1.xpose.msra.mxu0 %v1229
  %1460 = vmatprep.subr.mxu0 0.0
  %1461 = vmatpush1.xpose.msra.mxu0 %v1232
  %1462 = vmatprep.subr.mxu0 0.0
  %1463 = vmatpush1.xpose.msra.mxu0 %v1235
  %1464 = vmatprep.subr.mxu0 0.0
  %1465 = vmatpush1.xpose.msra.mxu0 0.0
  %1466 = vmatprep.subr.mxu0 0.0
  %1467 = vmatpush1.xpose.msra.mxu0 0.0
  %1468 = vmatprep.subr.mxu0 0.0
  %1469 = vmatpush1.xpose.msra.mxu0 0.0
  %1470 = vmatprep.subr.mxu0 0.0
  %1471 = vmatpush1.xpose.msra.mxu0 0.0
  %1472 = vmatprep.subr.mxu0 0.0
  %1473 = vmatpush1.xpose.msra.mxu0 0.0
  %1474 = vmatprep.subr.mxu0 0.0
  %1475 = vmatpush1.xpose.msra.mxu0 0.0
  %1476 = vmatprep.subr.mxu0 0.0
  %1477 = vmatpush1.xpose.msra.mxu0 0.0
  %1478 = vmatprep.subr.mxu0 0.0
  %1479 = vmatpush1.xpose.msra.mxu0 0.0
  %1480 = vmatprep.subr.mxu0 0.0
  %1481 = vmatpush1.xpose.msra.mxu0 0.0
  %1482 = vmatprep.subr.mxu0 0.0
  %1483 = vmatpush1.xpose.msra.mxu0 0.0
  %1484 = vmatprep.subr.mxu0 0.0
  %1485 = vmatpush1.xpose.msra.mxu0 0.0
  %1486 = vmatprep.subr.mxu0 0.0
  %1487 = vmatpush1.xpose.msra.mxu0 0.0
  %1488 = vmatprep.subr.mxu0 0.0
  %1489 = vmatpush1.xpose.msra.mxu0 0.0
  %1490 = vmatprep.subr.mxu0 0.0
  %1491 = vmatpush1.xpose.msra.mxu0 0.0
  %1492 = vmatprep.subr.mxu0 0.0
  %1493 = vmatpush1.xpose.msra.mxu0 0.0
  %1494 = vmatprep.subr.mxu0 0.0
  %1495 = vmatpush1.xpose.msra.mxu0 0.0
  %1496 = vmatprep.subr.mxu0 0.0
  %1497 = vmatpush1.xpose.msra.mxu0 0.0
  %1498 = vmatprep.subr.mxu0 0.0
  %1499 = vmatpush1.xpose.msra.mxu0 0.0
  %1500 = vmatprep.subr.mxu0 0.0
  %1501 = vmatpush1.xpose.msra.mxu0 0.0
  %1502 = vmatprep.subr.mxu0 0.0
  %1503 = vmatpush1.xpose.msra.mxu0 0.0
  %1504 = vmatprep.subr.mxu0 0.0
  %1505 = vmatpush1.xpose.msra.mxu0 0.0
  %1506 = vmatprep.subr.mxu0 0.0
  %1507 = vmatpush1.xpose.msra.mxu0 0.0
  %1508 = vmatprep.subr.mxu0 0.0
  %1509 = vmatpush1.xpose.msra.mxu0 0.0
  %1510 = vmatprep.subr.mxu0 0.0
  %1511 = vmatpush1.xpose.msra.mxu0 0.0
  %1512 = vmatprep.subr.mxu0 0.0
  %1513 = vmatpush1.xpose.msra.mxu0 0.0
  %1514 = vmatprep.subr.mxu0 0.0
  %1515 = vmatpush1.xpose.msra.mxu0 0.0
  %1516 = vmatprep.subr.mxu0 0.0
  %1517 = vmatpush1.xpose.msra.mxu0 0.0
  %1518 = vmatprep.subr.mxu0 0.0
  %1519 = vmatpush1.xpose.msra.mxu0 0.0
  %1520 = vmatprep.mubr.f32.mxu0 0.0
  %1521 = vmatmul.mubr.f32.gmra.mrb[0].mxu0 %v1454
  %v1522 = vpop.f32.mrb[0].mxu0
  %v1523 = vadd.f32 %v1220, %v1522
  %v1524 = vpop.f32.mrb[0].mxu0
  %1525 = vdwg.mxu0
  %v1527 = vsel %vm1221, %v1212, 0
  %1529 = vmatprep.subr.mxu0 0.0
  %1530 = vmatpush1.xpose.msra.mxu0 %v1226
  %1531 = vmatprep.subr.mxu0 0.0
  %1532 = vmatpush1.xpose.msra.mxu0 %v1229
  %1533 = vmatprep.subr.mxu0 0.0
  %1534 = vmatpush1.xpose.msra.mxu0 %v1232
  %1535 = vmatprep.subr.mxu0 0.0
  %1536 = vmatpush1.xpose.msra.mxu0 %v1235
  %1537 = vmatprep.subr.mxu0 0.0
  %1538 = vmatpush1.xpose.msra.mxu0 0.0
  %1539 = vmatprep.subr.mxu0 0.0
  %1540 = vmatpush1.xpose.msra.mxu0 0.0
  %1541 = vmatprep.subr.mxu0 0.0
  %1542 = vmatpush1.xpose.msra.mxu0 0.0
  %1543 = vmatprep.subr.mxu0 0.0
  %1544 = vmatpush1.xpose.msra.mxu0 0.0
  %1545 = vmatprep.subr.mxu0 0.0
  %1546 = vmatpush1.xpose.msra.mxu0 0.0
  %1547 = vmatprep.subr.mxu0 0.0
  %1548 = vmatpush1.xpose.msra.mxu0 0.0
  %1549 = vmatprep.subr.mxu0 0.0
  %1550 = vmatpush1.xpose.msra.mxu0 0.0
  %1551 = vmatprep.subr.mxu0 0.0
  %1552 = vmatpush1.xpose.msra.mxu0 0.0
  %1553 = vmatprep.subr.mxu0 0.0
  %1554 = vmatpush1.xpose.msra.mxu0 0.0
  %1555 = vmatprep.subr.mxu0 0.0
  %1556 = vmatpush1.xpose.msra.mxu0 0.0
  %1557 = vmatprep.subr.mxu0 0.0
  %1558 = vmatpush1.xpose.msra.mxu0 0.0
  %1559 = vmatprep.subr.mxu0 0.0
  %1560 = vmatpush1.xpose.msra.mxu0 0.0
  %1561 = vmatprep.subr.mxu0 0.0
  %1562 = vmatpush1.xpose.msra.mxu0 0.0
  %1563 = vmatprep.subr.mxu0 0.0
  %1564 = vmatpush1.xpose.msra.mxu0 0.0
  %1565 = vmatprep.subr.mxu0 0.0
  %1566 = vmatpush1.xpose.msra.mxu0 0.0
  %1567 = vmatprep.subr.mxu0 0.0
  %1568 = vmatpush1.xpose.msra.mxu0 0.0
  %1569 = vmatprep.subr.mxu0 0.0
  %1570 = vmatpush1.xpose.msra.mxu0 0.0
  %1571 = vmatprep.subr.mxu0 0.0
  %1572 = vmatpush1.xpose.msra.mxu0 0.0
  %1573 = vmatprep.subr.mxu0 0.0
  %1574 = vmatpush1.xpose.msra.mxu0 0.0
  %1575 = vmatprep.subr.mxu0 0.0
  %1576 = vmatpush1.xpose.msra.mxu0 0.0
  %1577 = vmatprep.subr.mxu0 0.0
  %1578 = vmatpush1.xpose.msra.mxu0 0.0
  %1579 = vmatprep.subr.mxu0 0.0
  %1580 = vmatpush1.xpose.msra.mxu0 0.0
  %1581 = vmatprep.subr.mxu0 0.0
  %1582 = vmatpush1.xpose.msra.mxu0 0.0
  %1583 = vmatprep.subr.mxu0 0.0
  %1584 = vmatpush1.xpose.msra.mxu0 0.0
  %1585 = vmatprep.subr.mxu0 0.0
  %1586 = vmatpush1.xpose.msra.mxu0 0.0
  %1587 = vmatprep.subr.mxu0 0.0
  %1588 = vmatpush1.xpose.msra.mxu0 0.0
  %1589 = vmatprep.subr.mxu0 0.0
  %1590 = vmatpush1.xpose.msra.mxu0 0.0
  %1591 = vmatprep.subr.mxu0 0.0
  %1592 = vmatpush1.xpose.msra.mxu0 0.0
  %1593 = vmatprep.mubr.f32.mxu0 0.0
  %1594 = vmatmul.mubr.f32.gmra.mrb[0].mxu0 %v1527
  %v1595 = vpop.f32.mrb[0].mxu0
  %v1596 = vadd.f32 %v1220, %v1595
  %v1597 = vpop.f32.mrb[0].mxu0
  %1598 = vdwg.mxu0
  %v1600 = vsel %vm1221, %v1213, 0
  %1602 = vmatprep.subr.mxu0 0.0
  %1603 = vmatpush1.xpose.msra.mxu0 %v1226
  %1604 = vmatprep.subr.mxu0 0.0
  %1605 = vmatpush1.xpose.msra.mxu0 %v1229
  %1606 = vmatprep.subr.mxu0 0.0
  %1607 = vmatpush1.xpose.msra.mxu0 %v1232
  %1608 = vmatprep.subr.mxu0 0.0
  %1609 = vmatpush1.xpose.msra.mxu0 %v1235
  %1610 = vmatprep.subr.mxu0 0.0
  %1611 = vmatpush1.xpose.msra.mxu0 0.0
  %1612 = vmatprep.subr.mxu0 0.0
  %1613 = vmatpush1.xpose.msra.mxu0 0.0
  %1614 = vmatprep.subr.mxu0 0.0
  %1615 = vmatpush1.xpose.msra.mxu0 0.0
  %1616 = vmatprep.subr.mxu0 0.0
  %1617 = vmatpush1.xpose.msra.mxu0 0.0
  %1618 = vmatprep.subr.mxu0 0.0
  %1619 = vmatpush1.xpose.msra.mxu0 0.0
  %1620 = vmatprep.subr.mxu0 0.0
  %1621 = vmatpush1.xpose.msra.mxu0 0.0
  %1622 = vmatprep.subr.mxu0 0.0
  %1623 = vmatpush1.xpose.msra.mxu0 0.0
  %1624 = vmatprep.subr.mxu0 0.0
  %1625 = vmatpush1.xpose.msra.mxu0 0.0
  %1626 = vmatprep.subr.mxu0 0.0
  %1627 = vmatpush1.xpose.msra.mxu0 0.0
  %1628 = vmatprep.subr.mxu0 0.0
  %1629 = vmatpush1.xpose.msra.mxu0 0.0
  %1630 = vmatprep.subr.mxu0 0.0
  %1631 = vmatpush1.xpose.msra.mxu0 0.0
  %1632 = vmatprep.subr.mxu0 0.0
  %1633 = vmatpush1.xpose.msra.mxu0 0.0
  %1634 = vmatprep.subr.mxu0 0.0
  %1635 = vmatpush1.xpose.msra.mxu0 0.0
  %1636 = vmatprep.subr.mxu0 0.0
  %1637 = vmatpush1.xpose.msra.mxu0 0.0
  %1638 = vmatprep.subr.mxu0 0.0
  %1639 = vmatpush1.xpose.msra.mxu0 0.0
  %1640 = vmatprep.subr.mxu0 0.0
  %1641 = vmatpush1.xpose.msra.mxu0 0.0
  %1642 = vmatprep.subr.mxu0 0.0
  %1643 = vmatpush1.xpose.msra.mxu0 0.0
  %1644 = vmatprep.subr.mxu0 0.0
  %1645 = vmatpush1.xpose.msra.mxu0 0.0
  %1646 = vmatprep.subr.mxu0 0.0
  %1647 = vmatpush1.xpose.msra.mxu0 0.0
  %1648 = vmatprep.subr.mxu0 0.0
  %1649 = vmatpush1.xpose.msra.mxu0 0.0
  %1650 = vmatprep.subr.mxu0 0.0
  %1651 = vmatpush1.xpose.msra.mxu0 0.0
  %1652 = vmatprep.subr.mxu0 0.0
  %1653 = vmatpush1.xpose.msra.mxu0 0.0
  %1654 = vmatprep.subr.mxu0 0.0
  %1655 = vmatpush1.xpose.msra.mxu0 0.0
  %1656 = vmatprep.subr.mxu0 0.0
  %1657 = vmatpush1.xpose.msra.mxu0 0.0
  %1658 = vmatprep.subr.mxu0 0.0
  %1659 = vmatpush1.xpose.msra.mxu0 0.0
  %1660 = vmatprep.subr.mxu0 0.0
  %1661 = vmatpush1.xpose.msra.mxu0 0.0
  %1662 = vmatprep.subr.mxu0 0.0
  %1663 = vmatpush1.xpose.msra.mxu0 0.0
  %1664 = vmatprep.subr.mxu0 0.0
  %1665 = vmatpush1.xpose.msra.mxu0 0.0
  %1666 = vmatprep.mubr.f32.mxu0 0.0
  %1667 = vmatmul.mubr.f32.gmra.mrb[0].mxu0 %v1600
  %v1668 = vpop.f32.mrb[0].mxu0
  %v1669 = vadd.f32 %v1220, %v1668
  %v1670 = vpop.f32.mrb[0].mxu0
  %1671 = vdwg.mxu0
  %v1673 = vsel %vm1221, %v1214, 0
  %1675 = vmatprep.subr.mxu0 0.0
  %1676 = vmatpush1.xpose.msra.mxu0 %v1226
  %1677 = vmatprep.subr.mxu0 0.0
  %1678 = vmatpush1.xpose.msra.mxu0 %v1229
  %1679 = vmatprep.subr.mxu0 0.0
  %1680 = vmatpush1.xpose.msra.mxu0 %v1232
  %1681 = vmatprep.subr.mxu0 0.0
  %1682 = vmatpush1.xpose.msra.mxu0 %v1235
  %1683 = vmatprep.subr.mxu0 0.0
  %1684 = vmatpush1.xpose.msra.mxu0 0.0
  %1685 = vmatprep.subr.mxu0 0.0
  %1686 = vmatpush1.xpose.msra.mxu0 0.0
  %1687 = vmatprep.subr.mxu0 0.0
  %1688 = vmatpush1.xpose.msra.mxu0 0.0
  %1689 = vmatprep.subr.mxu0 0.0
  %1690 = vmatpush1.xpose.msra.mxu0 0.0
  %1691 = vmatprep.subr.mxu0 0.0
  %1692 = vmatpush1.xpose.msra.mxu0 0.0
  %1693 = vmatprep.subr.mxu0 0.0
  %1694 = vmatpush1.xpose.msra.mxu0 0.0
  %1695 = vmatprep.subr.mxu0 0.0
  %1696 = vmatpush1.xpose.msra.mxu0 0.0
  %1697 = vmatprep.subr.mxu0 0.0
  %1698 = vmatpush1.xpose.msra.mxu0 0.0
  %1699 = vmatprep.subr.mxu0 0.0
  %1700 = vmatpush1.xpose.msra.mxu0 0.0
  %1701 = vmatprep.subr.mxu0 0.0
  %1702 = vmatpush1.xpose.msra.mxu0 0.0
  %1703 = vmatprep.subr.mxu0 0.0
  %1704 = vmatpush1.xpose.msra.mxu0 0.0
  %1705 = vmatprep.subr.mxu0 0.0
  %1706 = vmatpush1.xpose.msra.mxu0 0.0
  %1707 = vmatprep.subr.mxu0 0.0
  %1708 = vmatpush1.xpose.msra.mxu0 0.0
  %1709 = vmatprep.subr.mxu0 0.0
  %1710 = vmatpush1.xpose.msra.mxu0 0.0
  %1711 = vmatprep.subr.mxu0 0.0
  %1712 = vmatpush1.xpose.msra.mxu0 0.0
  %1713 = vmatprep.subr.mxu0 0.0
  %1714 = vmatpush1.xpose.msra.mxu0 0.0
  %1715 = vmatprep.subr.mxu0 0.0
  %1716 = vmatpush1.xpose.msra.mxu0 0.0
  %1717 = vmatprep.subr.mxu0 0.0
  %1718 = vmatpush1.xpose.msra.mxu0 0.0
  %1719 = vmatprep.subr.mxu0 0.0
  %1720 = vmatpush1.xpose.msra.mxu0 0.0
  %1721 = vmatprep.subr.mxu0 0.0
  %1722 = vmatpush1.xpose.msra.mxu0 0.0
  %1723 = vmatprep.subr.mxu0 0.0
  %1724 = vmatpush1.xpose.msra.mxu0 0.0
  %1725 = vmatprep.subr.mxu0 0.0
  %1726 = vmatpush1.xpose.msra.mxu0 0.0
  %1727 = vmatprep.subr.mxu0 0.0
  %1728 = vmatpush1.xpose.msra.mxu0 0.0
  %1729 = vmatprep.subr.mxu0 0.0
  %1730 = vmatpush1.xpose.msra.mxu0 0.0
  %1731 = vmatprep.subr.mxu0 0.0
  %1732 = vmatpush1.xpose.msra.mxu0 0.0
  %1733 = vmatprep.subr.mxu0 0.0
  %1734 = vmatpush1.xpose.msra.mxu0 0.0
  %1735 = vmatprep.subr.mxu0 0.0
  %1736 = vmatpush1.xpose.msra.mxu0 0.0
  %1737 = vmatprep.subr.mxu0 0.0
  %1738 = vmatpush1.xpose.msra.mxu0 0.0
  %1739 = vmatprep.mubr.f32.mxu0 0.0
  %1740 = vmatmul.mubr.f32.gmra.mrb[0].mxu0 %v1673
  %v1741 = vpop.f32.mrb[0].mxu0
  %v1742 = vadd.f32 %v1220, %v1741
  %v1743 = vpop.f32.mrb[0].mxu0
  %1744 = vdwg.mxu0
  %v1746 = vsel %vm1221, %v1215, 0
  %1748 = vmatprep.subr.mxu0 0.0
  %1749 = vmatpush1.xpose.msra.mxu0 %v1226
  %1750 = vmatprep.subr.mxu0 0.0
  %1751 = vmatpush1.xpose.msra.mxu0 %v1229
  %1752 = vmatprep.subr.mxu0 0.0
  %1753 = vmatpush1.xpose.msra.mxu0 %v1232
  %1754 = vmatprep.subr.mxu0 0.0
  %1755 = vmatpush1.xpose.msra.mxu0 %v1235
  %1756 = vmatprep.subr.mxu0 0.0
  %1757 = vmatpush1.xpose.msra.mxu0 0.0
  %1758 = vmatprep.subr.mxu0 0.0
  %1759 = vmatpush1.xpose.msra.mxu0 0.0
  %1760 = vmatprep.subr.mxu0 0.0
  %1761 = vmatpush1.xpose.msra.mxu0 0.0
  %1762 = vmatprep.subr.mxu0 0.0
  %1763 = vmatpush1.xpose.msra.mxu0 0.0
  %1764 = vmatprep.subr.mxu0 0.0
  %1765 = vmatpush1.xpose.msra.mxu0 0.0
  %1766 = vmatprep.subr.mxu0 0.0
  %1767 = vmatpush1.xpose.msra.mxu0 0.0
  %1768 = vmatprep.subr.mxu0 0.0
  %1769 = vmatpush1.xpose.msra.mxu0 0.0
  %1770 = vmatprep.subr.mxu0 0.0
  %1771 = vmatpush1.xpose.msra.mxu0 0.0
  %1772 = vmatprep.subr.mxu0 0.0
  %1773 = vmatpush1.xpose.msra.mxu0 0.0
  %1774 = vmatprep.subr.mxu0 0.0
  %1775 = vmatpush1.xpose.msra.mxu0 0.0
  %1776 = vmatprep.subr.mxu0 0.0
  %1777 = vmatpush1.xpose.msra.mxu0 0.0
  %1778 = vmatprep.subr.mxu0 0.0
  %1779 = vmatpush1.xpose.msra.mxu0 0.0
  %1780 = vmatprep.subr.mxu0 0.0
  %1781 = vmatpush1.xpose.msra.mxu0 0.0
  %1782 = vmatprep.subr.mxu0 0.0
  %1783 = vmatpush1.xpose.msra.mxu0 0.0
  %1784 = vmatprep.subr.mxu0 0.0
  %1785 = vmatpush1.xpose.msra.mxu0 0.0
  %1786 = vmatprep.subr.mxu0 0.0
  %1787 = vmatpush1.xpose.msra.mxu0 0.0
  %1788 = vmatprep.subr.mxu0 0.0
  %1789 = vmatpush1.xpose.msra.mxu0 0.0
  %1790 = vmatprep.subr.mxu0 0.0
  %1791 = vmatpush1.xpose.msra.mxu0 0.0
  %1792 = vmatprep.subr.mxu0 0.0
  %1793 = vmatpush1.xpose.msra.mxu0 0.0
  %1794 = vmatprep.subr.mxu0 0.0
  %1795 = vmatpush1.xpose.msra.mxu0 0.0
  %1796 = vmatprep.subr.mxu0 0.0
  %1797 = vmatpush1.xpose.msra.mxu0 0.0
  %1798 = vmatprep.subr.mxu0 0.0
  %1799 = vmatpush1.xpose.msra.mxu0 0.0
  %1800 = vmatprep.subr.mxu0 0.0
  %1801 = vmatpush1.xpose.msra.mxu0 0.0
  %1802 = vmatprep.subr.mxu0 0.0
  %1803 = vmatpush1.xpose.msra.mxu0 0.0
  %1804 = vmatprep.subr.mxu0 0.0
  %1805 = vmatpush1.xpose.msra.mxu0 0.0
  %1806 = vmatprep.subr.mxu0 0.0
  %1807 = vmatpush1.xpose.msra.mxu0 0.0
  %1808 = vmatprep.subr.mxu0 0.0
  %1809 = vmatpush1.xpose.msra.mxu0 0.0
  %1810 = vmatprep.subr.mxu0 0.0
  %1811 = vmatpush1.xpose.msra.mxu0 0.0
  %1812 = vmatprep.mubr.f32.mxu0 0.0
  %1813 = vmatmul.mubr.f32.gmra.mrb[0].mxu0 %v1746
  %v1814 = vpop.f32.mrb[0].mxu0
  %v1815 = vadd.f32 %v1220, %v1814
  %v1816 = vpop.f32.mrb[0].mxu0
  %1817 = vdwg.mxu0
  %v1818 = vxor.u32 %v1304, 2147483648
  %v1819 = vxor.u32 %v1377, 2147483648
  %v1820 = vxor.u32 %v1450, 2147483648
  %v1821 = vxor.u32 %v1523, 2147483648
  %v1822 = vxor.u32 %v1596, 2147483648
  %v1823 = vxor.u32 %v1669, 2147483648
  %v1824 = vxor.u32 %v1742, 2147483648
  %v1825 = vxor.u32 %v1815, 2147483648
  %v1826 = vmul.f32 %v1818, 1.442695
  %v1827 = vpow.pop %v1826
  %v1828 = vmul.f32 %v1819, 1.442695
  %v1829 = vpow.pop %v1828
  %v1830 = vmul.f32 %v1820, 1.442695
  %v1831 = vpow.pop %v1830
  %v1832 = vmul.f32 %v1821, 1.442695
  %v1833 = vpow.pop %v1832
  %v1834 = vmul.f32 %v1822, 1.442695
  %v1835 = vpow.pop %v1834
  %v1836 = vmul.f32 %v1823, 1.442695
  %v1837 = vpow.pop %v1836
  %v1838 = vmul.f32 %v1824, 1.442695
  %v1839 = vpow.pop %v1838
  %v1840 = vmul.f32 %v1825, 1.442695
  %v1841 = vpow.pop %v1840
  %v1842 = vadd.f32 %v1827, 1.0
  %v1843 = vadd.f32 %v1829, 1.0
  %v1844 = vadd.f32 %v1831, 1.0
  %v1845 = vadd.f32 %v1833, 1.0
  %v1846 = vadd.f32 %v1835, 1.0
  %v1847 = vadd.f32 %v1837, 1.0
  %v1848 = vadd.f32 %v1839, 1.0
  %v1849 = vadd.f32 %v1841, 1.0
  %v1850 = vrcp.pop %v1842
  %v1851 = vmul.f32 1.0, %v1850
  %v1852 = vrcp.pop %v1843
  %v1853 = vmul.f32 1.0, %v1852
  %v1854 = vrcp.pop %v1844
  %v1855 = vmul.f32 1.0, %v1854
  %v1856 = vrcp.pop %v1845
  %v1857 = vmul.f32 1.0, %v1856
  %v1858 = vrcp.pop %v1846
  %v1859 = vmul.f32 1.0, %v1858
  %v1860 = vrcp.pop %v1847
  %v1861 = vmul.f32 1.0, %v1860
  %v1862 = vrcp.pop %v1848
  %v1863 = vmul.f32 1.0, %v1862
  %v1864 = vrcp.pop %v1849
  %v1865 = vmul.f32 1.0, %v1864
  %1866 = vst.msk [vmem:[%s6] sm:$0x1] %vm47, %v1851
  %1867 = vst.msk [vmem:[%s6 + $0x1] sm:$0x1] %vm47, %v1853
  %1868 = vst.msk [vmem:[%s6 + $0x2] sm:$0x1] %vm47, %v1855
  %1869 = vst.msk [vmem:[%s6 + $0x3] sm:$0x1] %vm47, %v1857
  %1870 = vst.msk [vmem:[%s6 + $0x4] sm:$0x1] %vm47, %v1859
  %1871 = vst.msk [vmem:[%s6 + $0x5] sm:$0x1] %vm47, %v1861
  %1872 = vst.msk [vmem:[%s6 + $0x6] sm:$0x1] %vm47, %v1863
  %1873 = vst.msk [vmem:[%s6 + $0x7] sm:$0x1] %vm47, %v1865
  // Predicated region
  $region26: #{kgcn_forward.3} parent=0 // pred_check
    _
  $region27: #{kgcn_forward.3} parent=0 // pred_check_branch
    %1875 = sbr.rel (0) target = $region29
  $region28: #{kgcn_forward.3} parent=0 // pred_region
    _
  $region29: #{kgcn_forward.3} parent=0 // pred_fallthru
    _
  // Predicated region
  $region30: #{kgcn_forward.3} parent=0 // pred_check
    _
  $region31: #{kgcn_forward.3} parent=0 // pred_check_branch
    %1877 = sbr.rel (0) target = $region33
  $region32: #{kgcn_forward.3} parent=0 // pred_region
    _
  $region33: #{kgcn_forward.3} parent=0 // pred_fallthru
    _

// kernel: kgcn_forward.4
$region0: #{kgcn_forward.4}
  #allocation0 [shape = 'u32[]', space=smem, size = 0x4, offset = 0x4, fixed_abs, tag = 'smem constant byte address 0x4 - core index']
  #allocation1 [shape = 'u32[144,128]{1,0:T(1,128)}', space=vmem, size = 0x12000, scoped, tag = 'internal scratch']
  %s0 = inlined_call_operand.vmem [shape: f32[8,8,32], index: 0, kind: input, shape index: {}]
  %s1 = inlined_call_operand.vmem [shape: f32[8,8,256], index: 1, kind: input, shape index: {}]
  %s2 = inlined_call_operand.vmem [shape: f32[8,8,256], index: 2, kind: input, shape index: {}]
  %s3 = inlined_call_operand.vmem [shape: f32[8,1,32], index: 3, kind: input, shape index: {}]
  %s4 = inlined_call_operand.vmem [shape: f32[32,32], index: 4, kind: input, shape index: {}]
  %s5 = inlined_call_operand.vmem [shape: f32[1,32], index: 5, kind: input, shape index: {}]
  %s6 = inlined_call_operand.vmem [shape: f32[8,8,32], index: 6, kind: output, shape index: {}]
  %s7 = sld [smem:[#allocation0]]
  $region34: #{kgcn_forward.4} parent=0
    _
  %s9 = ssub.s32 1, %s7
  %s10 = scalar_select 0, %s9, %s7
  // Predicated region
  $region2: #{kgcn_forward.4} parent=0 // pred_check
    _
  $region3: #{kgcn_forward.4} parent=0 // pred_check_branch
    %12 = sbr.rel (0) target = $region5
  $region4: #{kgcn_forward.4} parent=0 // pred_region
    _
  $region5: #{kgcn_forward.4} parent=0 // pred_fallthru
    _
  // Predicated region
  $region6: #{kgcn_forward.4} parent=0 // pred_check
    _
  $region7: #{kgcn_forward.4} parent=0 // pred_check_branch
    %14 = sbr.rel (0) target = $region9
  $region8: #{kgcn_forward.4} parent=0 // pred_region
    _
  $region9: #{kgcn_forward.4} parent=0 // pred_fallthru
    _
  // Predicated region
  $region10: #{kgcn_forward.4} parent=0 // pred_check
    _
  $region11: #{kgcn_forward.4} parent=0 // pred_check_branch
    %16 = sbr.rel (0) target = $region13
  $region12: #{kgcn_forward.4} parent=0 // pred_region
    _
  $region13: #{kgcn_forward.4} parent=0 // pred_fallthru
    _
  // Predicated region
  $region14: #{kgcn_forward.4} parent=0 // pred_check
    _
  $region15: #{kgcn_forward.4} parent=0 // pred_check_branch
    %18 = sbr.rel (0) target = $region17
  $region16: #{kgcn_forward.4} parent=0 // pred_region
    _
  $region17: #{kgcn_forward.4} parent=0 // pred_fallthru
    _
  // Predicated region
  $region18: #{kgcn_forward.4} parent=0 // pred_check
    _
  $region19: #{kgcn_forward.4} parent=0 // pred_check_branch
    %20 = sbr.rel (0) target = $region21
  $region20: #{kgcn_forward.4} parent=0 // pred_region
    _
  $region21: #{kgcn_forward.4} parent=0 // pred_fallthru
    _
  // Predicated region
  $region22: #{kgcn_forward.4} parent=0 // pred_check
    _
  $region23: #{kgcn_forward.4} parent=0 // pred_check_branch
    %22 = sbr.rel (0) target = $region25
  $region24: #{kgcn_forward.4} parent=0 // pred_region
    _
  $region25: #{kgcn_forward.4} parent=0 // pred_fallthru
    _
  %v23 = vld [vmem:[%s3] sm:$0x1]
  %v24 = vld [vmem:[%s3 + $0x1] sm:$0x1]
  %v25 = vld [vmem:[%s3 + $0x2] sm:$0x1]
  %v26 = vld [vmem:[%s3 + $0x3] sm:$0x1]
  %v27 = vld [vmem:[%s3 + $0x4] sm:$0x1]
  %v28 = vld [vmem:[%s3 + $0x5] sm:$0x1]
  %v29 = vld [vmem:[%s3 + $0x6] sm:$0x1]
  %v30 = vld [vmem:[%s3 + $0x7] sm:$0x1]
  %v31 = vld [vmem:[%s2] sm:$0xff]
  %v32 = vld [vmem:[%s2 + $0x10] sm:$0xff]
  %v33 = vld [vmem:[%s2 + $0x20] sm:$0xff]
  %v34 = vld [vmem:[%s2 + $0x30] sm:$0xff]
  %v35 = vld [vmem:[%s2 + $0x40] sm:$0xff]
  %v36 = vld [vmem:[%s2 + $0x50] sm:$0xff]
  %v37 = vld [vmem:[%s2 + $0x60] sm:$0xff]
  %v38 = vld [vmem:[%s2 + $0x70] sm:$0xff]
  %v47 = vlaneseq
  %v48 = vshrl.u32 %v47, 7
  %v49 = vsub.s32 0, %v48
  %v50 = vrot.slane %v23, %v49
  %v51 = vlaneseq
  %v52 = vshrl.u32 %v51, 7
  %v53 = vsub.s32 0, %v52
  %v54 = vrot.slane %v24, %v53
  %v55 = vlaneseq
  %v56 = vshrl.u32 %v55, 7
  %v57 = vsub.s32 0, %v56
  %v58 = vrot.slane %v25, %v57
  %v59 = vlaneseq
  %v60 = vshrl.u32 %v59, 7
  %v61 = vsub.s32 0, %v60
  %v62 = vrot.slane %v26, %v61
  %v63 = vlaneseq
  %v64 = vshrl.u32 %v63, 7
  %v65 = vsub.s32 0, %v64
  %v66 = vrot.slane %v27, %v65
  %v67 = vlaneseq
  %v68 = vshrl.u32 %v67, 7
  %v69 = vsub.s32 0, %v68
  %v70 = vrot.slane %v28, %v69
  %v71 = vlaneseq
  %v72 = vshrl.u32 %v71, 7
  %v73 = vsub.s32 0, %v72
  %v74 = vrot.slane %v29, %v73
  %v75 = vlaneseq
  %v76 = vshrl.u32 %v75, 7
  %v77 = vsub.s32 0, %v76
  %v78 = vrot.slane %v30, %v77
  %v87 = vmul.f32 %v50, %v31
  %v88 = vmul.f32 %v54, %v32
  %v89 = vmul.f32 %v58, %v33
  %v90 = vmul.f32 %v62, %v34
  %v91 = vmul.f32 %v66, %v35
  %v92 = vmul.f32 %v70, %v36
  %v93 = vmul.f32 %v74, %v37
  %v94 = vmul.f32 %v78, %v38
  %vm95 = vcmask 261120
  %v96 = vsel %vm95, %v87, 0.0
  %97 = vadd.xlane.f32.xlu0 %v96
  %v98 = vpop.xlane.xlu0 %97
  %v99 = vsel %vm95, %v88, 0.0
  %100 = vadd.xlane.f32.xlu0 %v99
  %v101 = vpop.xlane.xlu0 %100
  %v102 = vsel %vm95, %v89, 0.0
  %103 = vadd.xlane.f32.xlu0 %v102
  %v104 = vpop.xlane.xlu0 %103
  %v105 = vsel %vm95, %v90, 0.0
  %106 = vadd.xlane.f32.xlu0 %v105
  %v107 = vpop.xlane.xlu0 %106
  %v108 = vsel %vm95, %v91, 0.0
  %109 = vadd.xlane.f32.xlu0 %v108
  %v110 = vpop.xlane.xlu0 %109
  %v111 = vsel %vm95, %v92, 0.0
  %112 = vadd.xlane.f32.xlu0 %v111
  %v113 = vpop.xlane.xlu0 %112
  %v114 = vsel %vm95, %v93, 0.0
  %115 = vadd.xlane.f32.xlu0 %v114
  %v116 = vpop.xlane.xlu0 %115
  %v117 = vsel %vm95, %v94, 0.0
  %118 = vadd.xlane.f32.xlu0 %v117
  %v119 = vpop.xlane.xlu0 %118
  %128 = vrot.lane.b32.xlu0 %v31, 96
  %v129 = vpop.permute.xlu0 %128
  %130 = vrot.lane.b32.xlu0 %v32, 96
  %v131 = vpop.permute.xlu0 %130
  %132 = vrot.lane.b32.xlu0 %v33, 96
  %v133 = vpop.permute.xlu0 %132
  %134 = vrot.lane.b32.xlu0 %v34, 96
  %v135 = vpop.permute.xlu0 %134
  %136 = vrot.lane.b32.xlu0 %v35, 96
  %v137 = vpop.permute.xlu0 %136
  %138 = vrot.lane.b32.xlu0 %v36, 96
  %v139 = vpop.permute.xlu0 %138
  %140 = vrot.lane.b32.xlu0 %v37, 96
  %v141 = vpop.permute.xlu0 %140
  %142 = vrot.lane.b32.xlu0 %v38, 96
  %v143 = vpop.permute.xlu0 %142
  %v152 = vmul.f32 %v50, %v129
  %v153 = vmul.f32 %v54, %v131
  %v154 = vmul.f32 %v58, %v133
  %v155 = vmul.f32 %v62, %v135
  %v156 = vmul.f32 %v66, %v137
  %v157 = vmul.f32 %v70, %v139
  %v158 = vmul.f32 %v74, %v141
  %v159 = vmul.f32 %v78, %v143
  %v160 = vsel %vm95, %v152, 0.0
  %161 = vadd.xlane.f32.xlu0 %v160
  %v162 = vpop.xlane.xlu0 %161
  %v163 = vsel %vm95, %v153, 0.0
  %164 = vadd.xlane.f32.xlu0 %v163
  %v165 = vpop.xlane.xlu0 %164
  %v166 = vsel %vm95, %v154, 0.0
  %167 = vadd.xlane.f32.xlu0 %v166
  %v168 = vpop.xlane.xlu0 %167
  %v169 = vsel %vm95, %v155, 0.0
  %170 = vadd.xlane.f32.xlu0 %v169
  %v171 = vpop.xlane.xlu0 %170
  %v172 = vsel %vm95, %v156, 0.0
  %173 = vadd.xlane.f32.xlu0 %v172
  %v174 = vpop.xlane.xlu0 %173
  %v175 = vsel %vm95, %v157, 0.0
  %176 = vadd.xlane.f32.xlu0 %v175
  %v177 = vpop.xlane.xlu0 %176
  %v178 = vsel %vm95, %v158, 0.0
  %179 = vadd.xlane.f32.xlu0 %v178
  %v180 = vpop.xlane.xlu0 %179
  %v181 = vsel %vm95, %v159, 0.0
  %182 = vadd.xlane.f32.xlu0 %v181
  %v183 = vpop.xlane.xlu0 %182
  %184 = vrot.lane.b32.xlu0 %v31, 64
  %v185 = vpop.permute.xlu0 %184
  %186 = vrot.lane.b32.xlu0 %v32, 64
  %v187 = vpop.permute.xlu0 %186
  %188 = vrot.lane.b32.xlu0 %v33, 64
  %v189 = vpop.permute.xlu0 %188
  %190 = vrot.lane.b32.xlu0 %v34, 64
  %v191 = vpop.permute.xlu0 %190
  %192 = vrot.lane.b32.xlu0 %v35, 64
  %v193 = vpop.permute.xlu0 %192
  %194 = vrot.lane.b32.xlu0 %v36, 64
  %v195 = vpop.permute.xlu0 %194
  %196 = vrot.lane.b32.xlu0 %v37, 64
  %v197 = vpop.permute.xlu0 %196
  %198 = vrot.lane.b32.xlu0 %v38, 64
  %v199 = vpop.permute.xlu0 %198
  %v208 = vmul.f32 %v50, %v185
  %v209 = vmul.f32 %v54, %v187
  %v210 = vmul.f32 %v58, %v189
  %v211 = vmul.f32 %v62, %v191
  %v212 = vmul.f32 %v66, %v193
  %v213 = vmul.f32 %v70, %v195
  %v214 = vmul.f32 %v74, %v197
  %v215 = vmul.f32 %v78, %v199
  %v216 = vsel %vm95, %v208, 0.0
  %217 = vadd.xlane.f32.xlu0 %v216
  %v218 = vpop.xlane.xlu0 %217
  %v219 = vsel %vm95, %v209, 0.0
  %220 = vadd.xlane.f32.xlu0 %v219
  %v221 = vpop.xlane.xlu0 %220
  %v222 = vsel %vm95, %v210, 0.0
  %223 = vadd.xlane.f32.xlu0 %v222
  %v224 = vpop.xlane.xlu0 %223
  %v225 = vsel %vm95, %v211, 0.0
  %226 = vadd.xlane.f32.xlu0 %v225
  %v227 = vpop.xlane.xlu0 %226
  %v228 = vsel %vm95, %v212, 0.0
  %229 = vadd.xlane.f32.xlu0 %v228
  %v230 = vpop.xlane.xlu0 %229
  %v231 = vsel %vm95, %v213, 0.0
  %232 = vadd.xlane.f32.xlu0 %v231
  %v233 = vpop.xlane.xlu0 %232
  %v234 = vsel %vm95, %v214, 0.0
  %235 = vadd.xlane.f32.xlu0 %v234
  %v236 = vpop.xlane.xlu0 %235
  %v237 = vsel %vm95, %v215, 0.0
  %238 = vadd.xlane.f32.xlu0 %v237
  %v239 = vpop.xlane.xlu0 %238
  %240 = vrot.lane.b32.xlu0 %v31, 32
  %v241 = vpop.permute.xlu0 %240
  %242 = vrot.lane.b32.xlu0 %v32, 32
  %v243 = vpop.permute.xlu0 %242
  %244 = vrot.lane.b32.xlu0 %v33, 32
  %v245 = vpop.permute.xlu0 %244
  %246 = vrot.lane.b32.xlu0 %v34, 32
  %v247 = vpop.permute.xlu0 %246
  %248 = vrot.lane.b32.xlu0 %v35, 32
  %v249 = vpop.permute.xlu0 %248
  %250 = vrot.lane.b32.xlu0 %v36, 32
  %v251 = vpop.permute.xlu0 %250
  %252 = vrot.lane.b32.xlu0 %v37, 32
  %v253 = vpop.permute.xlu0 %252
  %254 = vrot.lane.b32.xlu0 %v38, 32
  %v255 = vpop.permute.xlu0 %254
  %v264 = vmul.f32 %v50, %v241
  %v265 = vmul.f32 %v54, %v243
  %v266 = vmul.f32 %v58, %v245
  %v267 = vmul.f32 %v62, %v247
  %v268 = vmul.f32 %v66, %v249
  %v269 = vmul.f32 %v70, %v251
  %v270 = vmul.f32 %v74, %v253
  %v271 = vmul.f32 %v78, %v255
  %v272 = vsel %vm95, %v264, 0.0
  %273 = vadd.xlane.f32.xlu0 %v272
  %v274 = vpop.xlane.xlu0 %273
  %v275 = vsel %vm95, %v265, 0.0
  %276 = vadd.xlane.f32.xlu0 %v275
  %v277 = vpop.xlane.xlu0 %276
  %v278 = vsel %vm95, %v266, 0.0
  %279 = vadd.xlane.f32.xlu0 %v278
  %v280 = vpop.xlane.xlu0 %279
  %v281 = vsel %vm95, %v267, 0.0
  %282 = vadd.xlane.f32.xlu0 %v281
  %v283 = vpop.xlane.xlu0 %282
  %v284 = vsel %vm95, %v268, 0.0
  %285 = vadd.xlane.f32.xlu0 %v284
  %v286 = vpop.xlane.xlu0 %285
  %v287 = vsel %vm95, %v269, 0.0
  %288 = vadd.xlane.f32.xlu0 %v287
  %v289 = vpop.xlane.xlu0 %288
  %v290 = vsel %vm95, %v270, 0.0
  %291 = vadd.xlane.f32.xlu0 %v290
  %v292 = vpop.xlane.xlu0 %291
  %v293 = vsel %vm95, %v271, 0.0
  %294 = vadd.xlane.f32.xlu0 %v293
  %v295 = vpop.xlane.xlu0 %294
  %v296 = vld [vmem:[%s2 + $0x8] sm:$0xff]
  %v297 = vld [vmem:[%s2 + $0x18] sm:$0xff]
  %v298 = vld [vmem:[%s2 + $0x28] sm:$0xff]
  %v299 = vld [vmem:[%s2 + $0x38] sm:$0xff]
  %v300 = vld [vmem:[%s2 + $0x48] sm:$0xff]
  %v301 = vld [vmem:[%s2 + $0x58] sm:$0xff]
  %v302 = vld [vmem:[%s2 + $0x68] sm:$0xff]
  %v303 = vld [vmem:[%s2 + $0x78] sm:$0xff]
  %v304 = vmul.f32 %v50, %v296
  %v305 = vmul.f32 %v54, %v297
  %v306 = vmul.f32 %v58, %v298
  %v307 = vmul.f32 %v62, %v299
  %v308 = vmul.f32 %v66, %v300
  %v309 = vmul.f32 %v70, %v301
  %v310 = vmul.f32 %v74, %v302
  %v311 = vmul.f32 %v78, %v303
  %v312 = vsel %vm95, %v304, 0.0
  %313 = vadd.xlane.f32.xlu0 %v312
  %v314 = vpop.xlane.xlu0 %313
  %v315 = vsel %vm95, %v305, 0.0
  %316 = vadd.xlane.f32.xlu0 %v315
  %v317 = vpop.xlane.xlu0 %316
  %v318 = vsel %vm95, %v306, 0.0
  %319 = vadd.xlane.f32.xlu0 %v318
  %v320 = vpop.xlane.xlu0 %319
  %v321 = vsel %vm95, %v307, 0.0
  %322 = vadd.xlane.f32.xlu0 %v321
  %v323 = vpop.xlane.xlu0 %322
  %v324 = vsel %vm95, %v308, 0.0
  %325 = vadd.xlane.f32.xlu0 %v324
  %v326 = vpop.xlane.xlu0 %325
  %v327 = vsel %vm95, %v309, 0.0
  %328 = vadd.xlane.f32.xlu0 %v327
  %v329 = vpop.xlane.xlu0 %328
  %v330 = vsel %vm95, %v310, 0.0
  %331 = vadd.xlane.f32.xlu0 %v330
  %v332 = vpop.xlane.xlu0 %331
  %v333 = vsel %vm95, %v311, 0.0
  %334 = vadd.xlane.f32.xlu0 %v333
  %v335 = vpop.xlane.xlu0 %334
  %344 = vrot.lane.b32.xlu0 %v296, 96
  %v345 = vpop.permute.xlu0 %344
  %346 = vrot.lane.b32.xlu0 %v297, 96
  %v347 = vpop.permute.xlu0 %346
  %348 = vrot.lane.b32.xlu0 %v298, 96
  %v349 = vpop.permute.xlu0 %348
  %350 = vrot.lane.b32.xlu0 %v299, 96
  %v351 = vpop.permute.xlu0 %350
  %352 = vrot.lane.b32.xlu0 %v300, 96
  %v353 = vpop.permute.xlu0 %352
  %354 = vrot.lane.b32.xlu0 %v301, 96
  %v355 = vpop.permute.xlu0 %354
  %356 = vrot.lane.b32.xlu0 %v302, 96
  %v357 = vpop.permute.xlu0 %356
  %358 = vrot.lane.b32.xlu0 %v303, 96
  %v359 = vpop.permute.xlu0 %358
  %v368 = vmul.f32 %v50, %v345
  %v369 = vmul.f32 %v54, %v347
  %v370 = vmul.f32 %v58, %v349
  %v371 = vmul.f32 %v62, %v351
  %v372 = vmul.f32 %v66, %v353
  %v373 = vmul.f32 %v70, %v355
  %v374 = vmul.f32 %v74, %v357
  %v375 = vmul.f32 %v78, %v359
  %v376 = vsel %vm95, %v368, 0.0
  %377 = vadd.xlane.f32.xlu0 %v376
  %v378 = vpop.xlane.xlu0 %377
  %v379 = vsel %vm95, %v369, 0.0
  %380 = vadd.xlane.f32.xlu0 %v379
  %v381 = vpop.xlane.xlu0 %380
  %v382 = vsel %vm95, %v370, 0.0
  %383 = vadd.xlane.f32.xlu0 %v382
  %v384 = vpop.xlane.xlu0 %383
  %v385 = vsel %vm95, %v371, 0.0
  %386 = vadd.xlane.f32.xlu0 %v385
  %v387 = vpop.xlane.xlu0 %386
  %v388 = vsel %vm95, %v372, 0.0
  %389 = vadd.xlane.f32.xlu0 %v388
  %v390 = vpop.xlane.xlu0 %389
  %v391 = vsel %vm95, %v373, 0.0
  %392 = vadd.xlane.f32.xlu0 %v391
  %v393 = vpop.xlane.xlu0 %392
  %v394 = vsel %vm95, %v374, 0.0
  %395 = vadd.xlane.f32.xlu0 %v394
  %v396 = vpop.xlane.xlu0 %395
  %v397 = vsel %vm95, %v375, 0.0
  %398 = vadd.xlane.f32.xlu0 %v397
  %v399 = vpop.xlane.xlu0 %398
  %400 = vrot.lane.b32.xlu0 %v296, 64
  %v401 = vpop.permute.xlu0 %400
  %402 = vrot.lane.b32.xlu0 %v297, 64
  %v403 = vpop.permute.xlu0 %402
  %404 = vrot.lane.b32.xlu0 %v298, 64
  %v405 = vpop.permute.xlu0 %404
  %406 = vrot.lane.b32.xlu0 %v299, 64
  %v407 = vpop.permute.xlu0 %406
  %408 = vrot.lane.b32.xlu0 %v300, 64
  %v409 = vpop.permute.xlu0 %408
  %410 = vrot.lane.b32.xlu0 %v301, 64
  %v411 = vpop.permute.xlu0 %410
  %412 = vrot.lane.b32.xlu0 %v302, 64
  %v413 = vpop.permute.xlu0 %412
  %414 = vrot.lane.b32.xlu0 %v303, 64
  %v415 = vpop.permute.xlu0 %414
  %v424 = vmul.f32 %v50, %v401
  %v425 = vmul.f32 %v54, %v403
  %v426 = vmul.f32 %v58, %v405
  %v427 = vmul.f32 %v62, %v407
  %v428 = vmul.f32 %v66, %v409
  %v429 = vmul.f32 %v70, %v411
  %v430 = vmul.f32 %v74, %v413
  %v431 = vmul.f32 %v78, %v415
  %v432 = vsel %vm95, %v424, 0.0
  %433 = vadd.xlane.f32.xlu0 %v432
  %v434 = vpop.xlane.xlu0 %433
  %v435 = vsel %vm95, %v425, 0.0
  %436 = vadd.xlane.f32.xlu0 %v435
  %v437 = vpop.xlane.xlu0 %436
  %v438 = vsel %vm95, %v426, 0.0
  %439 = vadd.xlane.f32.xlu0 %v438
  %v440 = vpop.xlane.xlu0 %439
  %v441 = vsel %vm95, %v427, 0.0
  %442 = vadd.xlane.f32.xlu0 %v441
  %v443 = vpop.xlane.xlu0 %442
  %v444 = vsel %vm95, %v428, 0.0
  %445 = vadd.xlane.f32.xlu0 %v444
  %v446 = vpop.xlane.xlu0 %445
  %v447 = vsel %vm95, %v429, 0.0
  %448 = vadd.xlane.f32.xlu0 %v447
  %v449 = vpop.xlane.xlu0 %448
  %v450 = vsel %vm95, %v430, 0.0
  %451 = vadd.xlane.f32.xlu0 %v450
  %v452 = vpop.xlane.xlu0 %451
  %v453 = vsel %vm95, %v431, 0.0
  %454 = vadd.xlane.f32.xlu0 %v453
  %v455 = vpop.xlane.xlu0 %454
  %456 = vrot.lane.b32.xlu0 %v296, 32
  %v457 = vpop.permute.xlu0 %456
  %458 = vrot.lane.b32.xlu0 %v297, 32
  %v459 = vpop.permute.xlu0 %458
  %460 = vrot.lane.b32.xlu0 %v298, 32
  %v461 = vpop.permute.xlu0 %460
  %462 = vrot.lane.b32.xlu0 %v299, 32
  %v463 = vpop.permute.xlu0 %462
  %464 = vrot.lane.b32.xlu0 %v300, 32
  %v465 = vpop.permute.xlu0 %464
  %466 = vrot.lane.b32.xlu0 %v301, 32
  %v467 = vpop.permute.xlu0 %466
  %468 = vrot.lane.b32.xlu0 %v302, 32
  %v469 = vpop.permute.xlu0 %468
  %470 = vrot.lane.b32.xlu0 %v303, 32
  %v471 = vpop.permute.xlu0 %470
  %v480 = vmul.f32 %v50, %v457
  %v481 = vmul.f32 %v54, %v459
  %v482 = vmul.f32 %v58, %v461
  %v483 = vmul.f32 %v62, %v463
  %v484 = vmul.f32 %v66, %v465
  %v485 = vmul.f32 %v70, %v467
  %v486 = vmul.f32 %v74, %v469
  %v487 = vmul.f32 %v78, %v471
  %v488 = vsel %vm95, %v480, 0.0
  %489 = vadd.xlane.f32.xlu0 %v488
  %v490 = vpop.xlane.xlu0 %489
  %v491 = vsel %vm95, %v481, 0.0
  %492 = vadd.xlane.f32.xlu0 %v491
  %v493 = vpop.xlane.xlu0 %492
  %v494 = vsel %vm95, %v482, 0.0
  %495 = vadd.xlane.f32.xlu0 %v494
  %v496 = vpop.xlane.xlu0 %495
  %v497 = vsel %vm95, %v483, 0.0
  %498 = vadd.xlane.f32.xlu0 %v497
  %v499 = vpop.xlane.xlu0 %498
  %v500 = vsel %vm95, %v484, 0.0
  %501 = vadd.xlane.f32.xlu0 %v500
  %v502 = vpop.xlane.xlu0 %501
  %v503 = vsel %vm95, %v485, 0.0
  %504 = vadd.xlane.f32.xlu0 %v503
  %v505 = vpop.xlane.xlu0 %504
  %v506 = vsel %vm95, %v486, 0.0
  %507 = vadd.xlane.f32.xlu0 %v506
  %v508 = vpop.xlane.xlu0 %507
  %v509 = vsel %vm95, %v487, 0.0
  %510 = vadd.xlane.f32.xlu0 %v509
  %v511 = vpop.xlane.xlu0 %510
  %v512 = vmax.f32 %v98, %v162
  %v513 = vmax.f32 %v101, %v165
  %v514 = vmax.f32 %v104, %v168
  %v515 = vmax.f32 %v107, %v171
  %v516 = vmax.f32 %v110, %v174
  %v517 = vmax.f32 %v113, %v177
  %v518 = vmax.f32 %v116, %v180
  %v519 = vmax.f32 %v119, %v183
  %v520 = vmax.f32 %v512, %v218
  %v521 = vmax.f32 %v513, %v221
  %v522 = vmax.f32 %v514, %v224
  %v523 = vmax.f32 %v515, %v227
  %v524 = vmax.f32 %v516, %v230
  %v525 = vmax.f32 %v517, %v233
  %v526 = vmax.f32 %v518, %v236
  %v527 = vmax.f32 %v519, %v239
  %v528 = vmax.f32 %v520, %v274
  %v529 = vmax.f32 %v521, %v277
  %v530 = vmax.f32 %v522, %v280
  %v531 = vmax.f32 %v523, %v283
  %v532 = vmax.f32 %v524, %v286
  %v533 = vmax.f32 %v525, %v289
  %v534 = vmax.f32 %v526, %v292
  %v535 = vmax.f32 %v527, %v295
  %v536 = vmax.f32 %v528, %v314
  %v537 = vmax.f32 %v529, %v317
  %v538 = vmax.f32 %v530, %v320
  %v539 = vmax.f32 %v531, %v323
  %v540 = vmax.f32 %v532, %v326
  %v541 = vmax.f32 %v533, %v329
  %v542 = vmax.f32 %v534, %v332
  %v543 = vmax.f32 %v535, %v335
  %v544 = vmax.f32 %v536, %v378
  %v545 = vmax.f32 %v537, %v381
  %v546 = vmax.f32 %v538, %v384
  %v547 = vmax.f32 %v539, %v387
  %v548 = vmax.f32 %v540, %v390
  %v549 = vmax.f32 %v541, %v393
  %v550 = vmax.f32 %v542, %v396
  %v551 = vmax.f32 %v543, %v399
  %v552 = vmax.f32 %v544, %v434
  %v553 = vmax.f32 %v545, %v437
  %v554 = vmax.f32 %v546, %v440
  %v555 = vmax.f32 %v547, %v443
  %v556 = vmax.f32 %v548, %v446
  %v557 = vmax.f32 %v549, %v449
  %v558 = vmax.f32 %v550, %v452
  %v559 = vmax.f32 %v551, %v455
  %v560 = vmax.f32 %v552, %v490
  %v561 = vmax.f32 %v553, %v493
  %v562 = vmax.f32 %v554, %v496
  %v563 = vmax.f32 %v555, %v499
  %v564 = vmax.f32 %v556, %v502
  %v565 = vmax.f32 %v557, %v505
  %v566 = vmax.f32 %v558, %v508
  %v567 = vmax.f32 %v559, %v511
  %v568 = vsub.f32 %v98, %v560
  %v569 = vsub.f32 %v101, %v561
  %v570 = vsub.f32 %v104, %v562
  %v571 = vsub.f32 %v107, %v563
  %v572 = vsub.f32 %v110, %v564
  %v573 = vsub.f32 %v113, %v565
  %v574 = vsub.f32 %v116, %v566
  %v575 = vsub.f32 %v119, %v567
  %v576 = vmul.f32 %v568, 1.442695
  %v577 = vpow.pop %v576
  %v578 = vmul.f32 %v569, 1.442695
  %v579 = vpow.pop %v578
  %v580 = vmul.f32 %v570, 1.442695
  %v581 = vpow.pop %v580
  %v582 = vmul.f32 %v571, 1.442695
  %v583 = vpow.pop %v582
  %v584 = vmul.f32 %v572, 1.442695
  %v585 = vpow.pop %v584
  %v586 = vmul.f32 %v573, 1.442695
  %v587 = vpow.pop %v586
  %v588 = vmul.f32 %v574, 1.442695
  %v589 = vpow.pop %v588
  %v590 = vmul.f32 %v575, 1.442695
  %v591 = vpow.pop %v590
  %v592 = vsub.f32 %v162, %v560
  %v593 = vsub.f32 %v165, %v561
  %v594 = vsub.f32 %v168, %v562
  %v595 = vsub.f32 %v171, %v563
  %v596 = vsub.f32 %v174, %v564
  %v597 = vsub.f32 %v177, %v565
  %v598 = vsub.f32 %v180, %v566
  %v599 = vsub.f32 %v183, %v567
  %v600 = vmul.f32 %v592, 1.442695
  %v601 = vpow.pop %v600
  %v602 = vmul.f32 %v593, 1.442695
  %v603 = vpow.pop %v602
  %v604 = vmul.f32 %v594, 1.442695
  %v605 = vpow.pop %v604
  %v606 = vmul.f32 %v595, 1.442695
  %v607 = vpow.pop %v606
  %v608 = vmul.f32 %v596, 1.442695
  %v609 = vpow.pop %v608
  %v610 = vmul.f32 %v597, 1.442695
  %v611 = vpow.pop %v610
  %v612 = vmul.f32 %v598, 1.442695
  %v613 = vpow.pop %v612
  %v614 = vmul.f32 %v599, 1.442695
  %v615 = vpow.pop %v614
  %v616 = vsub.f32 %v218, %v560
  %v617 = vsub.f32 %v221, %v561
  %v618 = vsub.f32 %v224, %v562
  %v619 = vsub.f32 %v227, %v563
  %v620 = vsub.f32 %v230, %v564
  %v621 = vsub.f32 %v233, %v565
  %v622 = vsub.f32 %v236, %v566
  %v623 = vsub.f32 %v239, %v567
  %v624 = vmul.f32 %v616, 1.442695
  %v625 = vpow.pop %v624
  %v626 = vmul.f32 %v617, 1.442695
  %v627 = vpow.pop %v626
  %v628 = vmul.f32 %v618, 1.442695
  %v629 = vpow.pop %v628
  %v630 = vmul.f32 %v619, 1.442695
  %v631 = vpow.pop %v630
  %v632 = vmul.f32 %v620, 1.442695
  %v633 = vpow.pop %v632
  %v634 = vmul.f32 %v621, 1.442695
  %v635 = vpow.pop %v634
  %v636 = vmul.f32 %v622, 1.442695
  %v637 = vpow.pop %v636
  %v638 = vmul.f32 %v623, 1.442695
  %v639 = vpow.pop %v638
  %v640 = vsub.f32 %v274, %v560
  %v641 = vsub.f32 %v277, %v561
  %v642 = vsub.f32 %v280, %v562
  %v643 = vsub.f32 %v283, %v563
  %v644 = vsub.f32 %v286, %v564
  %v645 = vsub.f32 %v289, %v565
  %v646 = vsub.f32 %v292, %v566
  %v647 = vsub.f32 %v295, %v567
  %v648 = vmul.f32 %v640, 1.442695
  %v649 = vpow.pop %v648
  %v650 = vmul.f32 %v641, 1.442695
  %v651 = vpow.pop %v650
  %v652 = vmul.f32 %v642, 1.442695
  %v653 = vpow.pop %v652
  %v654 = vmul.f32 %v643, 1.442695
  %v655 = vpow.pop %v654
  %v656 = vmul.f32 %v644, 1.442695
  %v657 = vpow.pop %v656
  %v658 = vmul.f32 %v645, 1.442695
  %v659 = vpow.pop %v658
  %v660 = vmul.f32 %v646, 1.442695
  %v661 = vpow.pop %v660
  %v662 = vmul.f32 %v647, 1.442695
  %v663 = vpow.pop %v662
  %v664 = vsub.f32 %v314, %v560
  %v665 = vsub.f32 %v317, %v561
  %v666 = vsub.f32 %v320, %v562
  %v667 = vsub.f32 %v323, %v563
  %v668 = vsub.f32 %v326, %v564
  %v669 = vsub.f32 %v329, %v565
  %v670 = vsub.f32 %v332, %v566
  %v671 = vsub.f32 %v335, %v567
  %v672 = vmul.f32 %v664, 1.442695
  %v673 = vpow.pop %v672
  %v674 = vmul.f32 %v665, 1.442695
  %v675 = vpow.pop %v674
  %v676 = vmul.f32 %v666, 1.442695
  %v677 = vpow.pop %v676
  %v678 = vmul.f32 %v667, 1.442695
  %v679 = vpow.pop %v678
  %v680 = vmul.f32 %v668, 1.442695
  %v681 = vpow.pop %v680
  %v682 = vmul.f32 %v669, 1.442695
  %v683 = vpow.pop %v682
  %v684 = vmul.f32 %v670, 1.442695
  %v685 = vpow.pop %v684
  %v686 = vmul.f32 %v671, 1.442695
  %v687 = vpow.pop %v686
  %v688 = vsub.f32 %v378, %v560
  %v689 = vsub.f32 %v381, %v561
  %v690 = vsub.f32 %v384, %v562
  %v691 = vsub.f32 %v387, %v563
  %v692 = vsub.f32 %v390, %v564
  %v693 = vsub.f32 %v393, %v565
  %v694 = vsub.f32 %v396, %v566
  %v695 = vsub.f32 %v399, %v567
  %v696 = vmul.f32 %v688, 1.442695
  %v697 = vpow.pop %v696
  %v698 = vmul.f32 %v689, 1.442695
  %v699 = vpow.pop %v698
  %v700 = vmul.f32 %v690, 1.442695
  %v701 = vpow.pop %v700
  %v702 = vmul.f32 %v691, 1.442695
  %v703 = vpow.pop %v702
  %v704 = vmul.f32 %v692, 1.442695
  %v705 = vpow.pop %v704
  %v706 = vmul.f32 %v693, 1.442695
  %v707 = vpow.pop %v706
  %v708 = vmul.f32 %v694, 1.442695
  %v709 = vpow.pop %v708
  %v710 = vmul.f32 %v695, 1.442695
  %v711 = vpow.pop %v710
  %v712 = vsub.f32 %v434, %v560
  %v713 = vsub.f32 %v437, %v561
  %v714 = vsub.f32 %v440, %v562
  %v715 = vsub.f32 %v443, %v563
  %v716 = vsub.f32 %v446, %v564
  %v717 = vsub.f32 %v449, %v565
  %v718 = vsub.f32 %v452, %v566
  %v719 = vsub.f32 %v455, %v567
  %v720 = vmul.f32 %v712, 1.442695
  %v721 = vpow.pop %v720
  %v722 = vmul.f32 %v713, 1.442695
  %v723 = vpow.pop %v722
  %v724 = vmul.f32 %v714, 1.442695
  %v725 = vpow.pop %v724
  %v726 = vmul.f32 %v715, 1.442695
  %v727 = vpow.pop %v726
  %v728 = vmul.f32 %v716, 1.442695
  %v729 = vpow.pop %v728
  %v730 = vmul.f32 %v717, 1.442695
  %v731 = vpow.pop %v730
  %v732 = vmul.f32 %v718, 1.442695
  %v733 = vpow.pop %v732
  %v734 = vmul.f32 %v719, 1.442695
  %v735 = vpow.pop %v734
  %v736 = vsub.f32 %v490, %v560
  %v737 = vsub.f32 %v493, %v561
  %v738 = vsub.f32 %v496, %v562
  %v739 = vsub.f32 %v499, %v563
  %v740 = vsub.f32 %v502, %v564
  %v741 = vsub.f32 %v505, %v565
  %v742 = vsub.f32 %v508, %v566
  %v743 = vsub.f32 %v511, %v567
  %v744 = vmul.f32 %v736, 1.442695
  %v745 = vpow.pop %v744
  %v746 = vmul.f32 %v737, 1.442695
  %v747 = vpow.pop %v746
  %v748 = vmul.f32 %v738, 1.442695
  %v749 = vpow.pop %v748
  %v750 = vmul.f32 %v739, 1.442695
  %v751 = vpow.pop %v750
  %v752 = vmul.f32 %v740, 1.442695
  %v753 = vpow.pop %v752
  %v754 = vmul.f32 %v741, 1.442695
  %v755 = vpow.pop %v754
  %v756 = vmul.f32 %v742, 1.442695
  %v757 = vpow.pop %v756
  %v758 = vmul.f32 %v743, 1.442695
  %v759 = vpow.pop %v758
  %v760 = vadd.f32 %v577, %v601
  %v761 = vadd.f32 %v579, %v603
  %v762 = vadd.f32 %v581, %v605
  %v763 = vadd.f32 %v583, %v607
  %v764 = vadd.f32 %v585, %v609
  %v765 = vadd.f32 %v587, %v611
  %v766 = vadd.f32 %v589, %v613
  %v767 = vadd.f32 %v591, %v615
  %v768 = vadd.f32 %v760, %v625
  %v769 = vadd.f32 %v761, %v627
  %v770 = vadd.f32 %v762, %v629
  %v771 = vadd.f32 %v763, %v631
  %v772 = vadd.f32 %v764, %v633
  %v773 = vadd.f32 %v765, %v635
  %v774 = vadd.f32 %v766, %v637
  %v775 = vadd.f32 %v767, %v639
  %v776 = vadd.f32 %v768, %v649
  %v777 = vadd.f32 %v769, %v651
  %v778 = vadd.f32 %v770, %v653
  %v779 = vadd.f32 %v771, %v655
  %v780 = vadd.f32 %v772, %v657
  %v781 = vadd.f32 %v773, %v659
  %v782 = vadd.f32 %v774, %v661
  %v783 = vadd.f32 %v775, %v663
  %v784 = vadd.f32 %v776, %v673
  %v785 = vadd.f32 %v777, %v675
  %v786 = vadd.f32 %v778, %v677
  %v787 = vadd.f32 %v779, %v679
  %v788 = vadd.f32 %v780, %v681
  %v789 = vadd.f32 %v781, %v683
  %v790 = vadd.f32 %v782, %v685
  %v791 = vadd.f32 %v783, %v687
  %v792 = vadd.f32 %v784, %v697
  %v793 = vadd.f32 %v785, %v699
  %v794 = vadd.f32 %v786, %v701
  %v795 = vadd.f32 %v787, %v703
  %v796 = vadd.f32 %v788, %v705
  %v797 = vadd.f32 %v789, %v707
  %v798 = vadd.f32 %v790, %v709
  %v799 = vadd.f32 %v791, %v711
  %v800 = vadd.f32 %v792, %v721
  %v801 = vadd.f32 %v793, %v723
  %v802 = vadd.f32 %v794, %v725
  %v803 = vadd.f32 %v795, %v727
  %v804 = vadd.f32 %v796, %v729
  %v805 = vadd.f32 %v797, %v731
  %v806 = vadd.f32 %v798, %v733
  %v807 = vadd.f32 %v799, %v735
  %v808 = vadd.f32 %v800, %v745
  %v809 = vadd.f32 %v801, %v747
  %v810 = vadd.f32 %v802, %v749
  %v811 = vadd.f32 %v803, %v751
  %v812 = vadd.f32 %v804, %v753
  %v813 = vadd.f32 %v805, %v755
  %v814 = vadd.f32 %v806, %v757
  %v815 = vadd.f32 %v807, %v759
  %v816 = vrcp.pop %v808
  %v817 = vrcp.pop %v809
  %v818 = vrcp.pop %v810
  %v819 = vrcp.pop %v811
  %v820 = vrcp.pop %v812
  %v821 = vrcp.pop %v813
  %v822 = vrcp.pop %v814
  %v823 = vrcp.pop %v815
  %v824 = vld [vmem:[%s0] sm:$0xff]
  %v825 = vld [vmem:[%s0 + $0x8] sm:$0xff]
  %v826 = vld [vmem:[%s0 + $0x10] sm:$0xff]
  %v827 = vld [vmem:[%s0 + $0x18] sm:$0xff]
  %v828 = vld [vmem:[%s0 + $0x20] sm:$0xff]
  %v829 = vld [vmem:[%s0 + $0x28] sm:$0xff]
  %v830 = vld [vmem:[%s0 + $0x30] sm:$0xff]
  %v831 = vld [vmem:[%s0 + $0x38] sm:$0xff]
  %v832 = vld [vmem:[%s1] sm:$0xff]
  %v833 = vld [vmem:[%s1 + $0x10] sm:$0xff]
  %v834 = vld [vmem:[%s1 + $0x20] sm:$0xff]
  %v835 = vld [vmem:[%s1 + $0x30] sm:$0xff]
  %v836 = vld [vmem:[%s1 + $0x40] sm:$0xff]
  %v837 = vld [vmem:[%s1 + $0x50] sm:$0xff]
  %v838 = vld [vmem:[%s1 + $0x60] sm:$0xff]
  %v839 = vld [vmem:[%s1 + $0x70] sm:$0xff]
  %v840 = vmul.f32 %v577, %v816
  %v841 = vmul.f32 %v579, %v817
  %v842 = vmul.f32 %v581, %v818
  %v843 = vmul.f32 %v583, %v819
  %v844 = vmul.f32 %v585, %v820
  %v845 = vmul.f32 %v587, %v821
  %v846 = vmul.f32 %v589, %v822
  %v847 = vmul.f32 %v591, %v823
  %v848 = vmul.f32 %v840, %v832
  %v849 = vmul.f32 %v841, %v833
  %v850 = vmul.f32 %v842, %v834
  %v851 = vmul.f32 %v843, %v835
  %v852 = vmul.f32 %v844, %v836
  %v853 = vmul.f32 %v845, %v837
  %v854 = vmul.f32 %v846, %v838
  %v855 = vmul.f32 %v847, %v839
  %v856 = vadd.f32 %v824, %v848
  %v857 = vadd.f32 %v825, %v849
  %v858 = vadd.f32 %v826, %v850
  %v859 = vadd.f32 %v827, %v851
  %v860 = vadd.f32 %v828, %v852
  %v861 = vadd.f32 %v829, %v853
  %v862 = vadd.f32 %v830, %v854
  %v863 = vadd.f32 %v831, %v855
  %v864 = vmul.f32 %v601, %v816
  %v865 = vmul.f32 %v603, %v817
  %v866 = vmul.f32 %v605, %v818
  %v867 = vmul.f32 %v607, %v819
  %v868 = vmul.f32 %v609, %v820
  %v869 = vmul.f32 %v611, %v821
  %v870 = vmul.f32 %v613, %v822
  %v871 = vmul.f32 %v615, %v823
  %v872 = vmul.f32 %v864, %v832
  %v873 = vmul.f32 %v865, %v833
  %v874 = vmul.f32 %v866, %v834
  %v875 = vmul.f32 %v867, %v835
  %v876 = vmul.f32 %v868, %v836
  %v877 = vmul.f32 %v869, %v837
  %v878 = vmul.f32 %v870, %v838
  %v879 = vmul.f32 %v871, %v839
  %888 = vrot.lane.b32.xlu0 %v872, 96
  %v889 = vpop.permute.xlu0 %888
  %890 = vrot.lane.b32.xlu0 %v873, 96
  %v891 = vpop.permute.xlu0 %890
  %892 = vrot.lane.b32.xlu0 %v874, 96
  %v893 = vpop.permute.xlu0 %892
  %894 = vrot.lane.b32.xlu0 %v875, 96
  %v895 = vpop.permute.xlu0 %894
  %896 = vrot.lane.b32.xlu0 %v876, 96
  %v897 = vpop.permute.xlu0 %896
  %898 = vrot.lane.b32.xlu0 %v877, 96
  %v899 = vpop.permute.xlu0 %898
  %900 = vrot.lane.b32.xlu0 %v878, 96
  %v901 = vpop.permute.xlu0 %900
  %902 = vrot.lane.b32.xlu0 %v879, 96
  %v903 = vpop.permute.xlu0 %902
  %v912 = vadd.f32 %v856, %v889
  %v913 = vadd.f32 %v857, %v891
  %v914 = vadd.f32 %v858, %v893
  %v915 = vadd.f32 %v859, %v895
  %v916 = vadd.f32 %v860, %v897
  %v917 = vadd.f32 %v861, %v899
  %v918 = vadd.f32 %v862, %v901
  %v919 = vadd.f32 %v863, %v903
  %v920 = vmul.f32 %v625, %v816
  %v921 = vmul.f32 %v627, %v817
  %v922 = vmul.f32 %v629, %v818
  %v923 = vmul.f32 %v631, %v819
  %v924 = vmul.f32 %v633, %v820
  %v925 = vmul.f32 %v635, %v821
  %v926 = vmul.f32 %v637, %v822
  %v927 = vmul.f32 %v639, %v823
  %v928 = vmul.f32 %v920, %v832
  %v929 = vmul.f32 %v921, %v833
  %v930 = vmul.f32 %v922, %v834
  %v931 = vmul.f32 %v923, %v835
  %v932 = vmul.f32 %v924, %v836
  %v933 = vmul.f32 %v925, %v837
  %v934 = vmul.f32 %v926, %v838
  %v935 = vmul.f32 %v927, %v839
  %944 = vrot.lane.b32.xlu0 %v928, 64
  %v945 = vpop.permute.xlu0 %944
  %946 = vrot.lane.b32.xlu0 %v929, 64
  %v947 = vpop.permute.xlu0 %946
  %948 = vrot.lane.b32.xlu0 %v930, 64
  %v949 = vpop.permute.xlu0 %948
  %950 = vrot.lane.b32.xlu0 %v931, 64
  %v951 = vpop.permute.xlu0 %950
  %952 = vrot.lane.b32.xlu0 %v932, 64
  %v953 = vpop.permute.xlu0 %952
  %954 = vrot.lane.b32.xlu0 %v933, 64
  %v955 = vpop.permute.xlu0 %954
  %956 = vrot.lane.b32.xlu0 %v934, 64
  %v957 = vpop.permute.xlu0 %956
  %958 = vrot.lane.b32.xlu0 %v935, 64
  %v959 = vpop.permute.xlu0 %958
  %v968 = vadd.f32 %v912, %v945
  %v969 = vadd.f32 %v913, %v947
  %v970 = vadd.f32 %v914, %v949
  %v971 = vadd.f32 %v915, %v951
  %v972 = vadd.f32 %v916, %v953
  %v973 = vadd.f32 %v917, %v955
  %v974 = vadd.f32 %v918, %v957
  %v975 = vadd.f32 %v919, %v959
  %v976 = vmul.f32 %v649, %v816
  %v977 = vmul.f32 %v651, %v817
  %v978 = vmul.f32 %v653, %v818
  %v979 = vmul.f32 %v655, %v819
  %v980 = vmul.f32 %v657, %v820
  %v981 = vmul.f32 %v659, %v821
  %v982 = vmul.f32 %v661, %v822
  %v983 = vmul.f32 %v663, %v823
  %v984 = vmul.f32 %v976, %v832
  %v985 = vmul.f32 %v977, %v833
  %v986 = vmul.f32 %v978, %v834
  %v987 = vmul.f32 %v979, %v835
  %v988 = vmul.f32 %v980, %v836
  %v989 = vmul.f32 %v981, %v837
  %v990 = vmul.f32 %v982, %v838
  %v991 = vmul.f32 %v983, %v839
  %1000 = vrot.lane.b32.xlu0 %v984, 32
  %v1001 = vpop.permute.xlu0 %1000
  %1002 = vrot.lane.b32.xlu0 %v985, 32
  %v1003 = vpop.permute.xlu0 %1002
  %1004 = vrot.lane.b32.xlu0 %v986, 32
  %v1005 = vpop.permute.xlu0 %1004
  %1006 = vrot.lane.b32.xlu0 %v987, 32
  %v1007 = vpop.permute.xlu0 %1006
  %1008 = vrot.lane.b32.xlu0 %v988, 32
  %v1009 = vpop.permute.xlu0 %1008
  %1010 = vrot.lane.b32.xlu0 %v989, 32
  %v1011 = vpop.permute.xlu0 %1010
  %1012 = vrot.lane.b32.xlu0 %v990, 32
  %v1013 = vpop.permute.xlu0 %1012
  %1014 = vrot.lane.b32.xlu0 %v991, 32
  %v1015 = vpop.permute.xlu0 %1014
  %v1024 = vadd.f32 %v968, %v1001
  %v1025 = vadd.f32 %v969, %v1003
  %v1026 = vadd.f32 %v970, %v1005
  %v1027 = vadd.f32 %v971, %v1007
  %v1028 = vadd.f32 %v972, %v1009
  %v1029 = vadd.f32 %v973, %v1011
  %v1030 = vadd.f32 %v974, %v1013
  %v1031 = vadd.f32 %v975, %v1015
  %v1032 = vld [vmem:[%s1 + $0x8] sm:$0xff]
  %v1033 = vld [vmem:[%s1 + $0x18] sm:$0xff]
  %v1034 = vld [vmem:[%s1 + $0x28] sm:$0xff]
  %v1035 = vld [vmem:[%s1 + $0x38] sm:$0xff]
  %v1036 = vld [vmem:[%s1 + $0x48] sm:$0xff]
  %v1037 = vld [vmem:[%s1 + $0x58] sm:$0xff]
  %v1038 = vld [vmem:[%s1 + $0x68] sm:$0xff]
  %v1039 = vld [vmem:[%s1 + $0x78] sm:$0xff]
  %v1040 = vmul.f32 %v673, %v816
  %v1041 = vmul.f32 %v675, %v817
  %v1042 = vmul.f32 %v677, %v818
  %v1043 = vmul.f32 %v679, %v819
  %v1044 = vmul.f32 %v681, %v820
  %v1045 = vmul.f32 %v683, %v821
  %v1046 = vmul.f32 %v685, %v822
  %v1047 = vmul.f32 %v687, %v823
  %v1048 = vmul.f32 %v1040, %v1032
  %v1049 = vmul.f32 %v1041, %v1033
  %v1050 = vmul.f32 %v1042, %v1034
  %v1051 = vmul.f32 %v1043, %v1035
  %v1052 = vmul.f32 %v1044, %v1036
  %v1053 = vmul.f32 %v1045, %v1037
  %v1054 = vmul.f32 %v1046, %v1038
  %v1055 = vmul.f32 %v1047, %v1039
  %v1056 = vadd.f32 %v1024, %v1048
  %v1057 = vadd.f32 %v1025, %v1049
  %v1058 = vadd.f32 %v1026, %v1050
  %v1059 = vadd.f32 %v1027, %v1051
  %v1060 = vadd.f32 %v1028, %v1052
  %v1061 = vadd.f32 %v1029, %v1053
  %v1062 = vadd.f32 %v1030, %v1054
  %v1063 = vadd.f32 %v1031, %v1055
  %v1064 = vmul.f32 %v697, %v816
  %v1065 = vmul.f32 %v699, %v817
  %v1066 = vmul.f32 %v701, %v818
  %v1067 = vmul.f32 %v703, %v819
  %v1068 = vmul.f32 %v705, %v820
  %v1069 = vmul.f32 %v707, %v821
  %v1070 = vmul.f32 %v709, %v822
  %v1071 = vmul.f32 %v711, %v823
  %v1072 = vmul.f32 %v1064, %v1032
  %v1073 = vmul.f32 %v1065, %v1033
  %v1074 = vmul.f32 %v1066, %v1034
  %v1075 = vmul.f32 %v1067, %v1035
  %v1076 = vmul.f32 %v1068, %v1036
  %v1077 = vmul.f32 %v1069, %v1037
  %v1078 = vmul.f32 %v1070, %v1038
  %v1079 = vmul.f32 %v1071, %v1039
  %1088 = vrot.lane.b32.xlu0 %v1072, 96
  %v1089 = vpop.permute.xlu0 %1088
  %1090 = vrot.lane.b32.xlu0 %v1073, 96
  %v1091 = vpop.permute.xlu0 %1090
  %1092 = vrot.lane.b32.xlu0 %v1074, 96
  %v1093 = vpop.permute.xlu0 %1092
  %1094 = vrot.lane.b32.xlu0 %v1075, 96
  %v1095 = vpop.permute.xlu0 %1094
  %1096 = vrot.lane.b32.xlu0 %v1076, 96
  %v1097 = vpop.permute.xlu0 %1096
  %1098 = vrot.lane.b32.xlu0 %v1077, 96
  %v1099 = vpop.permute.xlu0 %1098
  %1100 = vrot.lane.b32.xlu0 %v1078, 96
  %v1101 = vpop.permute.xlu0 %1100
  %1102 = vrot.lane.b32.xlu0 %v1079, 96
  %v1103 = vpop.permute.xlu0 %1102
  %v1112 = vadd.f32 %v1056, %v1089
  %v1113 = vadd.f32 %v1057, %v1091
  %v1114 = vadd.f32 %v1058, %v1093
  %v1115 = vadd.f32 %v1059, %v1095
  %v1116 = vadd.f32 %v1060, %v1097
  %v1117 = vadd.f32 %v1061, %v1099
  %v1118 = vadd.f32 %v1062, %v1101
  %v1119 = vadd.f32 %v1063, %v1103
  %v1120 = vmul.f32 %v721, %v816
  %v1121 = vmul.f32 %v723, %v817
  %v1122 = vmul.f32 %v725, %v818
  %v1123 = vmul.f32 %v727, %v819
  %v1124 = vmul.f32 %v729, %v820
  %v1125 = vmul.f32 %v731, %v821
  %v1126 = vmul.f32 %v733, %v822
  %v1127 = vmul.f32 %v735, %v823
  %v1128 = vmul.f32 %v1120, %v1032
  %v1129 = vmul.f32 %v1121, %v1033
  %v1130 = vmul.f32 %v1122, %v1034
  %v1131 = vmul.f32 %v1123, %v1035
  %v1132 = vmul.f32 %v1124, %v1036
  %v1133 = vmul.f32 %v1125, %v1037
  %v1134 = vmul.f32 %v1126, %v1038
  %v1135 = vmul.f32 %v1127, %v1039
  %1144 = vrot.lane.b32.xlu0 %v1128, 64
  %v1145 = vpop.permute.xlu0 %1144
  %1146 = vrot.lane.b32.xlu0 %v1129, 64
  %v1147 = vpop.permute.xlu0 %1146
  %1148 = vrot.lane.b32.xlu0 %v1130, 64
  %v1149 = vpop.permute.xlu0 %1148
  %1150 = vrot.lane.b32.xlu0 %v1131, 64
  %v1151 = vpop.permute.xlu0 %1150
  %1152 = vrot.lane.b32.xlu0 %v1132, 64
  %v1153 = vpop.permute.xlu0 %1152
  %1154 = vrot.lane.b32.xlu0 %v1133, 64
  %v1155 = vpop.permute.xlu0 %1154
  %1156 = vrot.lane.b32.xlu0 %v1134, 64
  %v1157 = vpop.permute.xlu0 %1156
  %1158 = vrot.lane.b32.xlu0 %v1135, 64
  %v1159 = vpop.permute.xlu0 %1158
  %v1168 = vadd.f32 %v1112, %v1145
  %v1169 = vadd.f32 %v1113, %v1147
  %v1170 = vadd.f32 %v1114, %v1149
  %v1171 = vadd.f32 %v1115, %v1151
  %v1172 = vadd.f32 %v1116, %v1153
  %v1173 = vadd.f32 %v1117, %v1155
  %v1174 = vadd.f32 %v1118, %v1157
  %v1175 = vadd.f32 %v1119, %v1159
  %v1176 = vmul.f32 %v745, %v816
  %v1177 = vmul.f32 %v747, %v817
  %v1178 = vmul.f32 %v749, %v818
  %v1179 = vmul.f32 %v751, %v819
  %v1180 = vmul.f32 %v753, %v820
  %v1181 = vmul.f32 %v755, %v821
  %v1182 = vmul.f32 %v757, %v822
  %v1183 = vmul.f32 %v759, %v823
  %v1184 = vmul.f32 %v1176, %v1032
  %v1185 = vmul.f32 %v1177, %v1033
  %v1186 = vmul.f32 %v1178, %v1034
  %v1187 = vmul.f32 %v1179, %v1035
  %v1188 = vmul.f32 %v1180, %v1036
  %v1189 = vmul.f32 %v1181, %v1037
  %v1190 = vmul.f32 %v1182, %v1038
  %v1191 = vmul.f32 %v1183, %v1039
  %1200 = vrot.lane.b32.xlu0 %v1184, 32
  %v1201 = vpop.permute.xlu0 %1200
  %1202 = vrot.lane.b32.xlu0 %v1185, 32
  %v1203 = vpop.permute.xlu0 %1202
  %1204 = vrot.lane.b32.xlu0 %v1186, 32
  %v1205 = vpop.permute.xlu0 %1204
  %1206 = vrot.lane.b32.xlu0 %v1187, 32
  %v1207 = vpop.permute.xlu0 %1206
  %1208 = vrot.lane.b32.xlu0 %v1188, 32
  %v1209 = vpop.permute.xlu0 %1208
  %1210 = vrot.lane.b32.xlu0 %v1189, 32
  %v1211 = vpop.permute.xlu0 %1210
  %1212 = vrot.lane.b32.xlu0 %v1190, 32
  %v1213 = vpop.permute.xlu0 %1212
  %1214 = vrot.lane.b32.xlu0 %v1191, 32
  %v1215 = vpop.permute.xlu0 %1214
  %v1224 = vadd.f32 %v1168, %v1201
  %v1225 = vadd.f32 %v1169, %v1203
  %v1226 = vadd.f32 %v1170, %v1205
  %v1227 = vadd.f32 %v1171, %v1207
  %v1228 = vadd.f32 %v1172, %v1209
  %v1229 = vadd.f32 %v1173, %v1211
  %v1230 = vadd.f32 %v1174, %v1213
  %v1231 = vadd.f32 %v1175, %v1215
  %v1232 = vld [vmem:[%s4] sm:$0xff]
  %v1233 = vld [vmem:[%s4 + $0x8] sm:$0xff]
  %v1234 = vld [vmem:[%s4 + $0x10] sm:$0xff]
  %v1235 = vld [vmem:[%s4 + $0x18] sm:$0xff]
  %v1236 = vld [vmem:[%s5] sm:$0x1]
  %v1238 = vlaneseq
  %v1239 = vshrl.u32 %v1238, 7
  %v1240 = vsub.s32 0, %v1239
  %v1241 = vrot.slane %v1236, %v1240
  %v1244 = vsel %vm95, %v1224, 0
  %v1247 = vsel %vm95, %v1232, 0
  %v1250 = vsel %vm95, %v1233, 0
  %v1253 = vsel %vm95, %v1234, 0
  %v1256 = vsel %vm95, %v1235, 0
  %1258 = vmatprep.subr.mxu0 0.0
  %1259 = vmatpush1.xpose.msra.mxu0 %v1247
  %1260 = vmatprep.subr.mxu0 0.0
  %1261 = vmatpush1.xpose.msra.mxu0 %v1250
  %1262 = vmatprep.subr.mxu0 0.0
  %1263 = vmatpush1.xpose.msra.mxu0 %v1253
  %1264 = vmatprep.subr.mxu0 0.0
  %1265 = vmatpush1.xpose.msra.mxu0 %v1256
  %1266 = vmatprep.subr.mxu0 0.0
  %1267 = vmatpush1.xpose.msra.mxu0 0.0
  %1268 = vmatprep.subr.mxu0 0.0
  %1269 = vmatpush1.xpose.msra.mxu0 0.0
  %1270 = vmatprep.subr.mxu0 0.0
  %1271 = vmatpush1.xpose.msra.mxu0 0.0
  %1272 = vmatprep.subr.mxu0 0.0
  %1273 = vmatpush1.xpose.msra.mxu0 0.0
  %1274 = vmatprep.subr.mxu0 0.0
  %1275 = vmatpush1.xpose.msra.mxu0 0.0
  %1276 = vmatprep.subr.mxu0 0.0
  %1277 = vmatpush1.xpose.msra.mxu0 0.0
  %1278 = vmatprep.subr.mxu0 0.0
  %1279 = vmatpush1.xpose.msra.mxu0 0.0
  %1280 = vmatprep.subr.mxu0 0.0
  %1281 = vmatpush1.xpose.msra.mxu0 0.0
  %1282 = vmatprep.subr.mxu0 0.0
  %1283 = vmatpush1.xpose.msra.mxu0 0.0
  %1284 = vmatprep.subr.mxu0 0.0
  %1285 = vmatpush1.xpose.msra.mxu0 0.0
  %1286 = vmatprep.subr.mxu0 0.0
  %1287 = vmatpush1.xpose.msra.mxu0 0.0
  %1288 = vmatprep.subr.mxu0 0.0
  %1289 = vmatpush1.xpose.msra.mxu0 0.0
  %1290 = vmatprep.subr.mxu0 0.0
  %1291 = vmatpush1.xpose.msra.mxu0 0.0
  %1292 = vmatprep.subr.mxu0 0.0
  %1293 = vmatpush1.xpose.msra.mxu0 0.0
  %1294 = vmatprep.subr.mxu0 0.0
  %1295 = vmatpush1.xpose.msra.mxu0 0.0
  %1296 = vmatprep.subr.mxu0 0.0
  %1297 = vmatpush1.xpose.msra.mxu0 0.0
  %1298 = vmatprep.subr.mxu0 0.0
  %1299 = vmatpush1.xpose.msra.mxu0 0.0
  %1300 = vmatprep.subr.mxu0 0.0
  %1301 = vmatpush1.xpose.msra.mxu0 0.0
  %1302 = vmatprep.subr.mxu0 0.0
  %1303 = vmatpush1.xpose.msra.mxu0 0.0
  %1304 = vmatprep.subr.mxu0 0.0
  %1305 = vmatpush1.xpose.msra.mxu0 0.0
  %1306 = vmatprep.subr.mxu0 0.0
  %1307 = vmatpush1.xpose.msra.mxu0 0.0
  %1308 = vmatprep.subr.mxu0 0.0
  %1309 = vmatpush1.xpose.msra.mxu0 0.0
  %1310 = vmatprep.subr.mxu0 0.0
  %1311 = vmatpush1.xpose.msra.mxu0 0.0
  %1312 = vmatprep.subr.mxu0 0.0
  %1313 = vmatpush1.xpose.msra.mxu0 0.0
  %1314 = vmatprep.subr.mxu0 0.0
  %1315 = vmatpush1.xpose.msra.mxu0 0.0
  %1316 = vmatprep.subr.mxu0 0.0
  %1317 = vmatpush1.xpose.msra.mxu0 0.0
  %1318 = vmatprep.subr.mxu0 0.0
  %1319 = vmatpush1.xpose.msra.mxu0 0.0
  %1320 = vmatprep.subr.mxu0 0.0
  %1321 = vmatpush1.xpose.msra.mxu0 0.0
  %1322 = vmatprep.mubr.f32.mxu0 0.0
  %1323 = vmatmul.mubr.f32.gmra.mrb[0].mxu0 %v1244
  %v1324 = vpop.f32.mrb[0].mxu0
  %v1325 = vadd.f32 %v1241, %v1324
  %v1326 = vpop.f32.mrb[0].mxu0
  %1327 = vdwg.mxu0
  %v1329 = vsel %vm95, %v1225, 0
  %1331 = vmatprep.subr.mxu0 0.0
  %1332 = vmatpush1.xpose.msra.mxu0 %v1247
  %1333 = vmatprep.subr.mxu0 0.0
  %1334 = vmatpush1.xpose.msra.mxu0 %v1250
  %1335 = vmatprep.subr.mxu0 0.0
  %1336 = vmatpush1.xpose.msra.mxu0 %v1253
  %1337 = vmatprep.subr.mxu0 0.0
  %1338 = vmatpush1.xpose.msra.mxu0 %v1256
  %1339 = vmatprep.subr.mxu0 0.0
  %1340 = vmatpush1.xpose.msra.mxu0 0.0
  %1341 = vmatprep.subr.mxu0 0.0
  %1342 = vmatpush1.xpose.msra.mxu0 0.0
  %1343 = vmatprep.subr.mxu0 0.0
  %1344 = vmatpush1.xpose.msra.mxu0 0.0
  %1345 = vmatprep.subr.mxu0 0.0
  %1346 = vmatpush1.xpose.msra.mxu0 0.0
  %1347 = vmatprep.subr.mxu0 0.0
  %1348 = vmatpush1.xpose.msra.mxu0 0.0
  %1349 = vmatprep.subr.mxu0 0.0
  %1350 = vmatpush1.xpose.msra.mxu0 0.0
  %1351 = vmatprep.subr.mxu0 0.0
  %1352 = vmatpush1.xpose.msra.mxu0 0.0
  %1353 = vmatprep.subr.mxu0 0.0
  %1354 = vmatpush1.xpose.msra.mxu0 0.0
  %1355 = vmatprep.subr.mxu0 0.0
  %1356 = vmatpush1.xpose.msra.mxu0 0.0
  %1357 = vmatprep.subr.mxu0 0.0
  %1358 = vmatpush1.xpose.msra.mxu0 0.0
  %1359 = vmatprep.subr.mxu0 0.0
  %1360 = vmatpush1.xpose.msra.mxu0 0.0
  %1361 = vmatprep.subr.mxu0 0.0
  %1362 = vmatpush1.xpose.msra.mxu0 0.0
  %1363 = vmatprep.subr.mxu0 0.0
  %1364 = vmatpush1.xpose.msra.mxu0 0.0
  %1365 = vmatprep.subr.mxu0 0.0
  %1366 = vmatpush1.xpose.msra.mxu0 0.0
  %1367 = vmatprep.subr.mxu0 0.0
  %1368 = vmatpush1.xpose.msra.mxu0 0.0
  %1369 = vmatprep.subr.mxu0 0.0
  %1370 = vmatpush1.xpose.msra.mxu0 0.0
  %1371 = vmatprep.subr.mxu0 0.0
  %1372 = vmatpush1.xpose.msra.mxu0 0.0
  %1373 = vmatprep.subr.mxu0 0.0
  %1374 = vmatpush1.xpose.msra.mxu0 0.0
  %1375 = vmatprep.subr.mxu0 0.0
  %1376 = vmatpush1.xpose.msra.mxu0 0.0
  %1377 = vmatprep.subr.mxu0 0.0
  %1378 = vmatpush1.xpose.msra.mxu0 0.0
  %1379 = vmatprep.subr.mxu0 0.0
  %1380 = vmatpush1.xpose.msra.mxu0 0.0
  %1381 = vmatprep.subr.mxu0 0.0
  %1382 = vmatpush1.xpose.msra.mxu0 0.0
  %1383 = vmatprep.subr.mxu0 0.0
  %1384 = vmatpush1.xpose.msra.mxu0 0.0
  %1385 = vmatprep.subr.mxu0 0.0
  %1386 = vmatpush1.xpose.msra.mxu0 0.0
  %1387 = vmatprep.subr.mxu0 0.0
  %1388 = vmatpush1.xpose.msra.mxu0 0.0
  %1389 = vmatprep.subr.mxu0 0.0
  %1390 = vmatpush1.xpose.msra.mxu0 0.0
  %1391 = vmatprep.subr.mxu0 0.0
  %1392 = vmatpush1.xpose.msra.mxu0 0.0
  %1393 = vmatprep.subr.mxu0 0.0
  %1394 = vmatpush1.xpose.msra.mxu0 0.0
  %1395 = vmatprep.mubr.f32.mxu0 0.0
  %1396 = vmatmul.mubr.f32.gmra.mrb[0].mxu0 %v1329
  %v1397 = vpop.f32.mrb[0].mxu0
  %v1398 = vadd.f32 %v1241, %v1397
  %v1399 = vpop.f32.mrb[0].mxu0
  %1400 = vdwg.mxu0
  %v1402 = vsel %vm95, %v1226, 0
  %1404 = vmatprep.subr.mxu0 0.0
  %1405 = vmatpush1.xpose.msra.mxu0 %v1247
  %1406 = vmatprep.subr.mxu0 0.0
  %1407 = vmatpush1.xpose.msra.mxu0 %v1250
  %1408 = vmatprep.subr.mxu0 0.0
  %1409 = vmatpush1.xpose.msra.mxu0 %v1253
  %1410 = vmatprep.subr.mxu0 0.0
  %1411 = vmatpush1.xpose.msra.mxu0 %v1256
  %1412 = vmatprep.subr.mxu0 0.0
  %1413 = vmatpush1.xpose.msra.mxu0 0.0
  %1414 = vmatprep.subr.mxu0 0.0
  %1415 = vmatpush1.xpose.msra.mxu0 0.0
  %1416 = vmatprep.subr.mxu0 0.0
  %1417 = vmatpush1.xpose.msra.mxu0 0.0
  %1418 = vmatprep.subr.mxu0 0.0
  %1419 = vmatpush1.xpose.msra.mxu0 0.0
  %1420 = vmatprep.subr.mxu0 0.0
  %1421 = vmatpush1.xpose.msra.mxu0 0.0
  %1422 = vmatprep.subr.mxu0 0.0
  %1423 = vmatpush1.xpose.msra.mxu0 0.0
  %1424 = vmatprep.subr.mxu0 0.0
  %1425 = vmatpush1.xpose.msra.mxu0 0.0
  %1426 = vmatprep.subr.mxu0 0.0
  %1427 = vmatpush1.xpose.msra.mxu0 0.0
  %1428 = vmatprep.subr.mxu0 0.0
  %1429 = vmatpush1.xpose.msra.mxu0 0.0
  %1430 = vmatprep.subr.mxu0 0.0
  %1431 = vmatpush1.xpose.msra.mxu0 0.0
  %1432 = vmatprep.subr.mxu0 0.0
  %1433 = vmatpush1.xpose.msra.mxu0 0.0
  %1434 = vmatprep.subr.mxu0 0.0
  %1435 = vmatpush1.xpose.msra.mxu0 0.0
  %1436 = vmatprep.subr.mxu0 0.0
  %1437 = vmatpush1.xpose.msra.mxu0 0.0
  %1438 = vmatprep.subr.mxu0 0.0
  %1439 = vmatpush1.xpose.msra.mxu0 0.0
  %1440 = vmatprep.subr.mxu0 0.0
  %1441 = vmatpush1.xpose.msra.mxu0 0.0
  %1442 = vmatprep.subr.mxu0 0.0
  %1443 = vmatpush1.xpose.msra.mxu0 0.0
  %1444 = vmatprep.subr.mxu0 0.0
  %1445 = vmatpush1.xpose.msra.mxu0 0.0
  %1446 = vmatprep.subr.mxu0 0.0
  %1447 = vmatpush1.xpose.msra.mxu0 0.0
  %1448 = vmatprep.subr.mxu0 0.0
  %1449 = vmatpush1.xpose.msra.mxu0 0.0
  %1450 = vmatprep.subr.mxu0 0.0
  %1451 = vmatpush1.xpose.msra.mxu0 0.0
  %1452 = vmatprep.subr.mxu0 0.0
  %1453 = vmatpush1.xpose.msra.mxu0 0.0
  %1454 = vmatprep.subr.mxu0 0.0
  %1455 = vmatpush1.xpose.msra.mxu0 0.0
  %1456 = vmatprep.subr.mxu0 0.0
  %1457 = vmatpush1.xpose.msra.mxu0 0.0
  %1458 = vmatprep.subr.mxu0 0.0
  %1459 = vmatpush1.xpose.msra.mxu0 0.0
  %1460 = vmatprep.subr.mxu0 0.0
  %1461 = vmatpush1.xpose.msra.mxu0 0.0
  %1462 = vmatprep.subr.mxu0 0.0
  %1463 = vmatpush1.xpose.msra.mxu0 0.0
  %1464 = vmatprep.subr.mxu0 0.0
  %1465 = vmatpush1.xpose.msra.mxu0 0.0
  %1466 = vmatprep.subr.mxu0 0.0
  %1467 = vmatpush1.xpose.msra.mxu0 0.0
  %1468 = vmatprep.mubr.f32.mxu0 0.0
  %1469 = vmatmul.mubr.f32.gmra.mrb[0].mxu0 %v1402
  %v1470 = vpop.f32.mrb[0].mxu0
  %v1471 = vadd.f32 %v1241, %v1470
  %v1472 = vpop.f32.mrb[0].mxu0
  %1473 = vdwg.mxu0
  %v1475 = vsel %vm95, %v1227, 0
  %1477 = vmatprep.subr.mxu0 0.0
  %1478 = vmatpush1.xpose.msra.mxu0 %v1247
  %1479 = vmatprep.subr.mxu0 0.0
  %1480 = vmatpush1.xpose.msra.mxu0 %v1250
  %1481 = vmatprep.subr.mxu0 0.0
  %1482 = vmatpush1.xpose.msra.mxu0 %v1253
  %1483 = vmatprep.subr.mxu0 0.0
  %1484 = vmatpush1.xpose.msra.mxu0 %v1256
  %1485 = vmatprep.subr.mxu0 0.0
  %1486 = vmatpush1.xpose.msra.mxu0 0.0
  %1487 = vmatprep.subr.mxu0 0.0
  %1488 = vmatpush1.xpose.msra.mxu0 0.0
  %1489 = vmatprep.subr.mxu0 0.0
  %1490 = vmatpush1.xpose.msra.mxu0 0.0
  %1491 = vmatprep.subr.mxu0 0.0
  %1492 = vmatpush1.xpose.msra.mxu0 0.0
  %1493 = vmatprep.subr.mxu0 0.0
  %1494 = vmatpush1.xpose.msra.mxu0 0.0
  %1495 = vmatprep.subr.mxu0 0.0
  %1496 = vmatpush1.xpose.msra.mxu0 0.0
  %1497 = vmatprep.subr.mxu0 0.0
  %1498 = vmatpush1.xpose.msra.mxu0 0.0
  %1499 = vmatprep.subr.mxu0 0.0
  %1500 = vmatpush1.xpose.msra.mxu0 0.0
  %1501 = vmatprep.subr.mxu0 0.0
  %1502 = vmatpush1.xpose.msra.mxu0 0.0
  %1503 = vmatprep.subr.mxu0 0.0
  %1504 = vmatpush1.xpose.msra.mxu0 0.0
  %1505 = vmatprep.subr.mxu0 0.0
  %1506 = vmatpush1.xpose.msra.mxu0 0.0
  %1507 = vmatprep.subr.mxu0 0.0
  %1508 = vmatpush1.xpose.msra.mxu0 0.0
  %1509 = vmatprep.subr.mxu0 0.0
  %1510 = vmatpush1.xpose.msra.mxu0 0.0
  %1511 = vmatprep.subr.mxu0 0.0
  %1512 = vmatpush1.xpose.msra.mxu0 0.0
  %1513 = vmatprep.subr.mxu0 0.0
  %1514 = vmatpush1.xpose.msra.mxu0 0.0
  %1515 = vmatprep.subr.mxu0 0.0
  %1516 = vmatpush1.xpose.msra.mxu0 0.0
  %1517 = vmatprep.subr.mxu0 0.0
  %1518 = vmatpush1.xpose.msra.mxu0 0.0
  %1519 = vmatprep.subr.mxu0 0.0
  %1520 = vmatpush1.xpose.msra.mxu0 0.0
  %1521 = vmatprep.subr.mxu0 0.0
  %1522 = vmatpush1.xpose.msra.mxu0 0.0
  %1523 = vmatprep.subr.mxu0 0.0
  %1524 = vmatpush1.xpose.msra.mxu0 0.0
  %1525 = vmatprep.subr.mxu0 0.0
  %1526 = vmatpush1.xpose.msra.mxu0 0.0
  %1527 = vmatprep.subr.mxu0 0.0
  %1528 = vmatpush1.xpose.msra.mxu0 0.0
  %1529 = vmatprep.subr.mxu0 0.0
  %1530 = vmatpush1.xpose.msra.mxu0 0.0
  %1531 = vmatprep.subr.mxu0 0.0
  %1532 = vmatpush1.xpose.msra.mxu0 0.0
  %1533 = vmatprep.subr.mxu0 0.0
  %1534 = vmatpush1.xpose.msra.mxu0 0.0
  %1535 = vmatprep.subr.mxu0 0.0
  %1536 = vmatpush1.xpose.msra.mxu0 0.0
  %1537 = vmatprep.subr.mxu0 0.0
  %1538 = vmatpush1.xpose.msra.mxu0 0.0
  %1539 = vmatprep.subr.mxu0 0.0
  %1540 = vmatpush1.xpose.msra.mxu0 0.0
  %1541 = vmatprep.mubr.f32.mxu0 0.0
  %1542 = vmatmul.mubr.f32.gmra.mrb[0].mxu0 %v1475
  %v1543 = vpop.f32.mrb[0].mxu0
  %v1544 = vadd.f32 %v1241, %v1543
  %v1545 = vpop.f32.mrb[0].mxu0
  %1546 = vdwg.mxu0
  %v1548 = vsel %vm95, %v1228, 0
  %1550 = vmatprep.subr.mxu0 0.0
  %1551 = vmatpush1.xpose.msra.mxu0 %v1247
  %1552 = vmatprep.subr.mxu0 0.0
  %1553 = vmatpush1.xpose.msra.mxu0 %v1250
  %1554 = vmatprep.subr.mxu0 0.0
  %1555 = vmatpush1.xpose.msra.mxu0 %v1253
  %1556 = vmatprep.subr.mxu0 0.0
  %1557 = vmatpush1.xpose.msra.mxu0 %v1256
  %1558 = vmatprep.subr.mxu0 0.0
  %1559 = vmatpush1.xpose.msra.mxu0 0.0
  %1560 = vmatprep.subr.mxu0 0.0
  %1561 = vmatpush1.xpose.msra.mxu0 0.0
  %1562 = vmatprep.subr.mxu0 0.0
  %1563 = vmatpush1.xpose.msra.mxu0 0.0
  %1564 = vmatprep.subr.mxu0 0.0
  %1565 = vmatpush1.xpose.msra.mxu0 0.0
  %1566 = vmatprep.subr.mxu0 0.0
  %1567 = vmatpush1.xpose.msra.mxu0 0.0
  %1568 = vmatprep.subr.mxu0 0.0
  %1569 = vmatpush1.xpose.msra.mxu0 0.0
  %1570 = vmatprep.subr.mxu0 0.0
  %1571 = vmatpush1.xpose.msra.mxu0 0.0
  %1572 = vmatprep.subr.mxu0 0.0
  %1573 = vmatpush1.xpose.msra.mxu0 0.0
  %1574 = vmatprep.subr.mxu0 0.0
  %1575 = vmatpush1.xpose.msra.mxu0 0.0
  %1576 = vmatprep.subr.mxu0 0.0
  %1577 = vmatpush1.xpose.msra.mxu0 0.0
  %1578 = vmatprep.subr.mxu0 0.0
  %1579 = vmatpush1.xpose.msra.mxu0 0.0
  %1580 = vmatprep.subr.mxu0 0.0
  %1581 = vmatpush1.xpose.msra.mxu0 0.0
  %1582 = vmatprep.subr.mxu0 0.0
  %1583 = vmatpush1.xpose.msra.mxu0 0.0
  %1584 = vmatprep.subr.mxu0 0.0
  %1585 = vmatpush1.xpose.msra.mxu0 0.0
  %1586 = vmatprep.subr.mxu0 0.0
  %1587 = vmatpush1.xpose.msra.mxu0 0.0
  %1588 = vmatprep.subr.mxu0 0.0
  %1589 = vmatpush1.xpose.msra.mxu0 0.0
  %1590 = vmatprep.subr.mxu0 0.0
  %1591 = vmatpush1.xpose.msra.mxu0 0.0
  %1592 = vmatprep.subr.mxu0 0.0
  %1593 = vmatpush1.xpose.msra.mxu0 0.0
  %1594 = vmatprep.subr.mxu0 0.0
  %1595 = vmatpush1.xpose.msra.mxu0 0.0
  %1596 = vmatprep.subr.mxu0 0.0
  %1597 = vmatpush1.xpose.msra.mxu0 0.0
  %1598 = vmatprep.subr.mxu0 0.0
  %1599 = vmatpush1.xpose.msra.mxu0 0.0
  %1600 = vmatprep.subr.mxu0 0.0
  %1601 = vmatpush1.xpose.msra.mxu0 0.0
  %1602 = vmatprep.subr.mxu0 0.0
  %1603 = vmatpush1.xpose.msra.mxu0 0.0
  %1604 = vmatprep.subr.mxu0 0.0
  %1605 = vmatpush1.xpose.msra.mxu0 0.0
  %1606 = vmatprep.subr.mxu0 0.0
  %1607 = vmatpush1.xpose.msra.mxu0 0.0
  %1608 = vmatprep.subr.mxu0 0.0
  %1609 = vmatpush1.xpose.msra.mxu0 0.0
  %1610 = vmatprep.subr.mxu0 0.0
  %1611 = vmatpush1.xpose.msra.mxu0 0.0
  %1612 = vmatprep.subr.mxu0 0.0
  %1613 = vmatpush1.xpose.msra.mxu0 0.0
  %1614 = vmatprep.mubr.f32.mxu0 0.0
  %1615 = vmatmul.mubr.f32.gmra.mrb[0].mxu0 %v1548
  %v1616 = vpop.f32.mrb[0].mxu0
  %v1617 = vadd.f32 %v1241, %v1616
  %v1618 = vpop.f32.mrb[0].mxu0
  %1619 = vdwg.mxu0
  %v1621 = vsel %vm95, %v1229, 0
  %1623 = vmatprep.subr.mxu0 0.0
  %1624 = vmatpush1.xpose.msra.mxu0 %v1247
  %1625 = vmatprep.subr.mxu0 0.0
  %1626 = vmatpush1.xpose.msra.mxu0 %v1250
  %1627 = vmatprep.subr.mxu0 0.0
  %1628 = vmatpush1.xpose.msra.mxu0 %v1253
  %1629 = vmatprep.subr.mxu0 0.0
  %1630 = vmatpush1.xpose.msra.mxu0 %v1256
  %1631 = vmatprep.subr.mxu0 0.0
  %1632 = vmatpush1.xpose.msra.mxu0 0.0
  %1633 = vmatprep.subr.mxu0 0.0
  %1634 = vmatpush1.xpose.msra.mxu0 0.0
  %1635 = vmatprep.subr.mxu0 0.0
  %1636 = vmatpush1.xpose.msra.mxu0 0.0
  %1637 = vmatprep.subr.mxu0 0.0
  %1638 = vmatpush1.xpose.msra.mxu0 0.0
  %1639 = vmatprep.subr.mxu0 0.0
  %1640 = vmatpush1.xpose.msra.mxu0 0.0
  %1641 = vmatprep.subr.mxu0 0.0
  %1642 = vmatpush1.xpose.msra.mxu0 0.0
  %1643 = vmatprep.subr.mxu0 0.0
  %1644 = vmatpush1.xpose.msra.mxu0 0.0
  %1645 = vmatprep.subr.mxu0 0.0
  %1646 = vmatpush1.xpose.msra.mxu0 0.0
  %1647 = vmatprep.subr.mxu0 0.0
  %1648 = vmatpush1.xpose.msra.mxu0 0.0
  %1649 = vmatprep.subr.mxu0 0.0
  %1650 = vmatpush1.xpose.msra.mxu0 0.0
  %1651 = vmatprep.subr.mxu0 0.0
  %1652 = vmatpush1.xpose.msra.mxu0 0.0
  %1653 = vmatprep.subr.mxu0 0.0
  %1654 = vmatpush1.xpose.msra.mxu0 0.0
  %1655 = vmatprep.subr.mxu0 0.0
  %1656 = vmatpush1.xpose.msra.mxu0 0.0
  %1657 = vmatprep.subr.mxu0 0.0
  %1658 = vmatpush1.xpose.msra.mxu0 0.0
  %1659 = vmatprep.subr.mxu0 0.0
  %1660 = vmatpush1.xpose.msra.mxu0 0.0
  %1661 = vmatprep.subr.mxu0 0.0
  %1662 = vmatpush1.xpose.msra.mxu0 0.0
  %1663 = vmatprep.subr.mxu0 0.0
  %1664 = vmatpush1.xpose.msra.mxu0 0.0
  %1665 = vmatprep.subr.mxu0 0.0
  %1666 = vmatpush1.xpose.msra.mxu0 0.0
  %1667 = vmatprep.subr.mxu0 0.0
  %1668 = vmatpush1.xpose.msra.mxu0 0.0
  %1669 = vmatprep.subr.mxu0 0.0
  %1670 = vmatpush1.xpose.msra.mxu0 0.0
  %1671 = vmatprep.subr.mxu0 0.0
  %1672 = vmatpush1.xpose.msra.mxu0 0.0
  %1673 = vmatprep.subr.mxu0 0.0
  %1674 = vmatpush1.xpose.msra.mxu0 0.0
  %1675 = vmatprep.subr.mxu0 0.0
  %1676 = vmatpush1.xpose.msra.mxu0 0.0
  %1677 = vmatprep.subr.mxu0 0.0
  %1678 = vmatpush1.xpose.msra.mxu0 0.0
  %1679 = vmatprep.subr.mxu0 0.0
  %1680 = vmatpush1.xpose.msra.mxu0 0.0
  %1681 = vmatprep.subr.mxu0 0.0
  %1682 = vmatpush1.xpose.msra.mxu0 0.0
  %1683 = vmatprep.subr.mxu0 0.0
  %1684 = vmatpush1.xpose.msra.mxu0 0.0
  %1685 = vmatprep.subr.mxu0 0.0
  %1686 = vmatpush1.xpose.msra.mxu0 0.0
  %1687 = vmatprep.mubr.f32.mxu0 0.0
  %1688 = vmatmul.mubr.f32.gmra.mrb[0].mxu0 %v1621
  %v1689 = vpop.f32.mrb[0].mxu0
  %v1690 = vadd.f32 %v1241, %v1689
  %v1691 = vpop.f32.mrb[0].mxu0
  %1692 = vdwg.mxu0
  %v1694 = vsel %vm95, %v1230, 0
  %1696 = vmatprep.subr.mxu0 0.0
  %1697 = vmatpush1.xpose.msra.mxu0 %v1247
  %1698 = vmatprep.subr.mxu0 0.0
  %1699 = vmatpush1.xpose.msra.mxu0 %v1250
  %1700 = vmatprep.subr.mxu0 0.0
  %1701 = vmatpush1.xpose.msra.mxu0 %v1253
  %1702 = vmatprep.subr.mxu0 0.0
  %1703 = vmatpush1.xpose.msra.mxu0 %v1256
  %1704 = vmatprep.subr.mxu0 0.0
  %1705 = vmatpush1.xpose.msra.mxu0 0.0
  %1706 = vmatprep.subr.mxu0 0.0
  %1707 = vmatpush1.xpose.msra.mxu0 0.0
  %1708 = vmatprep.subr.mxu0 0.0
  %1709 = vmatpush1.xpose.msra.mxu0 0.0
  %1710 = vmatprep.subr.mxu0 0.0
  %1711 = vmatpush1.xpose.msra.mxu0 0.0
  %1712 = vmatprep.subr.mxu0 0.0
  %1713 = vmatpush1.xpose.msra.mxu0 0.0
  %1714 = vmatprep.subr.mxu0 0.0
  %1715 = vmatpush1.xpose.msra.mxu0 0.0
  %1716 = vmatprep.subr.mxu0 0.0
  %1717 = vmatpush1.xpose.msra.mxu0 0.0
  %1718 = vmatprep.subr.mxu0 0.0
  %1719 = vmatpush1.xpose.msra.mxu0 0.0
  %1720 = vmatprep.subr.mxu0 0.0
  %1721 = vmatpush1.xpose.msra.mxu0 0.0
  %1722 = vmatprep.subr.mxu0 0.0
  %1723 = vmatpush1.xpose.msra.mxu0 0.0
  %1724 = vmatprep.subr.mxu0 0.0
  %1725 = vmatpush1.xpose.msra.mxu0 0.0
  %1726 = vmatprep.subr.mxu0 0.0
  %1727 = vmatpush1.xpose.msra.mxu0 0.0
  %1728 = vmatprep.subr.mxu0 0.0
  %1729 = vmatpush1.xpose.msra.mxu0 0.0
  %1730 = vmatprep.subr.mxu0 0.0
  %1731 = vmatpush1.xpose.msra.mxu0 0.0
  %1732 = vmatprep.subr.mxu0 0.0
  %1733 = vmatpush1.xpose.msra.mxu0 0.0
  %1734 = vmatprep.subr.mxu0 0.0
  %1735 = vmatpush1.xpose.msra.mxu0 0.0
  %1736 = vmatprep.subr.mxu0 0.0
  %1737 = vmatpush1.xpose.msra.mxu0 0.0
  %1738 = vmatprep.subr.mxu0 0.0
  %1739 = vmatpush1.xpose.msra.mxu0 0.0
  %1740 = vmatprep.subr.mxu0 0.0
  %1741 = vmatpush1.xpose.msra.mxu0 0.0
  %1742 = vmatprep.subr.mxu0 0.0
  %1743 = vmatpush1.xpose.msra.mxu0 0.0
  %1744 = vmatprep.subr.mxu0 0.0
  %1745 = vmatpush1.xpose.msra.mxu0 0.0
  %1746 = vmatprep.subr.mxu0 0.0
  %1747 = vmatpush1.xpose.msra.mxu0 0.0
  %1748 = vmatprep.subr.mxu0 0.0
  %1749 = vmatpush1.xpose.msra.mxu0 0.0
  %1750 = vmatprep.subr.mxu0 0.0
  %1751 = vmatpush1.xpose.msra.mxu0 0.0
  %1752 = vmatprep.subr.mxu0 0.0
  %1753 = vmatpush1.xpose.msra.mxu0 0.0
  %1754 = vmatprep.subr.mxu0 0.0
  %1755 = vmatpush1.xpose.msra.mxu0 0.0
  %1756 = vmatprep.subr.mxu0 0.0
  %1757 = vmatpush1.xpose.msra.mxu0 0.0
  %1758 = vmatprep.subr.mxu0 0.0
  %1759 = vmatpush1.xpose.msra.mxu0 0.0
  %1760 = vmatprep.mubr.f32.mxu0 0.0
  %1761 = vmatmul.mubr.f32.gmra.mrb[0].mxu0 %v1694
  %v1762 = vpop.f32.mrb[0].mxu0
  %v1763 = vadd.f32 %v1241, %v1762
  %v1764 = vpop.f32.mrb[0].mxu0
  %1765 = vdwg.mxu0
  %v1767 = vsel %vm95, %v1231, 0
  %1769 = vmatprep.subr.mxu0 0.0
  %1770 = vmatpush1.xpose.msra.mxu0 %v1247
  %1771 = vmatprep.subr.mxu0 0.0
  %1772 = vmatpush1.xpose.msra.mxu0 %v1250
  %1773 = vmatprep.subr.mxu0 0.0
  %1774 = vmatpush1.xpose.msra.mxu0 %v1253
  %1775 = vmatprep.subr.mxu0 0.0
  %1776 = vmatpush1.xpose.msra.mxu0 %v1256
  %1777 = vmatprep.subr.mxu0 0.0
  %1778 = vmatpush1.xpose.msra.mxu0 0.0
  %1779 = vmatprep.subr.mxu0 0.0
  %1780 = vmatpush1.xpose.msra.mxu0 0.0
  %1781 = vmatprep.subr.mxu0 0.0
  %1782 = vmatpush1.xpose.msra.mxu0 0.0
  %1783 = vmatprep.subr.mxu0 0.0
  %1784 = vmatpush1.xpose.msra.mxu0 0.0
  %1785 = vmatprep.subr.mxu0 0.0
  %1786 = vmatpush1.xpose.msra.mxu0 0.0
  %1787 = vmatprep.subr.mxu0 0.0
  %1788 = vmatpush1.xpose.msra.mxu0 0.0
  %1789 = vmatprep.subr.mxu0 0.0
  %1790 = vmatpush1.xpose.msra.mxu0 0.0
  %1791 = vmatprep.subr.mxu0 0.0
  %1792 = vmatpush1.xpose.msra.mxu0 0.0
  %1793 = vmatprep.subr.mxu0 0.0
  %1794 = vmatpush1.xpose.msra.mxu0 0.0
  %1795 = vmatprep.subr.mxu0 0.0
  %1796 = vmatpush1.xpose.msra.mxu0 0.0
  %1797 = vmatprep.subr.mxu0 0.0
  %1798 = vmatpush1.xpose.msra.mxu0 0.0
  %1799 = vmatprep.subr.mxu0 0.0
  %1800 = vmatpush1.xpose.msra.mxu0 0.0
  %1801 = vmatprep.subr.mxu0 0.0
  %1802 = vmatpush1.xpose.msra.mxu0 0.0
  %1803 = vmatprep.subr.mxu0 0.0
  %1804 = vmatpush1.xpose.msra.mxu0 0.0
  %1805 = vmatprep.subr.mxu0 0.0
  %1806 = vmatpush1.xpose.msra.mxu0 0.0
  %1807 = vmatprep.subr.mxu0 0.0
  %1808 = vmatpush1.xpose.msra.mxu0 0.0
  %1809 = vmatprep.subr.mxu0 0.0
  %1810 = vmatpush1.xpose.msra.mxu0 0.0
  %1811 = vmatprep.subr.mxu0 0.0
  %1812 = vmatpush1.xpose.msra.mxu0 0.0
  %1813 = vmatprep.subr.mxu0 0.0
  %1814 = vmatpush1.xpose.msra.mxu0 0.0
  %1815 = vmatprep.subr.mxu0 0.0
  %1816 = vmatpush1.xpose.msra.mxu0 0.0
  %1817 = vmatprep.subr.mxu0 0.0
  %1818 = vmatpush1.xpose.msra.mxu0 0.0
  %1819 = vmatprep.subr.mxu0 0.0
  %1820 = vmatpush1.xpose.msra.mxu0 0.0
  %1821 = vmatprep.subr.mxu0 0.0
  %1822 = vmatpush1.xpose.msra.mxu0 0.0
  %1823 = vmatprep.subr.mxu0 0.0
  %1824 = vmatpush1.xpose.msra.mxu0 0.0
  %1825 = vmatprep.subr.mxu0 0.0
  %1826 = vmatpush1.xpose.msra.mxu0 0.0
  %1827 = vmatprep.subr.mxu0 0.0
  %1828 = vmatpush1.xpose.msra.mxu0 0.0
  %1829 = vmatprep.subr.mxu0 0.0
  %1830 = vmatpush1.xpose.msra.mxu0 0.0
  %1831 = vmatprep.subr.mxu0 0.0
  %1832 = vmatpush1.xpose.msra.mxu0 0.0
  %1833 = vmatprep.mubr.f32.mxu0 0.0
  %1834 = vmatmul.mubr.f32.gmra.mrb[0].mxu0 %v1767
  %v1835 = vpop.f32.mrb[0].mxu0
  %v1836 = vadd.f32 %v1241, %v1835
  %v1837 = vpop.f32.mrb[0].mxu0
  %1838 = vdwg.mxu0
  %v1839 = vxor.u32 %v1325, 2147483648
  %v1840 = vxor.u32 %v1398, 2147483648
  %v1841 = vxor.u32 %v1471, 2147483648
  %v1842 = vxor.u32 %v1544, 2147483648
  %v1843 = vxor.u32 %v1617, 2147483648
  %v1844 = vxor.u32 %v1690, 2147483648
  %v1845 = vxor.u32 %v1763, 2147483648
  %v1846 = vxor.u32 %v1836, 2147483648
  %v1847 = vmul.f32 %v1839, 1.442695
  %v1848 = vpow.pop %v1847
  %v1849 = vmul.f32 %v1840, 1.442695
  %v1850 = vpow.pop %v1849
  %v1851 = vmul.f32 %v1841, 1.442695
  %v1852 = vpow.pop %v1851
  %v1853 = vmul.f32 %v1842, 1.442695
  %v1854 = vpow.pop %v1853
  %v1855 = vmul.f32 %v1843, 1.442695
  %v1856 = vpow.pop %v1855
  %v1857 = vmul.f32 %v1844, 1.442695
  %v1858 = vpow.pop %v1857
  %v1859 = vmul.f32 %v1845, 1.442695
  %v1860 = vpow.pop %v1859
  %v1861 = vmul.f32 %v1846, 1.442695
  %v1862 = vpow.pop %v1861
  %v1863 = vadd.f32 %v1848, 1.0
  %v1864 = vadd.f32 %v1850, 1.0
  %v1865 = vadd.f32 %v1852, 1.0
  %v1866 = vadd.f32 %v1854, 1.0
  %v1867 = vadd.f32 %v1856, 1.0
  %v1868 = vadd.f32 %v1858, 1.0
  %v1869 = vadd.f32 %v1860, 1.0
  %v1870 = vadd.f32 %v1862, 1.0
  %v1871 = vrcp.pop %v1863
  %v1872 = vmul.f32 1.0, %v1871
  %v1873 = vrcp.pop %v1864
  %v1874 = vmul.f32 1.0, %v1873
  %v1875 = vrcp.pop %v1865
  %v1876 = vmul.f32 1.0, %v1875
  %v1877 = vrcp.pop %v1866
  %v1878 = vmul.f32 1.0, %v1877
  %v1879 = vrcp.pop %v1867
  %v1880 = vmul.f32 1.0, %v1879
  %v1881 = vrcp.pop %v1868
  %v1882 = vmul.f32 1.0, %v1881
  %v1883 = vrcp.pop %v1869
  %v1884 = vmul.f32 1.0, %v1883
  %v1885 = vrcp.pop %v1870
  %v1886 = vmul.f32 1.0, %v1885
  %1887 = vst.msk [vmem:[%s6] sm:$0xff] %vm95, %v1872
  %1888 = vst.msk [vmem:[%s6 + $0x8] sm:$0xff] %vm95, %v1874
  %1889 = vst.msk [vmem:[%s6 + $0x10] sm:$0xff] %vm95, %v1876
  %1890 = vst.msk [vmem:[%s6 + $0x18] sm:$0xff] %vm95, %v1878
  %1891 = vst.msk [vmem:[%s6 + $0x20] sm:$0xff] %vm95, %v1880
  %1892 = vst.msk [vmem:[%s6 + $0x28] sm:$0xff] %vm95, %v1882
  %1893 = vst.msk [vmem:[%s6 + $0x30] sm:$0xff] %vm95, %v1884
  %1894 = vst.msk [vmem:[%s6 + $0x38] sm:$0xff] %vm95, %v1886
  // Predicated region
  $region26: #{kgcn_forward.4} parent=0 // pred_check
    _
  $region27: #{kgcn_forward.4} parent=0 // pred_check_branch
    %1896 = sbr.rel (0) target = $region29
  $region28: #{kgcn_forward.4} parent=0 // pred_region
    _
  $region29: #{kgcn_forward.4} parent=0 // pred_fallthru
    _
  // Predicated region
  $region30: #{kgcn_forward.4} parent=0 // pred_check
    _
  $region31: #{kgcn_forward.4} parent=0 // pred_check_branch
    %1898 = sbr.rel (0) target = $region33
  $region32: #{kgcn_forward.4} parent=0 // pred_region
    _
  $region33: #{kgcn_forward.4} parent=0 // pred_fallthru
    _

// kernel: kgcn_forward.5
$region0: #{kgcn_forward.5}
  #allocation0 [shape = 'u32[]', space=smem, size = 0x4, offset = 0x4, fixed_abs, tag = 'smem constant byte address 0x4 - core index']
  #allocation1 [shape = 'u32[144,128]{1,0:T(1,128)}', space=vmem, size = 0x12000, scoped, tag = 'internal scratch']
  %s0 = inlined_call_operand.vmem [shape: f32[8,1,32], index: 0, kind: input, shape index: {}]
  %s1 = inlined_call_operand.vmem [shape: f32[8,1,256], index: 1, kind: input, shape index: {}]
  %s2 = inlined_call_operand.vmem [shape: f32[8,1,256], index: 2, kind: input, shape index: {}]
  %s3 = inlined_call_operand.vmem [shape: f32[8,1,32], index: 3, kind: input, shape index: {}]
  %s4 = inlined_call_operand.vmem [shape: f32[32,32], index: 4, kind: input, shape index: {}]
  %s5 = inlined_call_operand.vmem [shape: f32[1,32], index: 5, kind: input, shape index: {}]
  %s6 = inlined_call_operand.vmem [shape: f32[8,1,32], index: 6, kind: output, shape index: {}]
  %s7 = sld [smem:[#allocation0]]
  $region34: #{kgcn_forward.5} parent=0
    _
  %s9 = ssub.s32 1, %s7
  %s10 = scalar_select 0, %s9, %s7
  // Predicated region
  $region2: #{kgcn_forward.5} parent=0 // pred_check
    _
  $region3: #{kgcn_forward.5} parent=0 // pred_check_branch
    %12 = sbr.rel (0) target = $region5
  $region4: #{kgcn_forward.5} parent=0 // pred_region
    _
  $region5: #{kgcn_forward.5} parent=0 // pred_fallthru
    _
  // Predicated region
  $region6: #{kgcn_forward.5} parent=0 // pred_check
    _
  $region7: #{kgcn_forward.5} parent=0 // pred_check_branch
    %14 = sbr.rel (0) target = $region9
  $region8: #{kgcn_forward.5} parent=0 // pred_region
    _
  $region9: #{kgcn_forward.5} parent=0 // pred_fallthru
    _
  // Predicated region
  $region10: #{kgcn_forward.5} parent=0 // pred_check
    _
  $region11: #{kgcn_forward.5} parent=0 // pred_check_branch
    %16 = sbr.rel (0) target = $region13
  $region12: #{kgcn_forward.5} parent=0 // pred_region
    _
  $region13: #{kgcn_forward.5} parent=0 // pred_fallthru
    _
  // Predicated region
  $region14: #{kgcn_forward.5} parent=0 // pred_check
    _
  $region15: #{kgcn_forward.5} parent=0 // pred_check_branch
    %18 = sbr.rel (0) target = $region17
  $region16: #{kgcn_forward.5} parent=0 // pred_region
    _
  $region17: #{kgcn_forward.5} parent=0 // pred_fallthru
    _
  // Predicated region
  $region18: #{kgcn_forward.5} parent=0 // pred_check
    _
  $region19: #{kgcn_forward.5} parent=0 // pred_check_branch
    %20 = sbr.rel (0) target = $region21
  $region20: #{kgcn_forward.5} parent=0 // pred_region
    _
  $region21: #{kgcn_forward.5} parent=0 // pred_fallthru
    _
  // Predicated region
  $region22: #{kgcn_forward.5} parent=0 // pred_check
    _
  $region23: #{kgcn_forward.5} parent=0 // pred_check_branch
    %22 = sbr.rel (0) target = $region25
  $region24: #{kgcn_forward.5} parent=0 // pred_region
    _
  $region25: #{kgcn_forward.5} parent=0 // pred_fallthru
    _
  %v23 = vld [vmem:[%s3] sm:$0x1]
  %v24 = vld [vmem:[%s3 + $0x1] sm:$0x1]
  %v25 = vld [vmem:[%s3 + $0x2] sm:$0x1]
  %v26 = vld [vmem:[%s3 + $0x3] sm:$0x1]
  %v27 = vld [vmem:[%s3 + $0x4] sm:$0x1]
  %v28 = vld [vmem:[%s3 + $0x5] sm:$0x1]
  %v29 = vld [vmem:[%s3 + $0x6] sm:$0x1]
  %v30 = vld [vmem:[%s3 + $0x7] sm:$0x1]
  %v31 = vld [vmem:[%s2] sm:$0x1]
  %v32 = vld [vmem:[%s2 + $0x2] sm:$0x1]
  %v33 = vld [vmem:[%s2 + $0x4] sm:$0x1]
  %v34 = vld [vmem:[%s2 + $0x6] sm:$0x1]
  %v35 = vld [vmem:[%s2 + $0x8] sm:$0x1]
  %v36 = vld [vmem:[%s2 + $0xa] sm:$0x1]
  %v37 = vld [vmem:[%s2 + $0xc] sm:$0x1]
  %v38 = vld [vmem:[%s2 + $0xe] sm:$0x1]
  %v39 = vmul.f32 %v23, %v31
  %v40 = vmul.f32 %v24, %v32
  %v41 = vmul.f32 %v25, %v33
  %v42 = vmul.f32 %v26, %v34
  %v43 = vmul.f32 %v27, %v35
  %v44 = vmul.f32 %v28, %v36
  %v45 = vmul.f32 %v29, %v37
  %v46 = vmul.f32 %v30, %v38
  %vm47 = vcmask 253952
  %v48 = vsel %vm47, %v39, 0.0
  %49 = vadd.xlane.f32.xlu0 %v48
  %v50 = vpop.xlane.xlu0 %49
  %v51 = vsel %vm47, %v40, 0.0
  %52 = vadd.xlane.f32.xlu0 %v51
  %v53 = vpop.xlane.xlu0 %52
  %v54 = vsel %vm47, %v41, 0.0
  %55 = vadd.xlane.f32.xlu0 %v54
  %v56 = vpop.xlane.xlu0 %55
  %v57 = vsel %vm47, %v42, 0.0
  %58 = vadd.xlane.f32.xlu0 %v57
  %v59 = vpop.xlane.xlu0 %58
  %v60 = vsel %vm47, %v43, 0.0
  %61 = vadd.xlane.f32.xlu0 %v60
  %v62 = vpop.xlane.xlu0 %61
  %v63 = vsel %vm47, %v44, 0.0
  %64 = vadd.xlane.f32.xlu0 %v63
  %v65 = vpop.xlane.xlu0 %64
  %v66 = vsel %vm47, %v45, 0.0
  %67 = vadd.xlane.f32.xlu0 %v66
  %v68 = vpop.xlane.xlu0 %67
  %v69 = vsel %vm47, %v46, 0.0
  %70 = vadd.xlane.f32.xlu0 %v69
  %v71 = vpop.xlane.xlu0 %70
  %80 = vrot.lane.b32.xlu0 %v31, 96
  %v81 = vpop.permute.xlu0 %80
  %82 = vrot.lane.b32.xlu0 %v32, 96
  %v83 = vpop.permute.xlu0 %82
  %84 = vrot.lane.b32.xlu0 %v33, 96
  %v85 = vpop.permute.xlu0 %84
  %86 = vrot.lane.b32.xlu0 %v34, 96
  %v87 = vpop.permute.xlu0 %86
  %88 = vrot.lane.b32.xlu0 %v35, 96
  %v89 = vpop.permute.xlu0 %88
  %90 = vrot.lane.b32.xlu0 %v36, 96
  %v91 = vpop.permute.xlu0 %90
  %92 = vrot.lane.b32.xlu0 %v37, 96
  %v93 = vpop.permute.xlu0 %92
  %94 = vrot.lane.b32.xlu0 %v38, 96
  %v95 = vpop.permute.xlu0 %94
  %v104 = vmul.f32 %v23, %v81
  %v105 = vmul.f32 %v24, %v83
  %v106 = vmul.f32 %v25, %v85
  %v107 = vmul.f32 %v26, %v87
  %v108 = vmul.f32 %v27, %v89
  %v109 = vmul.f32 %v28, %v91
  %v110 = vmul.f32 %v29, %v93
  %v111 = vmul.f32 %v30, %v95
  %v112 = vsel %vm47, %v104, 0.0
  %113 = vadd.xlane.f32.xlu0 %v112
  %v114 = vpop.xlane.xlu0 %113
  %v115 = vsel %vm47, %v105, 0.0
  %116 = vadd.xlane.f32.xlu0 %v115
  %v117 = vpop.xlane.xlu0 %116
  %v118 = vsel %vm47, %v106, 0.0
  %119 = vadd.xlane.f32.xlu0 %v118
  %v120 = vpop.xlane.xlu0 %119
  %v121 = vsel %vm47, %v107, 0.0
  %122 = vadd.xlane.f32.xlu0 %v121
  %v123 = vpop.xlane.xlu0 %122
  %v124 = vsel %vm47, %v108, 0.0
  %125 = vadd.xlane.f32.xlu0 %v124
  %v126 = vpop.xlane.xlu0 %125
  %v127 = vsel %vm47, %v109, 0.0
  %128 = vadd.xlane.f32.xlu0 %v127
  %v129 = vpop.xlane.xlu0 %128
  %v130 = vsel %vm47, %v110, 0.0
  %131 = vadd.xlane.f32.xlu0 %v130
  %v132 = vpop.xlane.xlu0 %131
  %v133 = vsel %vm47, %v111, 0.0
  %134 = vadd.xlane.f32.xlu0 %v133
  %v135 = vpop.xlane.xlu0 %134
  %136 = vrot.lane.b32.xlu0 %v31, 64
  %v137 = vpop.permute.xlu0 %136
  %138 = vrot.lane.b32.xlu0 %v32, 64
  %v139 = vpop.permute.xlu0 %138
  %140 = vrot.lane.b32.xlu0 %v33, 64
  %v141 = vpop.permute.xlu0 %140
  %142 = vrot.lane.b32.xlu0 %v34, 64
  %v143 = vpop.permute.xlu0 %142
  %144 = vrot.lane.b32.xlu0 %v35, 64
  %v145 = vpop.permute.xlu0 %144
  %146 = vrot.lane.b32.xlu0 %v36, 64
  %v147 = vpop.permute.xlu0 %146
  %148 = vrot.lane.b32.xlu0 %v37, 64
  %v149 = vpop.permute.xlu0 %148
  %150 = vrot.lane.b32.xlu0 %v38, 64
  %v151 = vpop.permute.xlu0 %150
  %v160 = vmul.f32 %v23, %v137
  %v161 = vmul.f32 %v24, %v139
  %v162 = vmul.f32 %v25, %v141
  %v163 = vmul.f32 %v26, %v143
  %v164 = vmul.f32 %v27, %v145
  %v165 = vmul.f32 %v28, %v147
  %v166 = vmul.f32 %v29, %v149
  %v167 = vmul.f32 %v30, %v151
  %v168 = vsel %vm47, %v160, 0.0
  %169 = vadd.xlane.f32.xlu0 %v168
  %v170 = vpop.xlane.xlu0 %169
  %v171 = vsel %vm47, %v161, 0.0
  %172 = vadd.xlane.f32.xlu0 %v171
  %v173 = vpop.xlane.xlu0 %172
  %v174 = vsel %vm47, %v162, 0.0
  %175 = vadd.xlane.f32.xlu0 %v174
  %v176 = vpop.xlane.xlu0 %175
  %v177 = vsel %vm47, %v163, 0.0
  %178 = vadd.xlane.f32.xlu0 %v177
  %v179 = vpop.xlane.xlu0 %178
  %v180 = vsel %vm47, %v164, 0.0
  %181 = vadd.xlane.f32.xlu0 %v180
  %v182 = vpop.xlane.xlu0 %181
  %v183 = vsel %vm47, %v165, 0.0
  %184 = vadd.xlane.f32.xlu0 %v183
  %v185 = vpop.xlane.xlu0 %184
  %v186 = vsel %vm47, %v166, 0.0
  %187 = vadd.xlane.f32.xlu0 %v186
  %v188 = vpop.xlane.xlu0 %187
  %v189 = vsel %vm47, %v167, 0.0
  %190 = vadd.xlane.f32.xlu0 %v189
  %v191 = vpop.xlane.xlu0 %190
  %192 = vrot.lane.b32.xlu0 %v31, 32
  %v193 = vpop.permute.xlu0 %192
  %194 = vrot.lane.b32.xlu0 %v32, 32
  %v195 = vpop.permute.xlu0 %194
  %196 = vrot.lane.b32.xlu0 %v33, 32
  %v197 = vpop.permute.xlu0 %196
  %198 = vrot.lane.b32.xlu0 %v34, 32
  %v199 = vpop.permute.xlu0 %198
  %200 = vrot.lane.b32.xlu0 %v35, 32
  %v201 = vpop.permute.xlu0 %200
  %202 = vrot.lane.b32.xlu0 %v36, 32
  %v203 = vpop.permute.xlu0 %202
  %204 = vrot.lane.b32.xlu0 %v37, 32
  %v205 = vpop.permute.xlu0 %204
  %206 = vrot.lane.b32.xlu0 %v38, 32
  %v207 = vpop.permute.xlu0 %206
  %v216 = vmul.f32 %v23, %v193
  %v217 = vmul.f32 %v24, %v195
  %v218 = vmul.f32 %v25, %v197
  %v219 = vmul.f32 %v26, %v199
  %v220 = vmul.f32 %v27, %v201
  %v221 = vmul.f32 %v28, %v203
  %v222 = vmul.f32 %v29, %v205
  %v223 = vmul.f32 %v30, %v207
  %v224 = vsel %vm47, %v216, 0.0
  %225 = vadd.xlane.f32.xlu0 %v224
  %v226 = vpop.xlane.xlu0 %225
  %v227 = vsel %vm47, %v217, 0.0
  %228 = vadd.xlane.f32.xlu0 %v227
  %v229 = vpop.xlane.xlu0 %228
  %v230 = vsel %vm47, %v218, 0.0
  %231 = vadd.xlane.f32.xlu0 %v230
  %v232 = vpop.xlane.xlu0 %231
  %v233 = vsel %vm47, %v219, 0.0
  %234 = vadd.xlane.f32.xlu0 %v233
  %v235 = vpop.xlane.xlu0 %234
  %v236 = vsel %vm47, %v220, 0.0
  %237 = vadd.xlane.f32.xlu0 %v236
  %v238 = vpop.xlane.xlu0 %237
  %v239 = vsel %vm47, %v221, 0.0
  %240 = vadd.xlane.f32.xlu0 %v239
  %v241 = vpop.xlane.xlu0 %240
  %v242 = vsel %vm47, %v222, 0.0
  %243 = vadd.xlane.f32.xlu0 %v242
  %v244 = vpop.xlane.xlu0 %243
  %v245 = vsel %vm47, %v223, 0.0
  %246 = vadd.xlane.f32.xlu0 %v245
  %v247 = vpop.xlane.xlu0 %246
  %v248 = vld [vmem:[%s2 + $0x1] sm:$0x1]
  %v249 = vld [vmem:[%s2 + $0x3] sm:$0x1]
  %v250 = vld [vmem:[%s2 + $0x5] sm:$0x1]
  %v251 = vld [vmem:[%s2 + $0x7] sm:$0x1]
  %v252 = vld [vmem:[%s2 + $0x9] sm:$0x1]
  %v253 = vld [vmem:[%s2 + $0xb] sm:$0x1]
  %v254 = vld [vmem:[%s2 + $0xd] sm:$0x1]
  %v255 = vld [vmem:[%s2 + $0xf] sm:$0x1]
  %v256 = vmul.f32 %v23, %v248
  %v257 = vmul.f32 %v24, %v249
  %v258 = vmul.f32 %v25, %v250
  %v259 = vmul.f32 %v26, %v251
  %v260 = vmul.f32 %v27, %v252
  %v261 = vmul.f32 %v28, %v253
  %v262 = vmul.f32 %v29, %v254
  %v263 = vmul.f32 %v30, %v255
  %v264 = vsel %vm47, %v256, 0.0
  %265 = vadd.xlane.f32.xlu0 %v264
  %v266 = vpop.xlane.xlu0 %265
  %v267 = vsel %vm47, %v257, 0.0
  %268 = vadd.xlane.f32.xlu0 %v267
  %v269 = vpop.xlane.xlu0 %268
  %v270 = vsel %vm47, %v258, 0.0
  %271 = vadd.xlane.f32.xlu0 %v270
  %v272 = vpop.xlane.xlu0 %271
  %v273 = vsel %vm47, %v259, 0.0
  %274 = vadd.xlane.f32.xlu0 %v273
  %v275 = vpop.xlane.xlu0 %274
  %v276 = vsel %vm47, %v260, 0.0
  %277 = vadd.xlane.f32.xlu0 %v276
  %v278 = vpop.xlane.xlu0 %277
  %v279 = vsel %vm47, %v261, 0.0
  %280 = vadd.xlane.f32.xlu0 %v279
  %v281 = vpop.xlane.xlu0 %280
  %v282 = vsel %vm47, %v262, 0.0
  %283 = vadd.xlane.f32.xlu0 %v282
  %v284 = vpop.xlane.xlu0 %283
  %v285 = vsel %vm47, %v263, 0.0
  %286 = vadd.xlane.f32.xlu0 %v285
  %v287 = vpop.xlane.xlu0 %286
  %296 = vrot.lane.b32.xlu0 %v248, 96
  %v297 = vpop.permute.xlu0 %296
  %298 = vrot.lane.b32.xlu0 %v249, 96
  %v299 = vpop.permute.xlu0 %298
  %300 = vrot.lane.b32.xlu0 %v250, 96
  %v301 = vpop.permute.xlu0 %300
  %302 = vrot.lane.b32.xlu0 %v251, 96
  %v303 = vpop.permute.xlu0 %302
  %304 = vrot.lane.b32.xlu0 %v252, 96
  %v305 = vpop.permute.xlu0 %304
  %306 = vrot.lane.b32.xlu0 %v253, 96
  %v307 = vpop.permute.xlu0 %306
  %308 = vrot.lane.b32.xlu0 %v254, 96
  %v309 = vpop.permute.xlu0 %308
  %310 = vrot.lane.b32.xlu0 %v255, 96
  %v311 = vpop.permute.xlu0 %310
  %v320 = vmul.f32 %v23, %v297
  %v321 = vmul.f32 %v24, %v299
  %v322 = vmul.f32 %v25, %v301
  %v323 = vmul.f32 %v26, %v303
  %v324 = vmul.f32 %v27, %v305
  %v325 = vmul.f32 %v28, %v307
  %v326 = vmul.f32 %v29, %v309
  %v327 = vmul.f32 %v30, %v311
  %v328 = vsel %vm47, %v320, 0.0
  %329 = vadd.xlane.f32.xlu0 %v328
  %v330 = vpop.xlane.xlu0 %329
  %v331 = vsel %vm47, %v321, 0.0
  %332 = vadd.xlane.f32.xlu0 %v331
  %v333 = vpop.xlane.xlu0 %332
  %v334 = vsel %vm47, %v322, 0.0
  %335 = vadd.xlane.f32.xlu0 %v334
  %v336 = vpop.xlane.xlu0 %335
  %v337 = vsel %vm47, %v323, 0.0
  %338 = vadd.xlane.f32.xlu0 %v337
  %v339 = vpop.xlane.xlu0 %338
  %v340 = vsel %vm47, %v324, 0.0
  %341 = vadd.xlane.f32.xlu0 %v340
  %v342 = vpop.xlane.xlu0 %341
  %v343 = vsel %vm47, %v325, 0.0
  %344 = vadd.xlane.f32.xlu0 %v343
  %v345 = vpop.xlane.xlu0 %344
  %v346 = vsel %vm47, %v326, 0.0
  %347 = vadd.xlane.f32.xlu0 %v346
  %v348 = vpop.xlane.xlu0 %347
  %v349 = vsel %vm47, %v327, 0.0
  %350 = vadd.xlane.f32.xlu0 %v349
  %v351 = vpop.xlane.xlu0 %350
  %352 = vrot.lane.b32.xlu0 %v248, 64
  %v353 = vpop.permute.xlu0 %352
  %354 = vrot.lane.b32.xlu0 %v249, 64
  %v355 = vpop.permute.xlu0 %354
  %356 = vrot.lane.b32.xlu0 %v250, 64
  %v357 = vpop.permute.xlu0 %356
  %358 = vrot.lane.b32.xlu0 %v251, 64
  %v359 = vpop.permute.xlu0 %358
  %360 = vrot.lane.b32.xlu0 %v252, 64
  %v361 = vpop.permute.xlu0 %360
  %362 = vrot.lane.b32.xlu0 %v253, 64
  %v363 = vpop.permute.xlu0 %362
  %364 = vrot.lane.b32.xlu0 %v254, 64
  %v365 = vpop.permute.xlu0 %364
  %366 = vrot.lane.b32.xlu0 %v255, 64
  %v367 = vpop.permute.xlu0 %366
  %v376 = vmul.f32 %v23, %v353
  %v377 = vmul.f32 %v24, %v355
  %v378 = vmul.f32 %v25, %v357
  %v379 = vmul.f32 %v26, %v359
  %v380 = vmul.f32 %v27, %v361
  %v381 = vmul.f32 %v28, %v363
  %v382 = vmul.f32 %v29, %v365
  %v383 = vmul.f32 %v30, %v367
  %v384 = vsel %vm47, %v376, 0.0
  %385 = vadd.xlane.f32.xlu0 %v384
  %v386 = vpop.xlane.xlu0 %385
  %v387 = vsel %vm47, %v377, 0.0
  %388 = vadd.xlane.f32.xlu0 %v387
  %v389 = vpop.xlane.xlu0 %388
  %v390 = vsel %vm47, %v378, 0.0
  %391 = vadd.xlane.f32.xlu0 %v390
  %v392 = vpop.xlane.xlu0 %391
  %v393 = vsel %vm47, %v379, 0.0
  %394 = vadd.xlane.f32.xlu0 %v393
  %v395 = vpop.xlane.xlu0 %394
  %v396 = vsel %vm47, %v380, 0.0
  %397 = vadd.xlane.f32.xlu0 %v396
  %v398 = vpop.xlane.xlu0 %397
  %v399 = vsel %vm47, %v381, 0.0
  %400 = vadd.xlane.f32.xlu0 %v399
  %v401 = vpop.xlane.xlu0 %400
  %v402 = vsel %vm47, %v382, 0.0
  %403 = vadd.xlane.f32.xlu0 %v402
  %v404 = vpop.xlane.xlu0 %403
  %v405 = vsel %vm47, %v383, 0.0
  %406 = vadd.xlane.f32.xlu0 %v405
  %v407 = vpop.xlane.xlu0 %406
  %408 = vrot.lane.b32.xlu0 %v248, 32
  %v409 = vpop.permute.xlu0 %408
  %410 = vrot.lane.b32.xlu0 %v249, 32
  %v411 = vpop.permute.xlu0 %410
  %412 = vrot.lane.b32.xlu0 %v250, 32
  %v413 = vpop.permute.xlu0 %412
  %414 = vrot.lane.b32.xlu0 %v251, 32
  %v415 = vpop.permute.xlu0 %414
  %416 = vrot.lane.b32.xlu0 %v252, 32
  %v417 = vpop.permute.xlu0 %416
  %418 = vrot.lane.b32.xlu0 %v253, 32
  %v419 = vpop.permute.xlu0 %418
  %420 = vrot.lane.b32.xlu0 %v254, 32
  %v421 = vpop.permute.xlu0 %420
  %422 = vrot.lane.b32.xlu0 %v255, 32
  %v423 = vpop.permute.xlu0 %422
  %v432 = vmul.f32 %v23, %v409
  %v433 = vmul.f32 %v24, %v411
  %v434 = vmul.f32 %v25, %v413
  %v435 = vmul.f32 %v26, %v415
  %v436 = vmul.f32 %v27, %v417
  %v437 = vmul.f32 %v28, %v419
  %v438 = vmul.f32 %v29, %v421
  %v439 = vmul.f32 %v30, %v423
  %v440 = vsel %vm47, %v432, 0.0
  %441 = vadd.xlane.f32.xlu0 %v440
  %v442 = vpop.xlane.xlu0 %441
  %v443 = vsel %vm47, %v433, 0.0
  %444 = vadd.xlane.f32.xlu0 %v443
  %v445 = vpop.xlane.xlu0 %444
  %v446 = vsel %vm47, %v434, 0.0
  %447 = vadd.xlane.f32.xlu0 %v446
  %v448 = vpop.xlane.xlu0 %447
  %v449 = vsel %vm47, %v435, 0.0
  %450 = vadd.xlane.f32.xlu0 %v449
  %v451 = vpop.xlane.xlu0 %450
  %v452 = vsel %vm47, %v436, 0.0
  %453 = vadd.xlane.f32.xlu0 %v452
  %v454 = vpop.xlane.xlu0 %453
  %v455 = vsel %vm47, %v437, 0.0
  %456 = vadd.xlane.f32.xlu0 %v455
  %v457 = vpop.xlane.xlu0 %456
  %v458 = vsel %vm47, %v438, 0.0
  %459 = vadd.xlane.f32.xlu0 %v458
  %v460 = vpop.xlane.xlu0 %459
  %v461 = vsel %vm47, %v439, 0.0
  %462 = vadd.xlane.f32.xlu0 %v461
  %v463 = vpop.xlane.xlu0 %462
  %v464 = vmax.f32 %v50, %v114
  %v465 = vmax.f32 %v53, %v117
  %v466 = vmax.f32 %v56, %v120
  %v467 = vmax.f32 %v59, %v123
  %v468 = vmax.f32 %v62, %v126
  %v469 = vmax.f32 %v65, %v129
  %v470 = vmax.f32 %v68, %v132
  %v471 = vmax.f32 %v71, %v135
  %v472 = vmax.f32 %v464, %v170
  %v473 = vmax.f32 %v465, %v173
  %v474 = vmax.f32 %v466, %v176
  %v475 = vmax.f32 %v467, %v179
  %v476 = vmax.f32 %v468, %v182
  %v477 = vmax.f32 %v469, %v185
  %v478 = vmax.f32 %v470, %v188
  %v479 = vmax.f32 %v471, %v191
  %v480 = vmax.f32 %v472, %v226
  %v481 = vmax.f32 %v473, %v229
  %v482 = vmax.f32 %v474, %v232
  %v483 = vmax.f32 %v475, %v235
  %v484 = vmax.f32 %v476, %v238
  %v485 = vmax.f32 %v477, %v241
  %v486 = vmax.f32 %v478, %v244
  %v487 = vmax.f32 %v479, %v247
  %v488 = vmax.f32 %v480, %v266
  %v489 = vmax.f32 %v481, %v269
  %v490 = vmax.f32 %v482, %v272
  %v491 = vmax.f32 %v483, %v275
  %v492 = vmax.f32 %v484, %v278
  %v493 = vmax.f32 %v485, %v281
  %v494 = vmax.f32 %v486, %v284
  %v495 = vmax.f32 %v487, %v287
  %v496 = vmax.f32 %v488, %v330
  %v497 = vmax.f32 %v489, %v333
  %v498 = vmax.f32 %v490, %v336
  %v499 = vmax.f32 %v491, %v339
  %v500 = vmax.f32 %v492, %v342
  %v501 = vmax.f32 %v493, %v345
  %v502 = vmax.f32 %v494, %v348
  %v503 = vmax.f32 %v495, %v351
  %v504 = vmax.f32 %v496, %v386
  %v505 = vmax.f32 %v497, %v389
  %v506 = vmax.f32 %v498, %v392
  %v507 = vmax.f32 %v499, %v395
  %v508 = vmax.f32 %v500, %v398
  %v509 = vmax.f32 %v501, %v401
  %v510 = vmax.f32 %v502, %v404
  %v511 = vmax.f32 %v503, %v407
  %v512 = vmax.f32 %v504, %v442
  %v513 = vmax.f32 %v505, %v445
  %v514 = vmax.f32 %v506, %v448
  %v515 = vmax.f32 %v507, %v451
  %v516 = vmax.f32 %v508, %v454
  %v517 = vmax.f32 %v509, %v457
  %v518 = vmax.f32 %v510, %v460
  %v519 = vmax.f32 %v511, %v463
  %v520 = vsub.f32 %v50, %v512
  %v521 = vsub.f32 %v53, %v513
  %v522 = vsub.f32 %v56, %v514
  %v523 = vsub.f32 %v59, %v515
  %v524 = vsub.f32 %v62, %v516
  %v525 = vsub.f32 %v65, %v517
  %v526 = vsub.f32 %v68, %v518
  %v527 = vsub.f32 %v71, %v519
  %v528 = vmul.f32 %v520, 1.442695
  %v529 = vpow.pop %v528
  %v530 = vmul.f32 %v521, 1.442695
  %v531 = vpow.pop %v530
  %v532 = vmul.f32 %v522, 1.442695
  %v533 = vpow.pop %v532
  %v534 = vmul.f32 %v523, 1.442695
  %v535 = vpow.pop %v534
  %v536 = vmul.f32 %v524, 1.442695
  %v537 = vpow.pop %v536
  %v538 = vmul.f32 %v525, 1.442695
  %v539 = vpow.pop %v538
  %v540 = vmul.f32 %v526, 1.442695
  %v541 = vpow.pop %v540
  %v542 = vmul.f32 %v527, 1.442695
  %v543 = vpow.pop %v542
  %v544 = vsub.f32 %v114, %v512
  %v545 = vsub.f32 %v117, %v513
  %v546 = vsub.f32 %v120, %v514
  %v547 = vsub.f32 %v123, %v515
  %v548 = vsub.f32 %v126, %v516
  %v549 = vsub.f32 %v129, %v517
  %v550 = vsub.f32 %v132, %v518
  %v551 = vsub.f32 %v135, %v519
  %v552 = vmul.f32 %v544, 1.442695
  %v553 = vpow.pop %v552
  %v554 = vmul.f32 %v545, 1.442695
  %v555 = vpow.pop %v554
  %v556 = vmul.f32 %v546, 1.442695
  %v557 = vpow.pop %v556
  %v558 = vmul.f32 %v547, 1.442695
  %v559 = vpow.pop %v558
  %v560 = vmul.f32 %v548, 1.442695
  %v561 = vpow.pop %v560
  %v562 = vmul.f32 %v549, 1.442695
  %v563 = vpow.pop %v562
  %v564 = vmul.f32 %v550, 1.442695
  %v565 = vpow.pop %v564
  %v566 = vmul.f32 %v551, 1.442695
  %v567 = vpow.pop %v566
  %v568 = vsub.f32 %v170, %v512
  %v569 = vsub.f32 %v173, %v513
  %v570 = vsub.f32 %v176, %v514
  %v571 = vsub.f32 %v179, %v515
  %v572 = vsub.f32 %v182, %v516
  %v573 = vsub.f32 %v185, %v517
  %v574 = vsub.f32 %v188, %v518
  %v575 = vsub.f32 %v191, %v519
  %v576 = vmul.f32 %v568, 1.442695
  %v577 = vpow.pop %v576
  %v578 = vmul.f32 %v569, 1.442695
  %v579 = vpow.pop %v578
  %v580 = vmul.f32 %v570, 1.442695
  %v581 = vpow.pop %v580
  %v582 = vmul.f32 %v571, 1.442695
  %v583 = vpow.pop %v582
  %v584 = vmul.f32 %v572, 1.442695
  %v585 = vpow.pop %v584
  %v586 = vmul.f32 %v573, 1.442695
  %v587 = vpow.pop %v586
  %v588 = vmul.f32 %v574, 1.442695
  %v589 = vpow.pop %v588
  %v590 = vmul.f32 %v575, 1.442695
  %v591 = vpow.pop %v590
  %v592 = vsub.f32 %v226, %v512
  %v593 = vsub.f32 %v229, %v513
  %v594 = vsub.f32 %v232, %v514
  %v595 = vsub.f32 %v235, %v515
  %v596 = vsub.f32 %v238, %v516
  %v597 = vsub.f32 %v241, %v517
  %v598 = vsub.f32 %v244, %v518
  %v599 = vsub.f32 %v247, %v519
  %v600 = vmul.f32 %v592, 1.442695
  %v601 = vpow.pop %v600
  %v602 = vmul.f32 %v593, 1.442695
  %v603 = vpow.pop %v602
  %v604 = vmul.f32 %v594, 1.442695
  %v605 = vpow.pop %v604
  %v606 = vmul.f32 %v595, 1.442695
  %v607 = vpow.pop %v606
  %v608 = vmul.f32 %v596, 1.442695
  %v609 = vpow.pop %v608
  %v610 = vmul.f32 %v597, 1.442695
  %v611 = vpow.pop %v610
  %v612 = vmul.f32 %v598, 1.442695
  %v613 = vpow.pop %v612
  %v614 = vmul.f32 %v599, 1.442695
  %v615 = vpow.pop %v614
  %v616 = vsub.f32 %v266, %v512
  %v617 = vsub.f32 %v269, %v513
  %v618 = vsub.f32 %v272, %v514
  %v619 = vsub.f32 %v275, %v515
  %v620 = vsub.f32 %v278, %v516
  %v621 = vsub.f32 %v281, %v517
  %v622 = vsub.f32 %v284, %v518
  %v623 = vsub.f32 %v287, %v519
  %v624 = vmul.f32 %v616, 1.442695
  %v625 = vpow.pop %v624
  %v626 = vmul.f32 %v617, 1.442695
  %v627 = vpow.pop %v626
  %v628 = vmul.f32 %v618, 1.442695
  %v629 = vpow.pop %v628
  %v630 = vmul.f32 %v619, 1.442695
  %v631 = vpow.pop %v630
  %v632 = vmul.f32 %v620, 1.442695
  %v633 = vpow.pop %v632
  %v634 = vmul.f32 %v621, 1.442695
  %v635 = vpow.pop %v634
  %v636 = vmul.f32 %v622, 1.442695
  %v637 = vpow.pop %v636
  %v638 = vmul.f32 %v623, 1.442695
  %v639 = vpow.pop %v638
  %v640 = vsub.f32 %v330, %v512
  %v641 = vsub.f32 %v333, %v513
  %v642 = vsub.f32 %v336, %v514
  %v643 = vsub.f32 %v339, %v515
  %v644 = vsub.f32 %v342, %v516
  %v645 = vsub.f32 %v345, %v517
  %v646 = vsub.f32 %v348, %v518
  %v647 = vsub.f32 %v351, %v519
  %v648 = vmul.f32 %v640, 1.442695
  %v649 = vpow.pop %v648
  %v650 = vmul.f32 %v641, 1.442695
  %v651 = vpow.pop %v650
  %v652 = vmul.f32 %v642, 1.442695
  %v653 = vpow.pop %v652
  %v654 = vmul.f32 %v643, 1.442695
  %v655 = vpow.pop %v654
  %v656 = vmul.f32 %v644, 1.442695
  %v657 = vpow.pop %v656
  %v658 = vmul.f32 %v645, 1.442695
  %v659 = vpow.pop %v658
  %v660 = vmul.f32 %v646, 1.442695
  %v661 = vpow.pop %v660
  %v662 = vmul.f32 %v647, 1.442695
  %v663 = vpow.pop %v662
  %v664 = vsub.f32 %v386, %v512
  %v665 = vsub.f32 %v389, %v513
  %v666 = vsub.f32 %v392, %v514
  %v667 = vsub.f32 %v395, %v515
  %v668 = vsub.f32 %v398, %v516
  %v669 = vsub.f32 %v401, %v517
  %v670 = vsub.f32 %v404, %v518
  %v671 = vsub.f32 %v407, %v519
  %v672 = vmul.f32 %v664, 1.442695
  %v673 = vpow.pop %v672
  %v674 = vmul.f32 %v665, 1.442695
  %v675 = vpow.pop %v674
  %v676 = vmul.f32 %v666, 1.442695
  %v677 = vpow.pop %v676
  %v678 = vmul.f32 %v667, 1.442695
  %v679 = vpow.pop %v678
  %v680 = vmul.f32 %v668, 1.442695
  %v681 = vpow.pop %v680
  %v682 = vmul.f32 %v669, 1.442695
  %v683 = vpow.pop %v682
  %v684 = vmul.f32 %v670, 1.442695
  %v685 = vpow.pop %v684
  %v686 = vmul.f32 %v671, 1.442695
  %v687 = vpow.pop %v686
  %v688 = vsub.f32 %v442, %v512
  %v689 = vsub.f32 %v445, %v513
  %v690 = vsub.f32 %v448, %v514
  %v691 = vsub.f32 %v451, %v515
  %v692 = vsub.f32 %v454, %v516
  %v693 = vsub.f32 %v457, %v517
  %v694 = vsub.f32 %v460, %v518
  %v695 = vsub.f32 %v463, %v519
  %v696 = vmul.f32 %v688, 1.442695
  %v697 = vpow.pop %v696
  %v698 = vmul.f32 %v689, 1.442695
  %v699 = vpow.pop %v698
  %v700 = vmul.f32 %v690, 1.442695
  %v701 = vpow.pop %v700
  %v702 = vmul.f32 %v691, 1.442695
  %v703 = vpow.pop %v702
  %v704 = vmul.f32 %v692, 1.442695
  %v705 = vpow.pop %v704
  %v706 = vmul.f32 %v693, 1.442695
  %v707 = vpow.pop %v706
  %v708 = vmul.f32 %v694, 1.442695
  %v709 = vpow.pop %v708
  %v710 = vmul.f32 %v695, 1.442695
  %v711 = vpow.pop %v710
  %v712 = vadd.f32 %v529, %v553
  %v713 = vadd.f32 %v531, %v555
  %v714 = vadd.f32 %v533, %v557
  %v715 = vadd.f32 %v535, %v559
  %v716 = vadd.f32 %v537, %v561
  %v717 = vadd.f32 %v539, %v563
  %v718 = vadd.f32 %v541, %v565
  %v719 = vadd.f32 %v543, %v567
  %v720 = vadd.f32 %v712, %v577
  %v721 = vadd.f32 %v713, %v579
  %v722 = vadd.f32 %v714, %v581
  %v723 = vadd.f32 %v715, %v583
  %v724 = vadd.f32 %v716, %v585
  %v725 = vadd.f32 %v717, %v587
  %v726 = vadd.f32 %v718, %v589
  %v727 = vadd.f32 %v719, %v591
  %v728 = vadd.f32 %v720, %v601
  %v729 = vadd.f32 %v721, %v603
  %v730 = vadd.f32 %v722, %v605
  %v731 = vadd.f32 %v723, %v607
  %v732 = vadd.f32 %v724, %v609
  %v733 = vadd.f32 %v725, %v611
  %v734 = vadd.f32 %v726, %v613
  %v735 = vadd.f32 %v727, %v615
  %v736 = vadd.f32 %v728, %v625
  %v737 = vadd.f32 %v729, %v627
  %v738 = vadd.f32 %v730, %v629
  %v739 = vadd.f32 %v731, %v631
  %v740 = vadd.f32 %v732, %v633
  %v741 = vadd.f32 %v733, %v635
  %v742 = vadd.f32 %v734, %v637
  %v743 = vadd.f32 %v735, %v639
  %v744 = vadd.f32 %v736, %v649
  %v745 = vadd.f32 %v737, %v651
  %v746 = vadd.f32 %v738, %v653
  %v747 = vadd.f32 %v739, %v655
  %v748 = vadd.f32 %v740, %v657
  %v749 = vadd.f32 %v741, %v659
  %v750 = vadd.f32 %v742, %v661
  %v751 = vadd.f32 %v743, %v663
  %v752 = vadd.f32 %v744, %v673
  %v753 = vadd.f32 %v745, %v675
  %v754 = vadd.f32 %v746, %v677
  %v755 = vadd.f32 %v747, %v679
  %v756 = vadd.f32 %v748, %v681
  %v757 = vadd.f32 %v749, %v683
  %v758 = vadd.f32 %v750, %v685
  %v759 = vadd.f32 %v751, %v687
  %v760 = vadd.f32 %v752, %v697
  %v761 = vadd.f32 %v753, %v699
  %v762 = vadd.f32 %v754, %v701
  %v763 = vadd.f32 %v755, %v703
  %v764 = vadd.f32 %v756, %v705
  %v765 = vadd.f32 %v757, %v707
  %v766 = vadd.f32 %v758, %v709
  %v767 = vadd.f32 %v759, %v711
  %v768 = vrcp.pop %v760
  %v769 = vrcp.pop %v761
  %v770 = vrcp.pop %v762
  %v771 = vrcp.pop %v763
  %v772 = vrcp.pop %v764
  %v773 = vrcp.pop %v765
  %v774 = vrcp.pop %v766
  %v775 = vrcp.pop %v767
  %v776 = vld [vmem:[%s0] sm:$0x1]
  %v777 = vld [vmem:[%s0 + $0x1] sm:$0x1]
  %v778 = vld [vmem:[%s0 + $0x2] sm:$0x1]
  %v779 = vld [vmem:[%s0 + $0x3] sm:$0x1]
  %v780 = vld [vmem:[%s0 + $0x4] sm:$0x1]
  %v781 = vld [vmem:[%s0 + $0x5] sm:$0x1]
  %v782 = vld [vmem:[%s0 + $0x6] sm:$0x1]
  %v783 = vld [vmem:[%s0 + $0x7] sm:$0x1]
  %v784 = vld [vmem:[%s1] sm:$0x1]
  %v785 = vld [vmem:[%s1 + $0x2] sm:$0x1]
  %v786 = vld [vmem:[%s1 + $0x4] sm:$0x1]
  %v787 = vld [vmem:[%s1 + $0x6] sm:$0x1]
  %v788 = vld [vmem:[%s1 + $0x8] sm:$0x1]
  %v789 = vld [vmem:[%s1 + $0xa] sm:$0x1]
  %v790 = vld [vmem:[%s1 + $0xc] sm:$0x1]
  %v791 = vld [vmem:[%s1 + $0xe] sm:$0x1]
  %v792 = vmul.f32 %v529, %v768
  %v793 = vmul.f32 %v531, %v769
  %v794 = vmul.f32 %v533, %v770
  %v795 = vmul.f32 %v535, %v771
  %v796 = vmul.f32 %v537, %v772
  %v797 = vmul.f32 %v539, %v773
  %v798 = vmul.f32 %v541, %v774
  %v799 = vmul.f32 %v543, %v775
  %v800 = vmul.f32 %v792, %v784
  %v801 = vmul.f32 %v793, %v785
  %v802 = vmul.f32 %v794, %v786
  %v803 = vmul.f32 %v795, %v787
  %v804 = vmul.f32 %v796, %v788
  %v805 = vmul.f32 %v797, %v789
  %v806 = vmul.f32 %v798, %v790
  %v807 = vmul.f32 %v799, %v791
  %v808 = vadd.f32 %v776, %v800
  %v809 = vadd.f32 %v777, %v801
  %v810 = vadd.f32 %v778, %v802
  %v811 = vadd.f32 %v779, %v803
  %v812 = vadd.f32 %v780, %v804
  %v813 = vadd.f32 %v781, %v805
  %v814 = vadd.f32 %v782, %v806
  %v815 = vadd.f32 %v783, %v807
  %v816 = vmul.f32 %v553, %v768
  %v817 = vmul.f32 %v555, %v769
  %v818 = vmul.f32 %v557, %v770
  %v819 = vmul.f32 %v559, %v771
  %v820 = vmul.f32 %v561, %v772
  %v821 = vmul.f32 %v563, %v773
  %v822 = vmul.f32 %v565, %v774
  %v823 = vmul.f32 %v567, %v775
  %v832 = vlaneseq
  %v833 = vshrl.u32 %v832, 7
  %v834 = vsub.s32 0, %v833
  %v835 = vrot.slane %v784, %v834
  %v836 = vlaneseq
  %v837 = vshrl.u32 %v836, 7
  %v838 = vsub.s32 0, %v837
  %v839 = vrot.slane %v785, %v838
  %v840 = vlaneseq
  %v841 = vshrl.u32 %v840, 7
  %v842 = vsub.s32 0, %v841
  %v843 = vrot.slane %v786, %v842
  %v844 = vlaneseq
  %v845 = vshrl.u32 %v844, 7
  %v846 = vsub.s32 0, %v845
  %v847 = vrot.slane %v787, %v846
  %v848 = vlaneseq
  %v849 = vshrl.u32 %v848, 7
  %v850 = vsub.s32 0, %v849
  %v851 = vrot.slane %v788, %v850
  %v852 = vlaneseq
  %v853 = vshrl.u32 %v852, 7
  %v854 = vsub.s32 0, %v853
  %v855 = vrot.slane %v789, %v854
  %v856 = vlaneseq
  %v857 = vshrl.u32 %v856, 7
  %v858 = vsub.s32 0, %v857
  %v859 = vrot.slane %v790, %v858
  %v860 = vlaneseq
  %v861 = vshrl.u32 %v860, 7
  %v862 = vsub.s32 0, %v861
  %v863 = vrot.slane %v791, %v862
  %864 = vrot.lane.b32.xlu0 %v835, 96
  %v865 = vpop.permute.xlu0 %864
  %866 = vrot.lane.b32.xlu0 %v839, 96
  %v867 = vpop.permute.xlu0 %866
  %868 = vrot.lane.b32.xlu0 %v843, 96
  %v869 = vpop.permute.xlu0 %868
  %870 = vrot.lane.b32.xlu0 %v847, 96
  %v871 = vpop.permute.xlu0 %870
  %872 = vrot.lane.b32.xlu0 %v851, 96
  %v873 = vpop.permute.xlu0 %872
  %874 = vrot.lane.b32.xlu0 %v855, 96
  %v875 = vpop.permute.xlu0 %874
  %876 = vrot.lane.b32.xlu0 %v859, 96
  %v877 = vpop.permute.xlu0 %876
  %878 = vrot.lane.b32.xlu0 %v863, 96
  %v879 = vpop.permute.xlu0 %878
  %v888 = vmul.f32 %v816, %v865
  %v889 = vmul.f32 %v817, %v867
  %v890 = vmul.f32 %v818, %v869
  %v891 = vmul.f32 %v819, %v871
  %v892 = vmul.f32 %v820, %v873
  %v893 = vmul.f32 %v821, %v875
  %v894 = vmul.f32 %v822, %v877
  %v895 = vmul.f32 %v823, %v879
  %v896 = vadd.f32 %v808, %v888
  %v897 = vadd.f32 %v809, %v889
  %v898 = vadd.f32 %v810, %v890
  %v899 = vadd.f32 %v811, %v891
  %v900 = vadd.f32 %v812, %v892
  %v901 = vadd.f32 %v813, %v893
  %v902 = vadd.f32 %v814, %v894
  %v903 = vadd.f32 %v815, %v895
  %v904 = vmul.f32 %v577, %v768
  %v905 = vmul.f32 %v579, %v769
  %v906 = vmul.f32 %v581, %v770
  %v907 = vmul.f32 %v583, %v771
  %v908 = vmul.f32 %v585, %v772
  %v909 = vmul.f32 %v587, %v773
  %v910 = vmul.f32 %v589, %v774
  %v911 = vmul.f32 %v591, %v775
  %912 = vrot.lane.b32.xlu0 %v835, 64
  %v913 = vpop.permute.xlu0 %912
  %914 = vrot.lane.b32.xlu0 %v839, 64
  %v915 = vpop.permute.xlu0 %914
  %916 = vrot.lane.b32.xlu0 %v843, 64
  %v917 = vpop.permute.xlu0 %916
  %918 = vrot.lane.b32.xlu0 %v847, 64
  %v919 = vpop.permute.xlu0 %918
  %920 = vrot.lane.b32.xlu0 %v851, 64
  %v921 = vpop.permute.xlu0 %920
  %922 = vrot.lane.b32.xlu0 %v855, 64
  %v923 = vpop.permute.xlu0 %922
  %924 = vrot.lane.b32.xlu0 %v859, 64
  %v925 = vpop.permute.xlu0 %924
  %926 = vrot.lane.b32.xlu0 %v863, 64
  %v927 = vpop.permute.xlu0 %926
  %v936 = vmul.f32 %v904, %v913
  %v937 = vmul.f32 %v905, %v915
  %v938 = vmul.f32 %v906, %v917
  %v939 = vmul.f32 %v907, %v919
  %v940 = vmul.f32 %v908, %v921
  %v941 = vmul.f32 %v909, %v923
  %v942 = vmul.f32 %v910, %v925
  %v943 = vmul.f32 %v911, %v927
  %v944 = vadd.f32 %v896, %v936
  %v945 = vadd.f32 %v897, %v937
  %v946 = vadd.f32 %v898, %v938
  %v947 = vadd.f32 %v899, %v939
  %v948 = vadd.f32 %v900, %v940
  %v949 = vadd.f32 %v901, %v941
  %v950 = vadd.f32 %v902, %v942
  %v951 = vadd.f32 %v903, %v943
  %v952 = vmul.f32 %v601, %v768
  %v953 = vmul.f32 %v603, %v769
  %v954 = vmul.f32 %v605, %v770
  %v955 = vmul.f32 %v607, %v771
  %v956 = vmul.f32 %v609, %v772
  %v957 = vmul.f32 %v611, %v773
  %v958 = vmul.f32 %v613, %v774
  %v959 = vmul.f32 %v615, %v775
  %960 = vrot.lane.b32.xlu0 %v835, 32
  %v961 = vpop.permute.xlu0 %960
  %962 = vrot.lane.b32.xlu0 %v839, 32
  %v963 = vpop.permute.xlu0 %962
  %964 = vrot.lane.b32.xlu0 %v843, 32
  %v965 = vpop.permute.xlu0 %964
  %966 = vrot.lane.b32.xlu0 %v847, 32
  %v967 = vpop.permute.xlu0 %966
  %968 = vrot.lane.b32.xlu0 %v851, 32
  %v969 = vpop.permute.xlu0 %968
  %970 = vrot.lane.b32.xlu0 %v855, 32
  %v971 = vpop.permute.xlu0 %970
  %972 = vrot.lane.b32.xlu0 %v859, 32
  %v973 = vpop.permute.xlu0 %972
  %974 = vrot.lane.b32.xlu0 %v863, 32
  %v975 = vpop.permute.xlu0 %974
  %v984 = vmul.f32 %v952, %v961
  %v985 = vmul.f32 %v953, %v963
  %v986 = vmul.f32 %v954, %v965
  %v987 = vmul.f32 %v955, %v967
  %v988 = vmul.f32 %v956, %v969
  %v989 = vmul.f32 %v957, %v971
  %v990 = vmul.f32 %v958, %v973
  %v991 = vmul.f32 %v959, %v975
  %v992 = vadd.f32 %v944, %v984
  %v993 = vadd.f32 %v945, %v985
  %v994 = vadd.f32 %v946, %v986
  %v995 = vadd.f32 %v947, %v987
  %v996 = vadd.f32 %v948, %v988
  %v997 = vadd.f32 %v949, %v989
  %v998 = vadd.f32 %v950, %v990
  %v999 = vadd.f32 %v951, %v991
  %v1000 = vld [vmem:[%s1 + $0x1] sm:$0x1]
  %v1001 = vld [vmem:[%s1 + $0x3] sm:$0x1]
  %v1002 = vld [vmem:[%s1 + $0x5] sm:$0x1]
  %v1003 = vld [vmem:[%s1 + $0x7] sm:$0x1]
  %v1004 = vld [vmem:[%s1 + $0x9] sm:$0x1]
  %v1005 = vld [vmem:[%s1 + $0xb] sm:$0x1]
  %v1006 = vld [vmem:[%s1 + $0xd] sm:$0x1]
  %v1007 = vld [vmem:[%s1 + $0xf] sm:$0x1]
  %v1008 = vmul.f32 %v625, %v768
  %v1009 = vmul.f32 %v627, %v769
  %v1010 = vmul.f32 %v629, %v770
  %v1011 = vmul.f32 %v631, %v771
  %v1012 = vmul.f32 %v633, %v772
  %v1013 = vmul.f32 %v635, %v773
  %v1014 = vmul.f32 %v637, %v774
  %v1015 = vmul.f32 %v639, %v775
  %v1016 = vmul.f32 %v1008, %v1000
  %v1017 = vmul.f32 %v1009, %v1001
  %v1018 = vmul.f32 %v1010, %v1002
  %v1019 = vmul.f32 %v1011, %v1003
  %v1020 = vmul.f32 %v1012, %v1004
  %v1021 = vmul.f32 %v1013, %v1005
  %v1022 = vmul.f32 %v1014, %v1006
  %v1023 = vmul.f32 %v1015, %v1007
  %v1024 = vadd.f32 %v992, %v1016
  %v1025 = vadd.f32 %v993, %v1017
  %v1026 = vadd.f32 %v994, %v1018
  %v1027 = vadd.f32 %v995, %v1019
  %v1028 = vadd.f32 %v996, %v1020
  %v1029 = vadd.f32 %v997, %v1021
  %v1030 = vadd.f32 %v998, %v1022
  %v1031 = vadd.f32 %v999, %v1023
  %v1032 = vmul.f32 %v649, %v768
  %v1033 = vmul.f32 %v651, %v769
  %v1034 = vmul.f32 %v653, %v770
  %v1035 = vmul.f32 %v655, %v771
  %v1036 = vmul.f32 %v657, %v772
  %v1037 = vmul.f32 %v659, %v773
  %v1038 = vmul.f32 %v661, %v774
  %v1039 = vmul.f32 %v663, %v775
  %v1048 = vlaneseq
  %v1049 = vshrl.u32 %v1048, 7
  %v1050 = vsub.s32 0, %v1049
  %v1051 = vrot.slane %v1000, %v1050
  %v1052 = vlaneseq
  %v1053 = vshrl.u32 %v1052, 7
  %v1054 = vsub.s32 0, %v1053
  %v1055 = vrot.slane %v1001, %v1054
  %v1056 = vlaneseq
  %v1057 = vshrl.u32 %v1056, 7
  %v1058 = vsub.s32 0, %v1057
  %v1059 = vrot.slane %v1002, %v1058
  %v1060 = vlaneseq
  %v1061 = vshrl.u32 %v1060, 7
  %v1062 = vsub.s32 0, %v1061
  %v1063 = vrot.slane %v1003, %v1062
  %v1064 = vlaneseq
  %v1065 = vshrl.u32 %v1064, 7
  %v1066 = vsub.s32 0, %v1065
  %v1067 = vrot.slane %v1004, %v1066
  %v1068 = vlaneseq
  %v1069 = vshrl.u32 %v1068, 7
  %v1070 = vsub.s32 0, %v1069
  %v1071 = vrot.slane %v1005, %v1070
  %v1072 = vlaneseq
  %v1073 = vshrl.u32 %v1072, 7
  %v1074 = vsub.s32 0, %v1073
  %v1075 = vrot.slane %v1006, %v1074
  %v1076 = vlaneseq
  %v1077 = vshrl.u32 %v1076, 7
  %v1078 = vsub.s32 0, %v1077
  %v1079 = vrot.slane %v1007, %v1078
  %1080 = vrot.lane.b32.xlu0 %v1051, 96
  %v1081 = vpop.permute.xlu0 %1080
  %1082 = vrot.lane.b32.xlu0 %v1055, 96
  %v1083 = vpop.permute.xlu0 %1082
  %1084 = vrot.lane.b32.xlu0 %v1059, 96
  %v1085 = vpop.permute.xlu0 %1084
  %1086 = vrot.lane.b32.xlu0 %v1063, 96
  %v1087 = vpop.permute.xlu0 %1086
  %1088 = vrot.lane.b32.xlu0 %v1067, 96
  %v1089 = vpop.permute.xlu0 %1088
  %1090 = vrot.lane.b32.xlu0 %v1071, 96
  %v1091 = vpop.permute.xlu0 %1090
  %1092 = vrot.lane.b32.xlu0 %v1075, 96
  %v1093 = vpop.permute.xlu0 %1092
  %1094 = vrot.lane.b32.xlu0 %v1079, 96
  %v1095 = vpop.permute.xlu0 %1094
  %v1104 = vmul.f32 %v1032, %v1081
  %v1105 = vmul.f32 %v1033, %v1083
  %v1106 = vmul.f32 %v1034, %v1085
  %v1107 = vmul.f32 %v1035, %v1087
  %v1108 = vmul.f32 %v1036, %v1089
  %v1109 = vmul.f32 %v1037, %v1091
  %v1110 = vmul.f32 %v1038, %v1093
  %v1111 = vmul.f32 %v1039, %v1095
  %v1112 = vadd.f32 %v1024, %v1104
  %v1113 = vadd.f32 %v1025, %v1105
  %v1114 = vadd.f32 %v1026, %v1106
  %v1115 = vadd.f32 %v1027, %v1107
  %v1116 = vadd.f32 %v1028, %v1108
  %v1117 = vadd.f32 %v1029, %v1109
  %v1118 = vadd.f32 %v1030, %v1110
  %v1119 = vadd.f32 %v1031, %v1111
  %v1120 = vmul.f32 %v673, %v768
  %v1121 = vmul.f32 %v675, %v769
  %v1122 = vmul.f32 %v677, %v770
  %v1123 = vmul.f32 %v679, %v771
  %v1124 = vmul.f32 %v681, %v772
  %v1125 = vmul.f32 %v683, %v773
  %v1126 = vmul.f32 %v685, %v774
  %v1127 = vmul.f32 %v687, %v775
  %1128 = vrot.lane.b32.xlu0 %v1051, 64
  %v1129 = vpop.permute.xlu0 %1128
  %1130 = vrot.lane.b32.xlu0 %v1055, 64
  %v1131 = vpop.permute.xlu0 %1130
  %1132 = vrot.lane.b32.xlu0 %v1059, 64
  %v1133 = vpop.permute.xlu0 %1132
  %1134 = vrot.lane.b32.xlu0 %v1063, 64
  %v1135 = vpop.permute.xlu0 %1134
  %1136 = vrot.lane.b32.xlu0 %v1067, 64
  %v1137 = vpop.permute.xlu0 %1136
  %1138 = vrot.lane.b32.xlu0 %v1071, 64
  %v1139 = vpop.permute.xlu0 %1138
  %1140 = vrot.lane.b32.xlu0 %v1075, 64
  %v1141 = vpop.permute.xlu0 %1140
  %1142 = vrot.lane.b32.xlu0 %v1079, 64
  %v1143 = vpop.permute.xlu0 %1142
  %v1152 = vmul.f32 %v1120, %v1129
  %v1153 = vmul.f32 %v1121, %v1131
  %v1154 = vmul.f32 %v1122, %v1133
  %v1155 = vmul.f32 %v1123, %v1135
  %v1156 = vmul.f32 %v1124, %v1137
  %v1157 = vmul.f32 %v1125, %v1139
  %v1158 = vmul.f32 %v1126, %v1141
  %v1159 = vmul.f32 %v1127, %v1143
  %v1160 = vadd.f32 %v1112, %v1152
  %v1161 = vadd.f32 %v1113, %v1153
  %v1162 = vadd.f32 %v1114, %v1154
  %v1163 = vadd.f32 %v1115, %v1155
  %v1164 = vadd.f32 %v1116, %v1156
  %v1165 = vadd.f32 %v1117, %v1157
  %v1166 = vadd.f32 %v1118, %v1158
  %v1167 = vadd.f32 %v1119, %v1159
  %v1168 = vmul.f32 %v697, %v768
  %v1169 = vmul.f32 %v699, %v769
  %v1170 = vmul.f32 %v701, %v770
  %v1171 = vmul.f32 %v703, %v771
  %v1172 = vmul.f32 %v705, %v772
  %v1173 = vmul.f32 %v707, %v773
  %v1174 = vmul.f32 %v709, %v774
  %v1175 = vmul.f32 %v711, %v775
  %1176 = vrot.lane.b32.xlu0 %v1051, 32
  %v1177 = vpop.permute.xlu0 %1176
  %1178 = vrot.lane.b32.xlu0 %v1055, 32
  %v1179 = vpop.permute.xlu0 %1178
  %1180 = vrot.lane.b32.xlu0 %v1059, 32
  %v1181 = vpop.permute.xlu0 %1180
  %1182 = vrot.lane.b32.xlu0 %v1063, 32
  %v1183 = vpop.permute.xlu0 %1182
  %1184 = vrot.lane.b32.xlu0 %v1067, 32
  %v1185 = vpop.permute.xlu0 %1184
  %1186 = vrot.lane.b32.xlu0 %v1071, 32
  %v1187 = vpop.permute.xlu0 %1186
  %1188 = vrot.lane.b32.xlu0 %v1075, 32
  %v1189 = vpop.permute.xlu0 %1188
  %1190 = vrot.lane.b32.xlu0 %v1079, 32
  %v1191 = vpop.permute.xlu0 %1190
  %v1200 = vmul.f32 %v1168, %v1177
  %v1201 = vmul.f32 %v1169, %v1179
  %v1202 = vmul.f32 %v1170, %v1181
  %v1203 = vmul.f32 %v1171, %v1183
  %v1204 = vmul.f32 %v1172, %v1185
  %v1205 = vmul.f32 %v1173, %v1187
  %v1206 = vmul.f32 %v1174, %v1189
  %v1207 = vmul.f32 %v1175, %v1191
  %v1208 = vadd.f32 %v1160, %v1200
  %v1209 = vadd.f32 %v1161, %v1201
  %v1210 = vadd.f32 %v1162, %v1202
  %v1211 = vadd.f32 %v1163, %v1203
  %v1212 = vadd.f32 %v1164, %v1204
  %v1213 = vadd.f32 %v1165, %v1205
  %v1214 = vadd.f32 %v1166, %v1206
  %v1215 = vadd.f32 %v1167, %v1207
  %v1216 = vld [vmem:[%s4] sm:$0xff]
  %v1217 = vld [vmem:[%s4 + $0x8] sm:$0xff]
  %v1218 = vld [vmem:[%s4 + $0x10] sm:$0xff]
  %v1219 = vld [vmem:[%s4 + $0x18] sm:$0xff]
  %v1220 = vld [vmem:[%s5] sm:$0x1]
  %vm1221 = vcmask 261120
  %v1223 = vsel %vm1221, %v1208, 0
  %v1226 = vsel %vm1221, %v1216, 0
  %v1229 = vsel %vm1221, %v1217, 0
  %v1232 = vsel %vm1221, %v1218, 0
  %v1235 = vsel %vm1221, %v1219, 0
  %1237 = vmatprep.subr.mxu0 0.0
  %1238 = vmatpush1.xpose.msra.mxu0 %v1226
  %1239 = vmatprep.subr.mxu0 0.0
  %1240 = vmatpush1.xpose.msra.mxu0 %v1229
  %1241 = vmatprep.subr.mxu0 0.0
  %1242 = vmatpush1.xpose.msra.mxu0 %v1232
  %1243 = vmatprep.subr.mxu0 0.0
  %1244 = vmatpush1.xpose.msra.mxu0 %v1235
  %1245 = vmatprep.subr.mxu0 0.0
  %1246 = vmatpush1.xpose.msra.mxu0 0.0
  %1247 = vmatprep.subr.mxu0 0.0
  %1248 = vmatpush1.xpose.msra.mxu0 0.0
  %1249 = vmatprep.subr.mxu0 0.0
  %1250 = vmatpush1.xpose.msra.mxu0 0.0
  %1251 = vmatprep.subr.mxu0 0.0
  %1252 = vmatpush1.xpose.msra.mxu0 0.0
  %1253 = vmatprep.subr.mxu0 0.0
  %1254 = vmatpush1.xpose.msra.mxu0 0.0
  %1255 = vmatprep.subr.mxu0 0.0
  %1256 = vmatpush1.xpose.msra.mxu0 0.0
  %1257 = vmatprep.subr.mxu0 0.0
  %1258 = vmatpush1.xpose.msra.mxu0 0.0
  %1259 = vmatprep.subr.mxu0 0.0
  %1260 = vmatpush1.xpose.msra.mxu0 0.0
  %1261 = vmatprep.subr.mxu0 0.0
  %1262 = vmatpush1.xpose.msra.mxu0 0.0
  %1263 = vmatprep.subr.mxu0 0.0
  %1264 = vmatpush1.xpose.msra.mxu0 0.0
  %1265 = vmatprep.subr.mxu0 0.0
  %1266 = vmatpush1.xpose.msra.mxu0 0.0
  %1267 = vmatprep.subr.mxu0 0.0
  %1268 = vmatpush1.xpose.msra.mxu0 0.0
  %1269 = vmatprep.subr.mxu0 0.0
  %1270 = vmatpush1.xpose.msra.mxu0 0.0
  %1271 = vmatprep.subr.mxu0 0.0
  %1272 = vmatpush1.xpose.msra.mxu0 0.0
  %1273 = vmatprep.subr.mxu0 0.0
  %1274 = vmatpush1.xpose.msra.mxu0 0.0
  %1275 = vmatprep.subr.mxu0 0.0
  %1276 = vmatpush1.xpose.msra.mxu0 0.0
  %1277 = vmatprep.subr.mxu0 0.0
  %1278 = vmatpush1.xpose.msra.mxu0 0.0
  %1279 = vmatprep.subr.mxu0 0.0
  %1280 = vmatpush1.xpose.msra.mxu0 0.0
  %1281 = vmatprep.subr.mxu0 0.0
  %1282 = vmatpush1.xpose.msra.mxu0 0.0
  %1283 = vmatprep.subr.mxu0 0.0
  %1284 = vmatpush1.xpose.msra.mxu0 0.0
  %1285 = vmatprep.subr.mxu0 0.0
  %1286 = vmatpush1.xpose.msra.mxu0 0.0
  %1287 = vmatprep.subr.mxu0 0.0
  %1288 = vmatpush1.xpose.msra.mxu0 0.0
  %1289 = vmatprep.subr.mxu0 0.0
  %1290 = vmatpush1.xpose.msra.mxu0 0.0
  %1291 = vmatprep.subr.mxu0 0.0
  %1292 = vmatpush1.xpose.msra.mxu0 0.0
  %1293 = vmatprep.subr.mxu0 0.0
  %1294 = vmatpush1.xpose.msra.mxu0 0.0
  %1295 = vmatprep.subr.mxu0 0.0
  %1296 = vmatpush1.xpose.msra.mxu0 0.0
  %1297 = vmatprep.subr.mxu0 0.0
  %1298 = vmatpush1.xpose.msra.mxu0 0.0
  %1299 = vmatprep.subr.mxu0 0.0
  %1300 = vmatpush1.xpose.msra.mxu0 0.0
  %1301 = vmatprep.mubr.f32.mxu0 0.0
  %1302 = vmatmul.mubr.f32.gmra.mrb[0].mxu0 %v1223
  %v1303 = vpop.f32.mrb[0].mxu0
  %v1304 = vadd.f32 %v1220, %v1303
  %v1305 = vpop.f32.mrb[0].mxu0
  %1306 = vdwg.mxu0
  %v1308 = vsel %vm1221, %v1209, 0
  %1310 = vmatprep.subr.mxu0 0.0
  %1311 = vmatpush1.xpose.msra.mxu0 %v1226
  %1312 = vmatprep.subr.mxu0 0.0
  %1313 = vmatpush1.xpose.msra.mxu0 %v1229
  %1314 = vmatprep.subr.mxu0 0.0
  %1315 = vmatpush1.xpose.msra.mxu0 %v1232
  %1316 = vmatprep.subr.mxu0 0.0
  %1317 = vmatpush1.xpose.msra.mxu0 %v1235
  %1318 = vmatprep.subr.mxu0 0.0
  %1319 = vmatpush1.xpose.msra.mxu0 0.0
  %1320 = vmatprep.subr.mxu0 0.0
  %1321 = vmatpush1.xpose.msra.mxu0 0.0
  %1322 = vmatprep.subr.mxu0 0.0
  %1323 = vmatpush1.xpose.msra.mxu0 0.0
  %1324 = vmatprep.subr.mxu0 0.0
  %1325 = vmatpush1.xpose.msra.mxu0 0.0
  %1326 = vmatprep.subr.mxu0 0.0
  %1327 = vmatpush1.xpose.msra.mxu0 0.0
  %1328 = vmatprep.subr.mxu0 0.0
  %1329 = vmatpush1.xpose.msra.mxu0 0.0
  %1330 = vmatprep.subr.mxu0 0.0
  %1331 = vmatpush1.xpose.msra.mxu0 0.0
  %1332 = vmatprep.subr.mxu0 0.0
  %1333 = vmatpush1.xpose.msra.mxu0 0.0
  %1334 = vmatprep.subr.mxu0 0.0
  %1335 = vmatpush1.xpose.msra.mxu0 0.0
  %1336 = vmatprep.subr.mxu0 0.0
  %1337 = vmatpush1.xpose.msra.mxu0 0.0
  %1338 = vmatprep.subr.mxu0 0.0
  %1339 = vmatpush1.xpose.msra.mxu0 0.0
  %1340 = vmatprep.subr.mxu0 0.0
  %1341 = vmatpush1.xpose.msra.mxu0 0.0
  %1342 = vmatprep.subr.mxu0 0.0
  %1343 = vmatpush1.xpose.msra.mxu0 0.0
  %1344 = vmatprep.subr.mxu0 0.0
  %1345 = vmatpush1.xpose.msra.mxu0 0.0
  %1346 = vmatprep.subr.mxu0 0.0
  %1347 = vmatpush1.xpose.msra.mxu0 0.0
  %1348 = vmatprep.subr.mxu0 0.0
  %1349 = vmatpush1.xpose.msra.mxu0 0.0
  %1350 = vmatprep.subr.mxu0 0.0
  %1351 = vmatpush1.xpose.msra.mxu0 0.0
  %1352 = vmatprep.subr.mxu0 0.0
  %1353 = vmatpush1.xpose.msra.mxu0 0.0
  %1354 = vmatprep.subr.mxu0 0.0
  %1355 = vmatpush1.xpose.msra.mxu0 0.0
  %1356 = vmatprep.subr.mxu0 0.0
  %1357 = vmatpush1.xpose.msra.mxu0 0.0
  %1358 = vmatprep.subr.mxu0 0.0
  %1359 = vmatpush1.xpose.msra.mxu0 0.0
  %1360 = vmatprep.subr.mxu0 0.0
  %1361 = vmatpush1.xpose.msra.mxu0 0.0
  %1362 = vmatprep.subr.mxu0 0.0
  %1363 = vmatpush1.xpose.msra.mxu0 0.0
  %1364 = vmatprep.subr.mxu0 0.0
  %1365 = vmatpush1.xpose.msra.mxu0 0.0
  %1366 = vmatprep.subr.mxu0 0.0
  %1367 = vmatpush1.xpose.msra.mxu0 0.0
  %1368 = vmatprep.subr.mxu0 0.0
  %1369 = vmatpush1.xpose.msra.mxu0 0.0
  %1370 = vmatprep.subr.mxu0 0.0
  %1371 = vmatpush1.xpose.msra.mxu0 0.0
  %1372 = vmatprep.subr.mxu0 0.0
  %1373 = vmatpush1.xpose.msra.mxu0 0.0
  %1374 = vmatprep.mubr.f32.mxu0 0.0
  %1375 = vmatmul.mubr.f32.gmra.mrb[0].mxu0 %v1308
  %v1376 = vpop.f32.mrb[0].mxu0
  %v1377 = vadd.f32 %v1220, %v1376
  %v1378 = vpop.f32.mrb[0].mxu0
  %1379 = vdwg.mxu0
  %v1381 = vsel %vm1221, %v1210, 0
  %1383 = vmatprep.subr.mxu0 0.0
  %1384 = vmatpush1.xpose.msra.mxu0 %v1226
  %1385 = vmatprep.subr.mxu0 0.0
  %1386 = vmatpush1.xpose.msra.mxu0 %v1229
  %1387 = vmatprep.subr.mxu0 0.0
  %1388 = vmatpush1.xpose.msra.mxu0 %v1232
  %1389 = vmatprep.subr.mxu0 0.0
  %1390 = vmatpush1.xpose.msra.mxu0 %v1235
  %1391 = vmatprep.subr.mxu0 0.0
  %1392 = vmatpush1.xpose.msra.mxu0 0.0
  %1393 = vmatprep.subr.mxu0 0.0
  %1394 = vmatpush1.xpose.msra.mxu0 0.0
  %1395 = vmatprep.subr.mxu0 0.0
  %1396 = vmatpush1.xpose.msra.mxu0 0.0
  %1397 = vmatprep.subr.mxu0 0.0
  %1398 = vmatpush1.xpose.msra.mxu0 0.0
  %1399 = vmatprep.subr.mxu0 0.0
  %1400 = vmatpush1.xpose.msra.mxu0 0.0
  %1401 = vmatprep.subr.mxu0 0.0
  %1402 = vmatpush1.xpose.msra.mxu0 0.0
  %1403 = vmatprep.subr.mxu0 0.0
  %1404 = vmatpush1.xpose.msra.mxu0 0.0
  %1405 = vmatprep.subr.mxu0 0.0
  %1406 = vmatpush1.xpose.msra.mxu0 0.0
  %1407 = vmatprep.subr.mxu0 0.0
  %1408 = vmatpush1.xpose.msra.mxu0 0.0
  %1409 = vmatprep.subr.mxu0 0.0
  %1410 = vmatpush1.xpose.msra.mxu0 0.0
  %1411 = vmatprep.subr.mxu0 0.0
  %1412 = vmatpush1.xpose.msra.mxu0 0.0
  %1413 = vmatprep.subr.mxu0 0.0
  %1414 = vmatpush1.xpose.msra.mxu0 0.0
  %1415 = vmatprep.subr.mxu0 0.0
  %1416 = vmatpush1.xpose.msra.mxu0 0.0
  %1417 = vmatprep.subr.mxu0 0.0
  %1418 = vmatpush1.xpose.msra.mxu0 0.0
  %1419 = vmatprep.subr.mxu0 0.0
  %1420 = vmatpush1.xpose.msra.mxu0 0.0
  %1421 = vmatprep.subr.mxu0 0.0
  %1422 = vmatpush1.xpose.msra.mxu0 0.0
  %1423 = vmatprep.subr.mxu0 0.0
  %1424 = vmatpush1.xpose.msra.mxu0 0.0
  %1425 = vmatprep.subr.mxu0 0.0
  %1426 = vmatpush1.xpose.msra.mxu0 0.0
  %1427 = vmatprep.subr.mxu0 0.0
  %1428 = vmatpush1.xpose.msra.mxu0 0.0
  %1429 = vmatprep.subr.mxu0 0.0
  %1430 = vmatpush1.xpose.msra.mxu0 0.0
  %1431 = vmatprep.subr.mxu0 0.0
  %1432 = vmatpush1.xpose.msra.mxu0 0.0
  %1433 = vmatprep.subr.mxu0 0.0
  %1434 = vmatpush1.xpose.msra.mxu0 0.0
  %1435 = vmatprep.subr.mxu0 0.0
  %1436 = vmatpush1.xpose.msra.mxu0 0.0
  %1437 = vmatprep.subr.mxu0 0.0
  %1438 = vmatpush1.xpose.msra.mxu0 0.0
  %1439 = vmatprep.subr.mxu0 0.0
  %1440 = vmatpush1.xpose.msra.mxu0 0.0
  %1441 = vmatprep.subr.mxu0 0.0
  %1442 = vmatpush1.xpose.msra.mxu0 0.0
  %1443 = vmatprep.subr.mxu0 0.0
  %1444 = vmatpush1.xpose.msra.mxu0 0.0
  %1445 = vmatprep.subr.mxu0 0.0
  %1446 = vmatpush1.xpose.msra.mxu0 0.0
  %1447 = vmatprep.mubr.f32.mxu0 0.0
  %1448 = vmatmul.mubr.f32.gmra.mrb[0].mxu0 %v1381
  %v1449 = vpop.f32.mrb[0].mxu0
  %v1450 = vadd.f32 %v1220, %v1449
  %v1451 = vpop.f32.mrb[0].mxu0
  %1452 = vdwg.mxu0
  %v1454 = vsel %vm1221, %v1211, 0
  %1456 = vmatprep.subr.mxu0 0.0
  %1457 = vmatpush1.xpose.msra.mxu0 %v1226
  %1458 = vmatprep.subr.mxu0 0.0
  %1459 = vmatpush1.xpose.msra.mxu0 %v1229
  %1460 = vmatprep.subr.mxu0 0.0
  %1461 = vmatpush1.xpose.msra.mxu0 %v1232
  %1462 = vmatprep.subr.mxu0 0.0
  %1463 = vmatpush1.xpose.msra.mxu0 %v1235
  %1464 = vmatprep.subr.mxu0 0.0
  %1465 = vmatpush1.xpose.msra.mxu0 0.0
  %1466 = vmatprep.subr.mxu0 0.0
  %1467 = vmatpush1.xpose.msra.mxu0 0.0
  %1468 = vmatprep.subr.mxu0 0.0
  %1469 = vmatpush1.xpose.msra.mxu0 0.0
  %1470 = vmatprep.subr.mxu0 0.0
  %1471 = vmatpush1.xpose.msra.mxu0 0.0
  %1472 = vmatprep.subr.mxu0 0.0
  %1473 = vmatpush1.xpose.msra.mxu0 0.0
  %1474 = vmatprep.subr.mxu0 0.0
  %1475 = vmatpush1.xpose.msra.mxu0 0.0
  %1476 = vmatprep.subr.mxu0 0.0
  %1477 = vmatpush1.xpose.msra.mxu0 0.0
  %1478 = vmatprep.subr.mxu0 0.0
  %1479 = vmatpush1.xpose.msra.mxu0 0.0
  %1480 = vmatprep.subr.mxu0 0.0
  %1481 = vmatpush1.xpose.msra.mxu0 0.0
  %1482 = vmatprep.subr.mxu0 0.0
  %1483 = vmatpush1.xpose.msra.mxu0 0.0
  %1484 = vmatprep.subr.mxu0 0.0
  %1485 = vmatpush1.xpose.msra.mxu0 0.0
  %1486 = vmatprep.subr.mxu0 0.0
  %1487 = vmatpush1.xpose.msra.mxu0 0.0
  %1488 = vmatprep.subr.mxu0 0.0
  %1489 = vmatpush1.xpose.msra.mxu0 0.0
  %1490 = vmatprep.subr.mxu0 0.0
  %1491 = vmatpush1.xpose.msra.mxu0 0.0
  %1492 = vmatprep.subr.mxu0 0.0
  %1493 = vmatpush1.xpose.msra.mxu0 0.0
  %1494 = vmatprep.subr.mxu0 0.0
  %1495 = vmatpush1.xpose.msra.mxu0 0.0
  %1496 = vmatprep.subr.mxu0 0.0
  %1497 = vmatpush1.xpose.msra.mxu0 0.0
  %1498 = vmatprep.subr.mxu0 0.0
  %1499 = vmatpush1.xpose.msra.mxu0 0.0
  %1500 = vmatprep.subr.mxu0 0.0
  %1501 = vmatpush1.xpose.msra.mxu0 0.0
  %1502 = vmatprep.subr.mxu0 0.0
  %1503 = vmatpush1.xpose.msra.mxu0 0.0
  %1504 = vmatprep.subr.mxu0 0.0
  %1505 = vmatpush1.xpose.msra.mxu0 0.0
  %1506 = vmatprep.subr.mxu0 0.0
  %1507 = vmatpush1.xpose.msra.mxu0 0.0
  %1508 = vmatprep.subr.mxu0 0.0
  %1509 = vmatpush1.xpose.msra.mxu0 0.0
  %1510 = vmatprep.subr.mxu0 0.0
  %1511 = vmatpush1.xpose.msra.mxu0 0.0
  %1512 = vmatprep.subr.mxu0 0.0
  %1513 = vmatpush1.xpose.msra.mxu0 0.0
  %1514 = vmatprep.subr.mxu0 0.0
  %1515 = vmatpush1.xpose.msra.mxu0 0.0
  %1516 = vmatprep.subr.mxu0 0.0
  %1517 = vmatpush1.xpose.msra.mxu0 0.0
  %1518 = vmatprep.subr.mxu0 0.0
  %1519 = vmatpush1.xpose.msra.mxu0 0.0
  %1520 = vmatprep.mubr.f32.mxu0 0.0
  %1521 = vmatmul.mubr.f32.gmra.mrb[0].mxu0 %v1454
  %v1522 = vpop.f32.mrb[0].mxu0
  %v1523 = vadd.f32 %v1220, %v1522
  %v1524 = vpop.f32.mrb[0].mxu0
  %1525 = vdwg.mxu0
  %v1527 = vsel %vm1221, %v1212, 0
  %1529 = vmatprep.subr.mxu0 0.0
  %1530 = vmatpush1.xpose.msra.mxu0 %v1226
  %1531 = vmatprep.subr.mxu0 0.0
  %1532 = vmatpush1.xpose.msra.mxu0 %v1229
  %1533 = vmatprep.subr.mxu0 0.0
  %1534 = vmatpush1.xpose.msra.mxu0 %v1232
  %1535 = vmatprep.subr.mxu0 0.0
  %1536 = vmatpush1.xpose.msra.mxu0 %v1235
  %1537 = vmatprep.subr.mxu0 0.0
  %1538 = vmatpush1.xpose.msra.mxu0 0.0
  %1539 = vmatprep.subr.mxu0 0.0
  %1540 = vmatpush1.xpose.msra.mxu0 0.0
  %1541 = vmatprep.subr.mxu0 0.0
  %1542 = vmatpush1.xpose.msra.mxu0 0.0
  %1543 = vmatprep.subr.mxu0 0.0
  %1544 = vmatpush1.xpose.msra.mxu0 0.0
  %1545 = vmatprep.subr.mxu0 0.0
  %1546 = vmatpush1.xpose.msra.mxu0 0.0
  %1547 = vmatprep.subr.mxu0 0.0
  %1548 = vmatpush1.xpose.msra.mxu0 0.0
  %1549 = vmatprep.subr.mxu0 0.0
  %1550 = vmatpush1.xpose.msra.mxu0 0.0
  %1551 = vmatprep.subr.mxu0 0.0
  %1552 = vmatpush1.xpose.msra.mxu0 0.0
  %1553 = vmatprep.subr.mxu0 0.0
  %1554 = vmatpush1.xpose.msra.mxu0 0.0
  %1555 = vmatprep.subr.mxu0 0.0
  %1556 = vmatpush1.xpose.msra.mxu0 0.0
  %1557 = vmatprep.subr.mxu0 0.0
  %1558 = vmatpush1.xpose.msra.mxu0 0.0
  %1559 = vmatprep.subr.mxu0 0.0
  %1560 = vmatpush1.xpose.msra.mxu0 0.0
  %1561 = vmatprep.subr.mxu0 0.0
  %1562 = vmatpush1.xpose.msra.mxu0 0.0
  %1563 = vmatprep.subr.mxu0 0.0
  %1564 = vmatpush1.xpose.msra.mxu0 0.0
  %1565 = vmatprep.subr.mxu0 0.0
  %1566 = vmatpush1.xpose.msra.mxu0 0.0
  %1567 = vmatprep.subr.mxu0 0.0
  %1568 = vmatpush1.xpose.msra.mxu0 0.0
  %1569 = vmatprep.subr.mxu0 0.0
  %1570 = vmatpush1.xpose.msra.mxu0 0.0
  %1571 = vmatprep.subr.mxu0 0.0
  %1572 = vmatpush1.xpose.msra.mxu0 0.0
  %1573 = vmatprep.subr.mxu0 0.0
  %1574 = vmatpush1.xpose.msra.mxu0 0.0
  %1575 = vmatprep.subr.mxu0 0.0
  %1576 = vmatpush1.xpose.msra.mxu0 0.0
  %1577 = vmatprep.subr.mxu0 0.0
  %1578 = vmatpush1.xpose.msra.mxu0 0.0
  %1579 = vmatprep.subr.mxu0 0.0
  %1580 = vmatpush1.xpose.msra.mxu0 0.0
  %1581 = vmatprep.subr.mxu0 0.0
  %1582 = vmatpush1.xpose.msra.mxu0 0.0
  %1583 = vmatprep.subr.mxu0 0.0
  %1584 = vmatpush1.xpose.msra.mxu0 0.0
  %1585 = vmatprep.subr.mxu0 0.0
  %1586 = vmatpush1.xpose.msra.mxu0 0.0
  %1587 = vmatprep.subr.mxu0 0.0
  %1588 = vmatpush1.xpose.msra.mxu0 0.0
  %1589 = vmatprep.subr.mxu0 0.0
  %1590 = vmatpush1.xpose.msra.mxu0 0.0
  %1591 = vmatprep.subr.mxu0 0.0
  %1592 = vmatpush1.xpose.msra.mxu0 0.0
  %1593 = vmatprep.mubr.f32.mxu0 0.0
  %1594 = vmatmul.mubr.f32.gmra.mrb[0].mxu0 %v1527
  %v1595 = vpop.f32.mrb[0].mxu0
  %v1596 = vadd.f32 %v1220, %v1595
  %v1597 = vpop.f32.mrb[0].mxu0
  %1598 = vdwg.mxu0
  %v1600 = vsel %vm1221, %v1213, 0
  %1602 = vmatprep.subr.mxu0 0.0
  %1603 = vmatpush1.xpose.msra.mxu0 %v1226
  %1604 = vmatprep.subr.mxu0 0.0
  %1605 = vmatpush1.xpose.msra.mxu0 %v1229
  %1606 = vmatprep.subr.mxu0 0.0
  %1607 = vmatpush1.xpose.msra.mxu0 %v1232
  %1608 = vmatprep.subr.mxu0 0.0
  %1609 = vmatpush1.xpose.msra.mxu0 %v1235
  %1610 = vmatprep.subr.mxu0 0.0
  %1611 = vmatpush1.xpose.msra.mxu0 0.0
  %1612 = vmatprep.subr.mxu0 0.0
  %1613 = vmatpush1.xpose.msra.mxu0 0.0
  %1614 = vmatprep.subr.mxu0 0.0
  %1615 = vmatpush1.xpose.msra.mxu0 0.0
  %1616 = vmatprep.subr.mxu0 0.0
  %1617 = vmatpush1.xpose.msra.mxu0 0.0
  %1618 = vmatprep.subr.mxu0 0.0
  %1619 = vmatpush1.xpose.msra.mxu0 0.0
  %1620 = vmatprep.subr.mxu0 0.0
  %1621 = vmatpush1.xpose.msra.mxu0 0.0
  %1622 = vmatprep.subr.mxu0 0.0
  %1623 = vmatpush1.xpose.msra.mxu0 0.0
  %1624 = vmatprep.subr.mxu0 0.0
  %1625 = vmatpush1.xpose.msra.mxu0 0.0
  %1626 = vmatprep.subr.mxu0 0.0
  %1627 = vmatpush1.xpose.msra.mxu0 0.0
  %1628 = vmatprep.subr.mxu0 0.0
  %1629 = vmatpush1.xpose.msra.mxu0 0.0
  %1630 = vmatprep.subr.mxu0 0.0
  %1631 = vmatpush1.xpose.msra.mxu0 0.0
  %1632 = vmatprep.subr.mxu0 0.0
  %1633 = vmatpush1.xpose.msra.mxu0 0.0
  %1634 = vmatprep.subr.mxu0 0.0
  %1635 = vmatpush1.xpose.msra.mxu0 0.0
  %1636 = vmatprep.subr.mxu0 0.0
  %1637 = vmatpush1.xpose.msra.mxu0 0.0
  %1638 = vmatprep.subr.mxu0 0.0
  %1639 = vmatpush1.xpose.msra.mxu0 0.0
  %1640 = vmatprep.subr.mxu0 0.0
  %1641 = vmatpush1.xpose.msra.mxu0 0.0
  %1642 = vmatprep.subr.mxu0 0.0
  %1643 = vmatpush1.xpose.msra.mxu0 0.0
  %1644 = vmatprep.subr.mxu0 0.0
  %1645 = vmatpush1.xpose.msra.mxu0 0.0
  %1646 = vmatprep.subr.mxu0 0.0
  %1647 = vmatpush1.xpose.msra.mxu0 0.0
  %1648 = vmatprep.subr.mxu0 0.0
  %1649 = vmatpush1.xpose.msra.mxu0 0.0
  %1650 = vmatprep.subr.mxu0 0.0
  %1651 = vmatpush1.xpose.msra.mxu0 0.0
  %1652 = vmatprep.subr.mxu0 0.0
  %1653 = vmatpush1.xpose.msra.mxu0 0.0
  %1654 = vmatprep.subr.mxu0 0.0
  %1655 = vmatpush1.xpose.msra.mxu0 0.0
  %1656 = vmatprep.subr.mxu0 0.0
  %1657 = vmatpush1.xpose.msra.mxu0 0.0
  %1658 = vmatprep.subr.mxu0 0.0
  %1659 = vmatpush1.xpose.msra.mxu0 0.0
  %1660 = vmatprep.subr.mxu0 0.0
  %1661 = vmatpush1.xpose.msra.mxu0 0.0
  %1662 = vmatprep.subr.mxu0 0.0
  %1663 = vmatpush1.xpose.msra.mxu0 0.0
  %1664 = vmatprep.subr.mxu0 0.0
  %1665 = vmatpush1.xpose.msra.mxu0 0.0
  %1666 = vmatprep.mubr.f32.mxu0 0.0
  %1667 = vmatmul.mubr.f32.gmra.mrb[0].mxu0 %v1600
  %v1668 = vpop.f32.mrb[0].mxu0
  %v1669 = vadd.f32 %v1220, %v1668
  %v1670 = vpop.f32.mrb[0].mxu0
  %1671 = vdwg.mxu0
  %v1673 = vsel %vm1221, %v1214, 0
  %1675 = vmatprep.subr.mxu0 0.0
  %1676 = vmatpush1.xpose.msra.mxu0 %v1226
  %1677 = vmatprep.subr.mxu0 0.0
  %1678 = vmatpush1.xpose.msra.mxu0 %v1229
  %1679 = vmatprep.subr.mxu0 0.0
  %1680 = vmatpush1.xpose.msra.mxu0 %v1232
  %1681 = vmatprep.subr.mxu0 0.0
  %1682 = vmatpush1.xpose.msra.mxu0 %v1235
  %1683 = vmatprep.subr.mxu0 0.0
  %1684 = vmatpush1.xpose.msra.mxu0 0.0
  %1685 = vmatprep.subr.mxu0 0.0
  %1686 = vmatpush1.xpose.msra.mxu0 0.0
  %1687 = vmatprep.subr.mxu0 0.0
  %1688 = vmatpush1.xpose.msra.mxu0 0.0
  %1689 = vmatprep.subr.mxu0 0.0
  %1690 = vmatpush1.xpose.msra.mxu0 0.0
  %1691 = vmatprep.subr.mxu0 0.0
  %1692 = vmatpush1.xpose.msra.mxu0 0.0
  %1693 = vmatprep.subr.mxu0 0.0
  %1694 = vmatpush1.xpose.msra.mxu0 0.0
  %1695 = vmatprep.subr.mxu0 0.0
  %1696 = vmatpush1.xpose.msra.mxu0 0.0
  %1697 = vmatprep.subr.mxu0 0.0
  %1698 = vmatpush1.xpose.msra.mxu0 0.0
  %1699 = vmatprep.subr.mxu0 0.0
  %1700 = vmatpush1.xpose.msra.mxu0 0.0
  %1701 = vmatprep.subr.mxu0 0.0
  %1702 = vmatpush1.xpose.msra.mxu0 0.0
  %1703 = vmatprep.subr.mxu0 0.0
  %1704 = vmatpush1.xpose.msra.mxu0 0.0
  %1705 = vmatprep.subr.mxu0 0.0
  %1706 = vmatpush1.xpose.msra.mxu0 0.0
  %1707 = vmatprep.subr.mxu0 0.0
  %1708 = vmatpush1.xpose.msra.mxu0 0.0
  %1709 = vmatprep.subr.mxu0 0.0
  %1710 = vmatpush1.xpose.msra.mxu0 0.0
  %1711 = vmatprep.subr.mxu0 0.0
  %1712 = vmatpush1.xpose.msra.mxu0 0.0
  %1713 = vmatprep.subr.mxu0 0.0
  %1714 = vmatpush1.xpose.msra.mxu0 0.0
  %1715 = vmatprep.subr.mxu0 0.0
  %1716 = vmatpush1.xpose.msra.mxu0 0.0
  %1717 = vmatprep.subr.mxu0 0.0
  %1718 = vmatpush1.xpose.msra.mxu0 0.0
  %1719 = vmatprep.subr.mxu0 0.0
  %1720 = vmatpush1.xpose.msra.mxu0 0.0
  %1721 = vmatprep.subr.mxu0 0.0
  %1722 = vmatpush1.xpose.msra.mxu0 0.0
  %1723 = vmatprep.subr.mxu0 0.0
  %1724 = vmatpush1.xpose.msra.mxu0 0.0
  %1725 = vmatprep.subr.mxu0 0.0
  %1726 = vmatpush1.xpose.msra.mxu0 0.0
  %1727 = vmatprep.subr.mxu0 0.0
  %1728 = vmatpush1.xpose.msra.mxu0 0.0
  %1729 = vmatprep.subr.mxu0 0.0
  %1730 = vmatpush1.xpose.msra.mxu0 0.0
  %1731 = vmatprep.subr.mxu0 0.0
  %1732 = vmatpush1.xpose.msra.mxu0 0.0
  %1733 = vmatprep.subr.mxu0 0.0
  %1734 = vmatpush1.xpose.msra.mxu0 0.0
  %1735 = vmatprep.subr.mxu0 0.0
  %1736 = vmatpush1.xpose.msra.mxu0 0.0
  %1737 = vmatprep.subr.mxu0 0.0
  %1738 = vmatpush1.xpose.msra.mxu0 0.0
  %1739 = vmatprep.mubr.f32.mxu0 0.0
  %1740 = vmatmul.mubr.f32.gmra.mrb[0].mxu0 %v1673
  %v1741 = vpop.f32.mrb[0].mxu0
  %v1742 = vadd.f32 %v1220, %v1741
  %v1743 = vpop.f32.mrb[0].mxu0
  %1744 = vdwg.mxu0
  %v1746 = vsel %vm1221, %v1215, 0
  %1748 = vmatprep.subr.mxu0 0.0
  %1749 = vmatpush1.xpose.msra.mxu0 %v1226
  %1750 = vmatprep.subr.mxu0 0.0
  %1751 = vmatpush1.xpose.msra.mxu0 %v1229
  %1752 = vmatprep.subr.mxu0 0.0
  %1753 = vmatpush1.xpose.msra.mxu0 %v1232
  %1754 = vmatprep.subr.mxu0 0.0
  %1755 = vmatpush1.xpose.msra.mxu0 %v1235
  %1756 = vmatprep.subr.mxu0 0.0
  %1757 = vmatpush1.xpose.msra.mxu0 0.0
  %1758 = vmatprep.subr.mxu0 0.0
  %1759 = vmatpush1.xpose.msra.mxu0 0.0
  %1760 = vmatprep.subr.mxu0 0.0
  %1761 = vmatpush1.xpose.msra.mxu0 0.0
  %1762 = vmatprep.subr.mxu0 0.0
  %1763 = vmatpush1.xpose.msra.mxu0 0.0
  %1764 = vmatprep.subr.mxu0 0.0
  %1765 = vmatpush1.xpose.msra.mxu0 0.0
  %1766 = vmatprep.subr.mxu0 0.0
  %1767 = vmatpush1.xpose.msra.mxu0 0.0
  %1768 = vmatprep.subr.mxu0 0.0
  %1769 = vmatpush1.xpose.msra.mxu0 0.0
  %1770 = vmatprep.subr.mxu0 0.0
  %1771 = vmatpush1.xpose.msra.mxu0 0.0
  %1772 = vmatprep.subr.mxu0 0.0
  %1773 = vmatpush1.xpose.msra.mxu0 0.0
  %1774 = vmatprep.subr.mxu0 0.0
  %1775 = vmatpush1.xpose.msra.mxu0 0.0
  %1776 = vmatprep.subr.mxu0 0.0
  %1777 = vmatpush1.xpose.msra.mxu0 0.0
  %1778 = vmatprep.subr.mxu0 0.0
  %1779 = vmatpush1.xpose.msra.mxu0 0.0
  %1780 = vmatprep.subr.mxu0 0.0
  %1781 = vmatpush1.xpose.msra.mxu0 0.0
  %1782 = vmatprep.subr.mxu0 0.0
  %1783 = vmatpush1.xpose.msra.mxu0 0.0
  %1784 = vmatprep.subr.mxu0 0.0
  %1785 = vmatpush1.xpose.msra.mxu0 0.0
  %1786 = vmatprep.subr.mxu0 0.0
  %1787 = vmatpush1.xpose.msra.mxu0 0.0
  %1788 = vmatprep.subr.mxu0 0.0
  %1789 = vmatpush1.xpose.msra.mxu0 0.0
  %1790 = vmatprep.subr.mxu0 0.0
  %1791 = vmatpush1.xpose.msra.mxu0 0.0
  %1792 = vmatprep.subr.mxu0 0.0
  %1793 = vmatpush1.xpose.msra.mxu0 0.0
  %1794 = vmatprep.subr.mxu0 0.0
  %1795 = vmatpush1.xpose.msra.mxu0 0.0
  %1796 = vmatprep.subr.mxu0 0.0
  %1797 = vmatpush1.xpose.msra.mxu0 0.0
  %1798 = vmatprep.subr.mxu0 0.0
  %1799 = vmatpush1.xpose.msra.mxu0 0.0
  %1800 = vmatprep.subr.mxu0 0.0
  %1801 = vmatpush1.xpose.msra.mxu0 0.0
  %1802 = vmatprep.subr.mxu0 0.0
  %1803 = vmatpush1.xpose.msra.mxu0 0.0
  %1804 = vmatprep.subr.mxu0 0.0
  %1805 = vmatpush1.xpose.msra.mxu0 0.0
  %1806 = vmatprep.subr.mxu0 0.0
  %1807 = vmatpush1.xpose.msra.mxu0 0.0
  %1808 = vmatprep.subr.mxu0 0.0
  %1809 = vmatpush1.xpose.msra.mxu0 0.0
  %1810 = vmatprep.subr.mxu0 0.0
  %1811 = vmatpush1.xpose.msra.mxu0 0.0
  %1812 = vmatprep.mubr.f32.mxu0 0.0
  %1813 = vmatmul.mubr.f32.gmra.mrb[0].mxu0 %v1746
  %v1814 = vpop.f32.mrb[0].mxu0
  %v1815 = vadd.f32 %v1220, %v1814
  %v1816 = vpop.f32.mrb[0].mxu0
  %1817 = vdwg.mxu0
  %v1818 = vtanh.pop %v1304
  %v1819 = vtanh.pop %v1377
  %v1820 = vtanh.pop %v1450
  %v1821 = vtanh.pop %v1523
  %v1822 = vtanh.pop %v1596
  %v1823 = vtanh.pop %v1669
  %v1824 = vtanh.pop %v1742
  %v1825 = vtanh.pop %v1815
  %1826 = vst.msk [vmem:[%s6] sm:$0x1] %vm47, %v1818
  %1827 = vst.msk [vmem:[%s6 + $0x1] sm:$0x1] %vm47, %v1819
  %1828 = vst.msk [vmem:[%s6 + $0x2] sm:$0x1] %vm47, %v1820
  %1829 = vst.msk [vmem:[%s6 + $0x3] sm:$0x1] %vm47, %v1821
  %1830 = vst.msk [vmem:[%s6 + $0x4] sm:$0x1] %vm47, %v1822
  %1831 = vst.msk [vmem:[%s6 + $0x5] sm:$0x1] %vm47, %v1823
  %1832 = vst.msk [vmem:[%s6 + $0x6] sm:$0x1] %vm47, %v1824
  %1833 = vst.msk [vmem:[%s6 + $0x7] sm:$0x1] %vm47, %v1825
  // Predicated region
  $region26: #{kgcn_forward.5} parent=0 // pred_check
    _
  $region27: #{kgcn_forward.5} parent=0 // pred_check_branch
    %1835 = sbr.rel (0) target = $region29
  $region28: #{kgcn_forward.5} parent=0 // pred_region
    _
  $region29: #{kgcn_forward.5} parent=0 // pred_fallthru
    _
  // Predicated region
  $region30: #{kgcn_forward.5} parent=0 // pred_check
    _
  $region31: #{kgcn_forward.5} parent=0 // pred_check_branch
    %1837 = sbr.rel (0) target = $region33
  $region32: #{kgcn_forward.5} parent=0 // pred_region
    _
  $region33: #{kgcn_forward.5} parent=0 // pred_fallthru
    _

</llo_original>
